<compile_context>
chip_gen: v7x
topology: tpu7x:2x2x1
jax: 0.10.0
libtpu: 0.0.40
codegen_flags: <defaults>
</compile_context>

<pallas_src>
import functools

import jax
import jax.numpy as jnp
from jax.experimental import pallas as pl
from jax.experimental.pallas import tpu as pltpu

LATENT_DIM = 512
HIDDEN = (512, 256, 128, 1)


def _cdiv(a, b):
    return (a + b - 1) // b


def _round_up(x, m):
    return ((x + m - 1) // m) * m


def _default_bf16_activations():
    """bf16 bias/ReLU path only pays off where the VPU is bf16-native (v6e+)."""
    try:
        kind = jax.devices()[0].device_kind.lower()
    except Exception:
        return True
    for old in ("v2", "v3", "v4", "v5"):
        if old in kind:
            return False
    return True


def _disc_kernel(x_ref, w1_ref, b1_ref, w2_ref, b2_ref,
                 w3_ref, b3_ref, w4_ref, b4_ref, o_ref, *, bf16_acts):
    act_dtype = jnp.bfloat16 if bf16_acts else jnp.float32

    # In-kernel cast: x arrives in its native dtype (f32 or bf16); no wrapper
    # cast pass over HBM. MXU operands are bf16, accumulation is f32.
    x = x_ref[...].astype(jnp.bfloat16)                        # (bm, 512)

    def fc_relu(h_bf16, w_ref, b_ref):
        acc = jnp.dot(h_bf16, w_ref[...],
                      preferred_element_type=jnp.float32)       # MXU, f32 acc
        # bias add + ReLU: bf16 on v6e/v7x (halves VALU + vld/vst traffic),
        # f32 on v5e and older (no bf16 VPU path).
        return jnp.maximum((acc + b_ref[...]).astype(act_dtype), 0)

    h = fc_relu(x, w1_ref, b1_ref)                              # (bm, 512)
    h = fc_relu(h.astype(jnp.bfloat16), w2_ref, b2_ref)         # (bm, 256)
    h = fc_relu(h.astype(jnp.bfloat16), w3_ref, b3_ref)         # (bm, 128)

    # Final Linear(128 -> 1): VPU multiply + lane reduction (f32) instead of a
    # 1/128-occupancy MXU matmul. w4_ref is the (1, 128) transposed weight row.
    logits = jnp.sum(h.astype(jnp.float32) * w4_ref[...], axis=-1,
                     keepdims=True) + b4_ref[...]
    o_ref[...] = jax.nn.sigmoid(logits).astype(o_ref.dtype)     # EUP exp


_WEIGHT_SINGLE_BUFFER_OK = True  # flipped off if pl.Buffered(1) is rejected


def discriminator_forward(x, params, *, bm=1024, bf16_activations=None,
                          vmem_limit_bytes=32 * 1024 * 1024):
    """Forward pass of the Discriminator.

    x: (B, 512) array (f32 or bf16).  params: list of (W, b) with W:(in, out).
    bm: max batch tile; tiles are balanced/16-aligned and the grid is kept at
    >= 2 steps once B >= 256 so both v7x TensorCores are used.
    """
    global _WEIGHT_SINGLE_BUFFER_OK

    B, D = x.shape
    assert D == LATENT_DIM
    if bf16_activations is None:
        bf16_activations = _default_bf16_activations()

    (w1, b1), (w2, b2), (w3, b3), (w4, b4) = params

    # bf16 weights for the three MXU layers; biases + final 128->1 row in f32.
    w1b = w1.astype(jnp.bfloat16)
    w2b = w2.astype(jnp.bfloat16)
    w3b = w3.astype(jnp.bfloat16)
    b1f = jnp.reshape(b1, (1, -1)).astype(jnp.float32)
    b2f = jnp.reshape(b2, (1, -1)).astype(jnp.float32)
    b3f = jnp.reshape(b3, (1, -1)).astype(jnp.float32)
    w4_row = jnp.reshape(w4, (1, -1)).astype(jnp.float32)        # (1, 128)
    b4f = jnp.reshape(b4, (1, 1)).astype(jnp.float32)            # (1, 1)

    # Balanced batch tiling (big tiles amortize ~0.35 us/step overhead,
    # grid >= 2 keeps both v7x cores busy, 16-row alignment matches bf16
    # (16,128) sublane packing, balancing bounds padding waste to < 1 tile).
    n_tiles = _cdiv(B, bm)
    if B >= 256:
        n_tiles = max(n_tiles, 2)
    bm_eff = _round_up(_cdiv(B, n_tiles), 16)
    n_tiles = _cdiv(B, bm_eff)
    Bp = n_tiles * bm_eff

    x_in = x if x.dtype in (jnp.bfloat16, jnp.float32) else x.astype(jnp.float32)
    if Bp != B:
        # Small, balanced tail pad (< bm_eff rows); padded rows are sliced off.
        # TODO(synk): replace with a ragged last block + in-kernel mask if this
        # pad ever shows up in profiles.
        x_in = jnp.pad(x_in, ((0, Bp - B), (0, 0)))

    operands = (x_in, w1b, b1f, w2b, b2f, w3b, b3f, w4_row, b4f)
    kernel = functools.partial(_disc_kernel, bf16_acts=bf16_activations)

    def run(single_buffer_weights):
        def const_spec(arr):
            # Full weight/bias block with a constant index_map -> DMA'd once.
            # Buffered(1) drops the useless second buffer (frees ~0.85 MiB).
            if single_buffer_weights:
                return pl.BlockSpec(arr.shape, lambda i: (0, 0),
                                    pipeline_mode=pl.Buffered(1))
            return pl.BlockSpec(arr.shape, lambda i: (0, 0))

        grid_spec = pltpu.PrefetchScalarGridSpec(
            num_scalar_prefetch=0,
            grid=(n_tiles,),
            in_specs=[
                pl.BlockSpec((bm_eff, LATENT_DIM), lambda i: (i, 0)),
                const_spec(w1b), const_spec(b1f),
                const_spec(w2b), const_spec(b2f),
                const_spec(w3b), const_spec(b3f),
                const_spec(w4_row), const_spec(b4f),
            ],
            out_specs=pl.BlockSpec((bm_eff, 1), lambda i: (i, 0)),
        )
        return pl.pallas_call(
            kernel,
            out_shape=jax.ShapeDtypeStruct((Bp, 1), jnp.float32),
            grid_spec=grid_spec,
            compiler_params=pltpu.CompilerParams(
                dimension_semantics=("parallel",),
                vmem_limit_bytes=vmem_limit_bytes),
        )(*operands)

    if _WEIGHT_SINGLE_BUFFER_OK:
        try:
            out = run(True)
        except Exception:
            _WEIGHT_SINGLE_BUFFER_OK = False
            out = run(False)
    else:
        out = run(False)

    return out[:B]


def init_params(key):
    """Deterministic init matching PyTorch Linear default U(-1/sqrt(fan_in), +)."""
    params = []
    fan_in = LATENT_DIM
    for out_dim in HIDDEN:
        key, kw, kb = jax.random.split(key, 3)
        bound = 1.0 / jnp.sqrt(fan_in)
        w = jax.random.uniform(kw, (fan_in, out_dim), jnp.float32, -bound, bound)
        b = jax.random.uniform(kb, (1, out_dim), jnp.float32, -bound, bound)
        params.append((w, b))
        fan_in = out_dim
    return params


def reference_forward(x, params):
    h = x
    for i, (w, b) in enumerate(params):
        h = h @ w + b
        if i < len(params) - 1:
            h = jnp.maximum(h, 0.0)
    return jax.nn.sigmoid(h)


if __name__ == "__main__":
    key = jax.random.PRNGKey(0)
    key, kx1, kx2 = jax.random.split(key, 3)
    params = init_params(key)

    # Small batch: single 16-row tile (padded from 4 rows), grid = 1.
    B1 = 4
    x1 = jax.random.normal(kx1, (B1, LATENT_DIM), jnp.float32)
    out1 = jax.block_until_ready(discriminator_forward(x1, params))
    ref1 = reference_forward(x1, params)
    assert out1.shape == (B1, 1)
    assert jnp.allclose(out1, ref1, atol=3e-2, rtol=0.0), "mismatch vs reference (B=4)"

    # Ragged batch: balanced tiles (bm_eff=160), grid = 2 ("parallel" axis).
    B2 = 300
    x2 = jax.random.normal(kx2, (B2, LATENT_DIM), jnp.float32)
    out2 = jax.block_until_ready(discriminator_forward(x2, params))
    ref2 = reference_forward(x2, params)
    assert out2.shape == (B2, 1)
    assert jnp.allclose(out2, ref2, atol=3e-2, rtol=0.0), "mismatch vs reference (B=300)"

    print("KERNEL_OK")
</pallas_src>

<mosaic_0001>
module attributes {stable_mosaic.version = 11 : i64} {
  func.func @_disc_kernel(%arg0: i32, %arg1: memref<16x512xf32, #tpu.memory_space<vmem>>, %arg2: memref<512x512xbf16, #tpu.memory_space<vmem>>, %arg3: memref<1x512xf32, #tpu.memory_space<vmem>>, %arg4: memref<512x256xbf16, #tpu.memory_space<vmem>>, %arg5: memref<1x256xf32, #tpu.memory_space<vmem>>, %arg6: memref<256x128xbf16, #tpu.memory_space<vmem>>, %arg7: memref<1x128xf32, #tpu.memory_space<vmem>>, %arg8: memref<1x128xf32, #tpu.memory_space<vmem>>, %arg9: memref<1x1xf32, #tpu.memory_space<vmem>>, %arg10: memref<16x1xf32, #tpu.memory_space<vmem>>) attributes {dimension_semantics = [#tpu.dimension_semantics<parallel>], iteration_bounds = array<i64: 1>, scalar_prefetch = 0 : i64, scratch_operands = 0 : i64, tpu.core_type = #tpu.core_type<tc>, window_params = [{transform_indices = @transform_0, window_bounds = array<i64: 16, 512>}, {pipeline_mode = #tpu.pipeline_mode<synchronous>, transform_indices = @transform_1, window_bounds = array<i64: 512, 512>}, {pipeline_mode = #tpu.pipeline_mode<synchronous>, transform_indices = @transform_2, window_bounds = array<i64: 1, 512>}, {pipeline_mode = #tpu.pipeline_mode<synchronous>, transform_indices = @transform_3, window_bounds = array<i64: 512, 256>}, {pipeline_mode = #tpu.pipeline_mode<synchronous>, transform_indices = @transform_4, window_bounds = array<i64: 1, 256>}, {pipeline_mode = #tpu.pipeline_mode<synchronous>, transform_indices = @transform_5, window_bounds = array<i64: 256, 128>}, {pipeline_mode = #tpu.pipeline_mode<synchronous>, transform_indices = @transform_6, window_bounds = array<i64: 1, 128>}, {pipeline_mode = #tpu.pipeline_mode<synchronous>, transform_indices = @transform_7, window_bounds = array<i64: 1, 128>}, {pipeline_mode = #tpu.pipeline_mode<synchronous>, transform_indices = @transform_8, window_bounds = array<i64: 1, 1>}, {transform_indices = @transform_9, window_bounds = array<i64: 16, 1>}]} {
    %c0 = arith.constant 0 : index
    %c0_0 = arith.constant 0 : index
    %0 = vector.load %arg1[%c0, %c0_0] : memref<16x512xf32, #tpu.memory_space<vmem>>, vector<16x512xf32>
    %1 = arith.truncf %0 : vector<16x512xf32> to vector<16x512xbf16>
    %c0_1 = arith.constant 0 : index
    %c0_2 = arith.constant 0 : index
    %2 = vector.load %arg2[%c0_1, %c0_2] : memref<512x512xbf16, #tpu.memory_space<vmem>>, vector<512x512xbf16>
    %cst = arith.constant dense<0.000000e+00> : vector<16x512xf32>
    %3 = tpu.matmul %1, %2, %cst {dimension_numbers = #tpu.dot_dimension_numbers<[1], [0], [0], [1], [0, 0, 1, 1], [], []>} : vector<16x512xbf16>, vector<512x512xbf16>, vector<16x512xf32> -> vector<16x512xf32>
    %c0_3 = arith.constant 0 : index
    %c0_4 = arith.constant 0 : index
    %4 = vector.load %arg3[%c0_3, %c0_4] : memref<1x512xf32, #tpu.memory_space<vmem>>, vector<1x512xf32>
    %5 = vector.broadcast %4 : vector<1x512xf32> to vector<16x512xf32>
    %6 = arith.addf %3, %5 : vector<16x512xf32>
    %7 = arith.truncf %6 : vector<16x512xf32> to vector<16x512xbf16>
    %cst_5 = arith.constant 0.000000e+00 : bf16
    %8 = vector.broadcast %cst_5 : bf16 to vector<16x512xbf16>
    %9 = arith.maximumf %7, %8 : vector<16x512xbf16>
    %c0_6 = arith.constant 0 : index
    %c0_7 = arith.constant 0 : index
    %10 = vector.load %arg4[%c0_6, %c0_7] : memref<512x256xbf16, #tpu.memory_space<vmem>>, vector<512x256xbf16>
    %cst_8 = arith.constant dense<0.000000e+00> : vector<16x256xf32>
    %11 = tpu.matmul %9, %10, %cst_8 {dimension_numbers = #tpu.dot_dimension_numbers<[1], [0], [0], [1], [0, 0, 1, 1], [], []>} : vector<16x512xbf16>, vector<512x256xbf16>, vector<16x256xf32> -> vector<16x256xf32>
    %c0_9 = arith.constant 0 : index
    %c0_10 = arith.constant 0 : index
    %12 = vector.load %arg5[%c0_9, %c0_10] : memref<1x256xf32, #tpu.memory_space<vmem>>, vector<1x256xf32>
    %13 = vector.broadcast %12 : vector<1x256xf32> to vector<16x256xf32>
    %14 = arith.addf %11, %13 : vector<16x256xf32>
    %15 = arith.truncf %14 : vector<16x256xf32> to vector<16x256xbf16>
    %cst_11 = arith.constant 0.000000e+00 : bf16
    %16 = vector.broadcast %cst_11 : bf16 to vector<16x256xbf16>
    %17 = arith.maximumf %15, %16 : vector<16x256xbf16>
    %c0_12 = arith.constant 0 : index
    %c0_13 = arith.constant 0 : index
    %18 = vector.load %arg6[%c0_12, %c0_13] : memref<256x128xbf16, #tpu.memory_space<vmem>>, vector<256x128xbf16>
    %cst_14 = arith.constant dense<0.000000e+00> : vector<16x128xf32>
    %19 = tpu.matmul %17, %18, %cst_14 {dimension_numbers = #tpu.dot_dimension_numbers<[1], [0], [0], [1], [0, 0, 1, 1], [], []>} : vector<16x256xbf16>, vector<256x128xbf16>, vector<16x128xf32> -> vector<16x128xf32>
    %c0_15 = arith.constant 0 : index
    %c0_16 = arith.constant 0 : index
    %20 = vector.load %arg7[%c0_15, %c0_16] : memref<1x128xf32, #tpu.memory_space<vmem>>, vector<1x128xf32>
    %21 = vector.broadcast %20 : vector<1x128xf32> to vector<16x128xf32>
    %22 = arith.addf %19, %21 : vector<16x128xf32>
    %23 = arith.truncf %22 : vector<16x128xf32> to vector<16x128xbf16>
    %cst_17 = arith.constant 0.000000e+00 : bf16
    %24 = vector.broadcast %cst_17 : bf16 to vector<16x128xbf16>
    %25 = arith.maximumf %23, %24 : vector<16x128xbf16>
    %26 = arith.extf %25 : vector<16x128xbf16> to vector<16x128xf32>
    %c0_18 = arith.constant 0 : index
    %c0_19 = arith.constant 0 : index
    %27 = vector.load %arg8[%c0_18, %c0_19] : memref<1x128xf32, #tpu.memory_space<vmem>>, vector<1x128xf32>
    %28 = vector.broadcast %27 : vector<1x128xf32> to vector<16x128xf32>
    %29 = arith.mulf %26, %28 : vector<16x128xf32>
    %cst_20 = arith.constant dense<0.000000e+00> : vector<16xf32>
    %30 = vector.multi_reduction <add>, %29, %cst_20 [1] : vector<16x128xf32> to vector<16xf32>
    %31 = vector.shape_cast %30 : vector<16xf32> to vector<16x1xf32>
    %c0_21 = arith.constant 0 : index
    %c0_22 = arith.constant 0 : index
    %32 = vector.load %arg9[%c0_21, %c0_22] : memref<1x1xf32, #tpu.memory_space<vmem>>, vector<1x1xf32>
    %33 = vector.broadcast %32 : vector<1x1xf32> to vector<16x1xf32>
    %34 = arith.addf %31, %33 : vector<16x1xf32>
    %35 = arith.negf %34 : vector<16x1xf32>
    %36 = math.exp %35 : vector<16x1xf32>
    %cst_23 = arith.constant 1.000000e+00 : f32
    %37 = vector.broadcast %cst_23 : f32 to vector<16x1xf32>
    %38 = arith.addf %37, %36 : vector<16x1xf32>
    %39 = arith.divf %37, %38 : vector<16x1xf32>
    %c0_24 = arith.constant 0 : index
    %c0_25 = arith.constant 0 : index
    %40 = vector.load %arg10[%c0_24, %c0_25] : memref<16x1xf32, #tpu.memory_space<vmem>>, vector<16x1xf32>
    tpu.vector_store %arg10[%c0_24, %c0_25], %39 {strides = array<i32>} : memref<16x1xf32, #tpu.memory_space<vmem>>, vector<16x1xf32>,
    return
  }
  func.func @transform_0(%arg0: i32) -> (i32, i32) {
    %c0_i32 = arith.constant 0 : i32
    %c0_i32_0 = arith.constant 0 : i32
    return %arg0, %c0_i32 : i32, i32
  }
  func.func @transform_1(%arg0: i32) -> (i32, i32) {
    %c0_i32 = arith.constant 0 : i32
    %c0_i32_0 = arith.constant 0 : i32
    %c0_i32_1 = arith.constant 0 : i32
    return %c0_i32, %c0_i32_0 : i32, i32
  }
  func.func @transform_2(%arg0: i32) -> (i32, i32) {
    %c0_i32 = arith.constant 0 : i32
    %c0_i32_0 = arith.constant 0 : i32
    %c0_i32_1 = arith.constant 0 : i32
    return %c0_i32, %c0_i32_0 : i32, i32
  }
  func.func @transform_3(%arg0: i32) -> (i32, i32) {
    %c0_i32 = arith.constant 0 : i32
    %c0_i32_0 = arith.constant 0 : i32
    %c0_i32_1 = arith.constant 0 : i32
    return %c0_i32, %c0_i32_0 : i32, i32
  }
  func.func @transform_4(%arg0: i32) -> (i32, i32) {
    %c0_i32 = arith.constant 0 : i32
    %c0_i32_0 = arith.constant 0 : i32
    %c0_i32_1 = arith.constant 0 : i32
    return %c0_i32, %c0_i32_0 : i32, i32
  }
  func.func @transform_5(%arg0: i32) -> (i32, i32) {
    %c0_i32 = arith.constant 0 : i32
    %c0_i32_0 = arith.constant 0 : i32
    %c0_i32_1 = arith.constant 0 : i32
    return %c0_i32, %c0_i32_0 : i32, i32
  }
  func.func @transform_6(%arg0: i32) -> (i32, i32) {
    %c0_i32 = arith.constant 0 : i32
    %c0_i32_0 = arith.constant 0 : i32
    %c0_i32_1 = arith.constant 0 : i32
    return %c0_i32, %c0_i32_0 : i32, i32
  }
  func.func @transform_7(%arg0: i32) -> (i32, i32) {
    %c0_i32 = arith.constant 0 : i32
    %c0_i32_0 = arith.constant 0 : i32
    %c0_i32_1 = arith.constant 0 : i32
    return %c0_i32, %c0_i32_0 : i32, i32
  }
  func.func @transform_8(%arg0: i32) -> (i32, i32) {
    %c0_i32 = arith.constant 0 : i32
    %c0_i32_0 = arith.constant 0 : i32
    %c0_i32_1 = arith.constant 0 : i32
    return %c0_i32, %c0_i32_0 : i32, i32
  }
  func.func @transform_9(%arg0: i32) -> (i32, i32) {
    %c0_i32 = arith.constant 0 : i32
    %c0_i32_0 = arith.constant 0 : i32
    return %arg0, %c0_i32 : i32, i32
  }
}

module attributes {stable_mosaic.version = 11 : i64} {
  func.func @_disc_kernel(%arg0: i32, %arg1: memref<16x512xf32, #tpu.memory_space<vmem>>, %arg2: memref<512x512xbf16, #tpu.memory_space<vmem>>, %arg3: memref<1x512xf32, #tpu.memory_space<vmem>>, %arg4: memref<512x256xbf16, #tpu.memory_space<vmem>>, %arg5: memref<1x256xf32, #tpu.memory_space<vmem>>, %arg6: memref<256x128xbf16, #tpu.memory_space<vmem>>, %arg7: memref<1x128xf32, #tpu.memory_space<vmem>>, %arg8: memref<1x128xf32, #tpu.memory_space<vmem>>, %arg9: memref<1x1xf32, #tpu.memory_space<vmem>>, %arg10: memref<16x1xf32, #tpu.memory_space<vmem>>) attributes {dimension_semantics = [#tpu.dimension_semantics<parallel>], iteration_bounds = array<i64: 1>, scalar_prefetch = 0 : i64, scratch_operands = 0 : i64, tpu.core_type = #tpu.core_type<tc>, window_params = [{transform_indices = @transform_0, window_bounds = array<i64: 16, 512>}, {pipeline_mode = #tpu.pipeline_mode<synchronous>, transform_indices = @transform_1, window_bounds = array<i64: 512, 512>}, {pipeline_mode = #tpu.pipeline_mode<synchronous>, transform_indices = @transform_2, window_bounds = array<i64: 1, 512>}, {pipeline_mode = #tpu.pipeline_mode<synchronous>, transform_indices = @transform_3, window_bounds = array<i64: 512, 256>}, {pipeline_mode = #tpu.pipeline_mode<synchronous>, transform_indices = @transform_4, window_bounds = array<i64: 1, 256>}, {pipeline_mode = #tpu.pipeline_mode<synchronous>, transform_indices = @transform_5, window_bounds = array<i64: 256, 128>}, {pipeline_mode = #tpu.pipeline_mode<synchronous>, transform_indices = @transform_6, window_bounds = array<i64: 1, 128>}, {pipeline_mode = #tpu.pipeline_mode<synchronous>, transform_indices = @transform_7, window_bounds = array<i64: 1, 128>}, {pipeline_mode = #tpu.pipeline_mode<synchronous>, transform_indices = @transform_8, window_bounds = array<i64: 1, 1>}, {transform_indices = @transform_9, window_bounds = array<i64: 16, 1>}]} {
    %c0 = arith.constant 0 : index
    %c0_0 = arith.constant 0 : index
    %0 = vector.load %arg1[%c0, %c0_0] : memref<16x512xf32, #tpu.memory_space<vmem>>, vector<16x512xf32>
    %1 = arith.truncf %0 : vector<16x512xf32> to vector<16x512xbf16>
    %c0_1 = arith.constant 0 : index
    %c0_2 = arith.constant 0 : index
    %2 = vector.load %arg2[%c0_1, %c0_2] : memref<512x512xbf16, #tpu.memory_space<vmem>>, vector<512x512xbf16>
    %cst = arith.constant dense<0.000000e+00> : vector<16x512xf32>
    %3 = tpu.matmul %1, %2, %cst {dimension_numbers = #tpu.dot_dimension_numbers<[1], [0], [0], [1], [0, 0, 1, 1], [], []>} : vector<16x512xbf16>, vector<512x512xbf16>, vector<16x512xf32> -> vector<16x512xf32>
    %c0_3 = arith.constant 0 : index
    %c0_4 = arith.constant 0 : index
    %4 = vector.load %arg3[%c0_3, %c0_4] : memref<1x512xf32, #tpu.memory_space<vmem>>, vector<1x512xf32>
    %5 = vector.broadcast %4 : vector<1x512xf32> to vector<16x512xf32>
    %6 = arith.addf %3, %5 : vector<16x512xf32>
    %7 = arith.truncf %6 : vector<16x512xf32> to vector<16x512xbf16>
    %cst_5 = arith.constant 0.000000e+00 : bf16
    %8 = vector.broadcast %cst_5 : bf16 to vector<16x512xbf16>
    %9 = arith.maximumf %7, %8 : vector<16x512xbf16>
    %c0_6 = arith.constant 0 : index
    %c0_7 = arith.constant 0 : index
    %10 = vector.load %arg4[%c0_6, %c0_7] : memref<512x256xbf16, #tpu.memory_space<vmem>>, vector<512x256xbf16>
    %cst_8 = arith.constant dense<0.000000e+00> : vector<16x256xf32>
    %11 = tpu.matmul %9, %10, %cst_8 {dimension_numbers = #tpu.dot_dimension_numbers<[1], [0], [0], [1], [0, 0, 1, 1], [], []>} : vector<16x512xbf16>, vector<512x256xbf16>, vector<16x256xf32> -> vector<16x256xf32>
    %c0_9 = arith.constant 0 : index
    %c0_10 = arith.constant 0 : index
    %12 = vector.load %arg5[%c0_9, %c0_10] : memref<1x256xf32, #tpu.memory_space<vmem>>, vector<1x256xf32>
    %13 = vector.broadcast %12 : vector<1x256xf32> to vector<16x256xf32>
    %14 = arith.addf %11, %13 : vector<16x256xf32>
    %15 = arith.truncf %14 : vector<16x256xf32> to vector<16x256xbf16>
    %cst_11 = arith.constant 0.000000e+00 : bf16
    %16 = vector.broadcast %cst_11 : bf16 to vector<16x256xbf16>
    %17 = arith.maximumf %15, %16 : vector<16x256xbf16>
    %c0_12 = arith.constant 0 : index
    %c0_13 = arith.constant 0 : index
    %18 = vector.load %arg6[%c0_12, %c0_13] : memref<256x128xbf16, #tpu.memory_space<vmem>>, vector<256x128xbf16>
    %cst_14 = arith.constant dense<0.000000e+00> : vector<16x128xf32>
    %19 = tpu.matmul %17, %18, %cst_14 {dimension_numbers = #tpu.dot_dimension_numbers<[1], [0], [0], [1], [0, 0, 1, 1], [], []>} : vector<16x256xbf16>, vector<256x128xbf16>, vector<16x128xf32> -> vector<16x128xf32>
    %c0_15 = arith.constant 0 : index
    %c0_16 = arith.constant 0 : index
    %20 = vector.load %arg7[%c0_15, %c0_16] : memref<1x128xf32, #tpu.memory_space<vmem>>, vector<1x128xf32>
    %21 = vector.broadcast %20 : vector<1x128xf32> to vector<16x128xf32>
    %22 = arith.addf %19, %21 : vector<16x128xf32>
    %23 = arith.truncf %22 : vector<16x128xf32> to vector<16x128xbf16>
    %cst_17 = arith.constant 0.000000e+00 : bf16
    %24 = vector.broadcast %cst_17 : bf16 to vector<16x128xbf16>
    %25 = arith.maximumf %23, %24 : vector<16x128xbf16>
    %26 = arith.extf %25 : vector<16x128xbf16> to vector<16x128xf32>
    %c0_18 = arith.constant 0 : index
    %c0_19 = arith.constant 0 : index
    %27 = vector.load %arg8[%c0_18, %c0_19] : memref<1x128xf32, #tpu.memory_space<vmem>>, vector<1x128xf32>
    %28 = vector.broadcast %27 : vector<1x128xf32> to vector<16x128xf32>
    %29 = arith.mulf %26, %28 : vector<16x128xf32>
    %cst_20 = arith.constant dense<0.000000e+00> : vector<16xf32>
    %30 = vector.multi_reduction <add>, %29, %cst_20 [1] : vector<16x128xf32> to vector<16xf32>
    %31 = vector.shape_cast %30 : vector<16xf32> to vector<16x1xf32>
    %c0_21 = arith.constant 0 : index
    %c0_22 = arith.constant 0 : index
    %32 = vector.load %arg9[%c0_21, %c0_22] : memref<1x1xf32, #tpu.memory_space<vmem>>, vector<1x1xf32>
    %33 = vector.broadcast %32 : vector<1x1xf32> to vector<16x1xf32>
    %34 = arith.addf %31, %33 : vector<16x1xf32>
    %35 = arith.negf %34 : vector<16x1xf32>
    %36 = math.exp %35 : vector<16x1xf32>
    %cst_23 = arith.constant 1.000000e+00 : f32
    %37 = vector.broadcast %cst_23 : f32 to vector<16x1xf32>
    %38 = arith.addf %37, %36 : vector<16x1xf32>
    %39 = arith.divf %37, %38 : vector<16x1xf32>
    %c0_24 = arith.constant 0 : index
    %c0_25 = arith.constant 0 : index
    %40 = vector.load %arg10[%c0_24, %c0_25] : memref<16x1xf32, #tpu.memory_space<vmem>>, vector<16x1xf32>
    tpu.vector_store %arg10[%c0_24, %c0_25], %39 {strides = array<i32>} : memref<16x1xf32, #tpu.memory_space<vmem>>, vector<16x1xf32>,
    return
  }
  func.func @transform_0(%arg0: i32) -> (i32, i32) {
    %c0_i32 = arith.constant 0 : i32
    %c0_i32_0 = arith.constant 0 : i32
    return %arg0, %c0_i32 : i32, i32
  }
  func.func @transform_1(%arg0: i32) -> (i32, i32) {
    %c0_i32 = arith.constant 0 : i32
    %c0_i32_0 = arith.constant 0 : i32
    %c0_i32_1 = arith.constant 0 : i32
    return %c0_i32, %c0_i32_0 : i32, i32
  }
  func.func @transform_2(%arg0: i32) -> (i32, i32) {
    %c0_i32 = arith.constant 0 : i32
    %c0_i32_0 = arith.constant 0 : i32
    %c0_i32_1 = arith.constant 0 : i32
    return %c0_i32, %c0_i32_0 : i32, i32
  }
  func.func @transform_3(%arg0: i32) -> (i32, i32) {
    %c0_i32 = arith.constant 0 : i32
    %c0_i32_0 = arith.constant 0 : i32
    %c0_i32_1 = arith.constant 0 : i32
    return %c0_i32, %c0_i32_0 : i32, i32
  }
  func.func @transform_4(%arg0: i32) -> (i32, i32) {
    %c0_i32 = arith.constant 0 : i32
    %c0_i32_0 = arith.constant 0 : i32
    %c0_i32_1 = arith.constant 0 : i32
    return %c0_i32, %c0_i32_0 : i32, i32
  }
  func.func @transform_5(%arg0: i32) -> (i32, i32) {
    %c0_i32 = arith.constant 0 : i32
    %c0_i32_0 = arith.constant 0 : i32
    %c0_i32_1 = arith.constant 0 : i32
    return %c0_i32, %c0_i32_0 : i32, i32
  }
  func.func @transform_6(%arg0: i32) -> (i32, i32) {
    %c0_i32 = arith.constant 0 : i32
    %c0_i32_0 = arith.constant 0 : i32
    %c0_i32_1 = arith.constant 0 : i32
    return %c0_i32, %c0_i32_0 : i32, i32
  }
  func.func @transform_7(%arg0: i32) -> (i32, i32) {
    %c0_i32 = arith.constant 0 : i32
    %c0_i32_0 = arith.constant 0 : i32
    %c0_i32_1 = arith.constant 0 : i32
    return %c0_i32, %c0_i32_0 : i32, i32
  }
  func.func @transform_8(%arg0: i32) -> (i32, i32) {
    %c0_i32 = arith.constant 0 : i32
    %c0_i32_0 = arith.constant 0 : i32
    %c0_i32_1 = arith.constant 0 : i32
    return %c0_i32, %c0_i32_0 : i32, i32
  }
  func.func @transform_9(%arg0: i32) -> (i32, i32) {
    %c0_i32 = arith.constant 0 : i32
    %c0_i32_0 = arith.constant 0 : i32
    return %arg0, %c0_i32 : i32, i32
  }
}

</mosaic_0001>

<llo_original>
// kernel: tpu_custom_call.1
$region0: #{tpu_custom_call.1}
  #allocation0 [shape = 'u32[]', space=smem, size = 0x4, offset = 0x4, fixed_abs, tag = 'smem constant byte address 0x4 - core index']
  #allocation1 [shape = 'u32[144,128]{1,0:T(1,128)}', space=vmem, size = 0x12000, scoped, tag = 'internal scratch']
  #allocation2 [shape = 'f32[1,1]{1,0:T(1,128)S(1)}', space=vmem, size = 0x200, scoped, tag = 'scoped memory for tpu_custom_call.1']
  %s0 = inlined_call_operand.hbm [shape: f32[16,512], index: 0, kind: input, shape index: {}]
  %s1 = inlined_call_operand.hbm [shape: bf16[512,512], index: 1, kind: input, shape index: {}]
  %s2 = inlined_call_operand.vmem [shape: f32[1,512], index: 2, kind: input, shape index: {}]
  %s3 = inlined_call_operand.hbm [shape: bf16[512,256], index: 3, kind: input, shape index: {}]
  %s4 = inlined_call_operand.vmem [shape: f32[1,256], index: 4, kind: input, shape index: {}]
  %s5 = inlined_call_operand.hbm [shape: bf16[256,128], index: 5, kind: input, shape index: {}]
  %s6 = inlined_call_operand.vmem [shape: f32[1,128], index: 6, kind: input, shape index: {}]
  %s7 = inlined_call_operand.vmem [shape: f32[1,128], index: 7, kind: input, shape index: {}]
  %s8 = inlined_call_operand.<no memory space> [shape: f32[1,1], index: 8, kind: input, shape index: {}]
  %s9 = inlined_call_operand.vmem [shape: f32[16,1], index: 9, kind: output, shape index: {}]
  %s10 = sld [smem:[#allocation0]]
  $region62: #{tpu_custom_call.1} parent=0
    _
  %s12 = ssub.s32 1, %s10
  %s13 = scalar_select 0, %s12, %s10
  %v14 = vstv %s8
  %15 = vst [vmem:[#allocation2] sm:$0x1] %v14
  $region1: #{tpu_custom_call.1} parent=0
    #allocation3 [shape = 'u8[32768]{0}', space=vmem, size = 0x8000, scoped, tag = 'input window, operand 0, single buffered']
    #allocation4 [shape = 's32[1]{0}', space=sflag, size = 0x4, scoped, tag = 'scoped memory for tpu_custom_call.1']
    #allocation5 [shape = 'u8[524288]{0}', space=vmem, size = 0x80000, scoped, tag = 'input window, operand 1, single buffered']
    #allocation6 [shape = 's32[1]{0}', space=sflag, size = 0x4, scoped, tag = 'scoped memory for tpu_custom_call.1']
    #allocation7 [shape = 'u8[262144]{0}', space=vmem, size = 0x40000, scoped, tag = 'input window, operand 3, single buffered']
    #allocation8 [shape = 'u8[65536]{0}', space=vmem, size = 0x10000, scoped, tag = 'input window, operand 5, single buffered']
    #allocation9 [shape = 's32[1]{0}', space=sflag, size = 0x4, scoped, tag = 'scoped memory for tpu_custom_call.1']
    %16 = vsyncpa [#allocation4], 0
    %17 = vsyncpa [#allocation6], 0
    %18 = vsyncpa [#allocation9], 0
    // Predicated region
    $region2: #{tpu_custom_call.1} parent=1 // pred_check
      _
    $region3: #{tpu_custom_call.1} parent=1 // pred_check_branch
      %20 = sbr.rel (0) target = $region5
    $region4: #{tpu_custom_call.1} parent=1 // pred_region
      %s22 = ssub.s32 1024, 1024
      %23 = vsyncadd [#allocation4], %s22
      %s24 = sshll.u32 [#allocation3], 4
      %s25 = int_to_ptr.vmem [resolvable:$true] %s24
      %30 = dma.hbm_to_vmem [thread:$0]  %s0, 1024, %s25, [#allocation4], 512, 512, 32
    $region5: #{tpu_custom_call.1} parent=1 // pred_fallthru
      _
    // Predicated region
    $region6: #{tpu_custom_call.1} parent=1 // pred_check
      _
    $region7: #{tpu_custom_call.1} parent=1 // pred_check_branch
      %32 = sbr.rel (0) target = $region9
    $region8: #{tpu_custom_call.1} parent=1 // pred_region
      %s34 = ssub.s32 16384, 16384
      %35 = vsyncadd [#allocation6], %s34
      %s36 = sshll.u32 [#allocation5], 4
      %s37 = int_to_ptr.vmem [resolvable:$true] %s36
      %42 = dma.hbm_to_vmem [thread:$0]  %s1, 16384, %s37, [#allocation6], 256, 256, 16
    $region9: #{tpu_custom_call.1} parent=1 // pred_fallthru
      _
    // Predicated region
    $region10: #{tpu_custom_call.1} parent=1 // pred_check
      _
    $region11: #{tpu_custom_call.1} parent=1 // pred_check_branch
      %44 = sbr.rel (0) target = $region13
    $region12: #{tpu_custom_call.1} parent=1 // pred_region
      _
    $region13: #{tpu_custom_call.1} parent=1 // pred_fallthru
      _
    // Predicated region
    $region14: #{tpu_custom_call.1} parent=1 // pred_check
      _
    $region15: #{tpu_custom_call.1} parent=1 // pred_check_branch
      %46 = sbr.rel (0) target = $region17
    $region16: #{tpu_custom_call.1} parent=1 // pred_region
      %s48 = ssub.s32 8192, 8192
      %49 = vsyncadd [#allocation6], %s48
      %s50 = sshll.u32 [#allocation7], 4
      %s51 = int_to_ptr.vmem [resolvable:$true] %s50
      %56 = dma.hbm_to_vmem [thread:$0]  %s3, 8192, %s51, [#allocation6], 128, 128, 8
    $region17: #{tpu_custom_call.1} parent=1 // pred_fallthru
      _
    // Predicated region
    $region18: #{tpu_custom_call.1} parent=1 // pred_check
      _
    $region19: #{tpu_custom_call.1} parent=1 // pred_check_branch
      %58 = sbr.rel (0) target = $region21
    $region20: #{tpu_custom_call.1} parent=1 // pred_region
      _
    $region21: #{tpu_custom_call.1} parent=1 // pred_fallthru
      _
    // Predicated region
    $region22: #{tpu_custom_call.1} parent=1 // pred_check
      _
    $region23: #{tpu_custom_call.1} parent=1 // pred_check_branch
      %60 = sbr.rel (0) target = $region25
    $region24: #{tpu_custom_call.1} parent=1 // pred_region
      %s62 = ssub.s32 2048, 2048
      %63 = vsyncadd [#allocation9], %s62
      %s64 = sshll.u32 [#allocation8], 4
      %s65 = int_to_ptr.vmem [resolvable:$true] %s64
      %70 = dma.hbm_to_vmem [thread:$0]  %s5, 2048, %s65, [#allocation9], 64, 64, 4
    $region25: #{tpu_custom_call.1} parent=1 // pred_fallthru
      _
    // Predicated region
    $region26: #{tpu_custom_call.1} parent=1 // pred_check
      _
    $region27: #{tpu_custom_call.1} parent=1 // pred_check_branch
      %72 = sbr.rel (0) target = $region29
    $region28: #{tpu_custom_call.1} parent=1 // pred_region
      _
    $region29: #{tpu_custom_call.1} parent=1 // pred_fallthru
      _
    // Predicated region
    $region30: #{tpu_custom_call.1} parent=1 // pred_check
      _
    $region31: #{tpu_custom_call.1} parent=1 // pred_check_branch
      %74 = sbr.rel (0) target = $region33
    $region32: #{tpu_custom_call.1} parent=1 // pred_region
      _
    $region33: #{tpu_custom_call.1} parent=1 // pred_fallthru
      _
    // Predicated region
    $region34: #{tpu_custom_call.1} parent=1 // pred_check
      _
    $region35: #{tpu_custom_call.1} parent=1 // pred_check_branch
      %76 = sbr.rel (0) target = $region37
    $region36: #{tpu_custom_call.1} parent=1 // pred_region
      _
    $region37: #{tpu_custom_call.1} parent=1 // pred_fallthru
      _
    // Predicated region
    $region38: #{tpu_custom_call.1} parent=1 // pred_check
      _
    $region39: #{tpu_custom_call.1} parent=1 // pred_check_branch
      %78 = sbr.rel (0) target = $region41
    $region40: #{tpu_custom_call.1} parent=1 // pred_region
      %79 = dma.done [#allocation4], 1024
    $region41: #{tpu_custom_call.1} parent=1 // pred_fallthru
      _
    // Predicated region
    $region42: #{tpu_custom_call.1} parent=1 // pred_check
      _
    $region43: #{tpu_custom_call.1} parent=1 // pred_check_branch
      %81 = sbr.rel (0) target = $region45
    $region44: #{tpu_custom_call.1} parent=1 // pred_region
      %82 = dma.done [#allocation6], 16384
    $region45: #{tpu_custom_call.1} parent=1 // pred_fallthru
      _
    // Predicated region
    $region46: #{tpu_custom_call.1} parent=1 // pred_check
      _
    $region47: #{tpu_custom_call.1} parent=1 // pred_check_branch
      %84 = sbr.rel (0) target = $region49
    $region48: #{tpu_custom_call.1} parent=1 // pred_region
      %85 = dma.done [#allocation6], 8192
    $region49: #{tpu_custom_call.1} parent=1 // pred_fallthru
      _
    // Predicated region
    $region50: #{tpu_custom_call.1} parent=1 // pred_check
      _
    $region51: #{tpu_custom_call.1} parent=1 // pred_check_branch
      %87 = sbr.rel (0) target = $region53
    $region52: #{tpu_custom_call.1} parent=1 // pred_region
      %88 = dma.done [#allocation9], 2048
    $region53: #{tpu_custom_call.1} parent=1 // pred_fallthru
      _
    %v90 = vld [vmem:[#allocation3] sm:$0xff]
    %v91 = vld [vmem:[#allocation3 + $0x8] sm:$0xff]
    %v92 = vld [vmem:[#allocation3 + $0x10] sm:$0xff]
    %v93 = vld [vmem:[#allocation3 + $0x18] sm:$0xff]
    %v94 = vld [vmem:[#allocation3 + $0x20] sm:$0xff]
    %v95 = vld [vmem:[#allocation3 + $0x28] sm:$0xff]
    %v96 = vld [vmem:[#allocation3 + $0x30] sm:$0xff]
    %v97 = vld [vmem:[#allocation3 + $0x38] sm:$0xff]
    %v98 = vpack.c.bf16 %v94, %v90
    %v99 = vpack.c.bf16 %v95, %v91
    %v100 = vpack.c.bf16 %v96, %v92
    %v101 = vpack.c.bf16 %v97, %v93
    %v102 = vld [vmem:[#allocation5] sm:$0xff]
    %v103 = vld [vmem:[#allocation5 + $0x8] sm:$0xff]
    %v104 = vld [vmem:[#allocation5 + $0x10] sm:$0xff]
    %v105 = vld [vmem:[#allocation5 + $0x18] sm:$0xff]
    %v106 = vld [vmem:[#allocation5 + $0x20] sm:$0xff]
    %v107 = vld [vmem:[#allocation5 + $0x28] sm:$0xff]
    %v108 = vld [vmem:[#allocation5 + $0x30] sm:$0xff]
    %v109 = vld [vmem:[#allocation5 + $0x38] sm:$0xff]
    %v110 = vld [vmem:[#allocation5 + $0x40] sm:$0xff]
    %v111 = vld [vmem:[#allocation5 + $0x48] sm:$0xff]
    %v112 = vld [vmem:[#allocation5 + $0x50] sm:$0xff]
    %v113 = vld [vmem:[#allocation5 + $0x58] sm:$0xff]
    %v114 = vld [vmem:[#allocation5 + $0x60] sm:$0xff]
    %v115 = vld [vmem:[#allocation5 + $0x68] sm:$0xff]
    %v116 = vld [vmem:[#allocation5 + $0x70] sm:$0xff]
    %v117 = vld [vmem:[#allocation5 + $0x78] sm:$0xff]
    %v118 = vld [vmem:[#allocation5 + $0x80] sm:$0xff]
    %v119 = vld [vmem:[#allocation5 + $0x88] sm:$0xff]
    %v120 = vld [vmem:[#allocation5 + $0x90] sm:$0xff]
    %v121 = vld [vmem:[#allocation5 + $0x98] sm:$0xff]
    %v122 = vld [vmem:[#allocation5 + $0xa0] sm:$0xff]
    %v123 = vld [vmem:[#allocation5 + $0xa8] sm:$0xff]
    %v124 = vld [vmem:[#allocation5 + $0xb0] sm:$0xff]
    %v125 = vld [vmem:[#allocation5 + $0xb8] sm:$0xff]
    %v126 = vld [vmem:[#allocation5 + $0xc0] sm:$0xff]
    %v127 = vld [vmem:[#allocation5 + $0xc8] sm:$0xff]
    %v128 = vld [vmem:[#allocation5 + $0xd0] sm:$0xff]
    %v129 = vld [vmem:[#allocation5 + $0xd8] sm:$0xff]
    %v130 = vld [vmem:[#allocation5 + $0xe0] sm:$0xff]
    %v131 = vld [vmem:[#allocation5 + $0xe8] sm:$0xff]
    %v132 = vld [vmem:[#allocation5 + $0xf0] sm:$0xff]
    %v133 = vld [vmem:[#allocation5 + $0xf8] sm:$0xff]
    %v134 = vld [vmem:[#allocation5 + $0x100] sm:$0xff]
    %v135 = vld [vmem:[#allocation5 + $0x108] sm:$0xff]
    %v136 = vld [vmem:[#allocation5 + $0x110] sm:$0xff]
    %v137 = vld [vmem:[#allocation5 + $0x118] sm:$0xff]
    %v138 = vld [vmem:[#allocation5 + $0x120] sm:$0xff]
    %v139 = vld [vmem:[#allocation5 + $0x128] sm:$0xff]
    %v140 = vld [vmem:[#allocation5 + $0x130] sm:$0xff]
    %v141 = vld [vmem:[#allocation5 + $0x138] sm:$0xff]
    %v142 = vld [vmem:[#allocation5 + $0x140] sm:$0xff]
    %v143 = vld [vmem:[#allocation5 + $0x148] sm:$0xff]
    %v144 = vld [vmem:[#allocation5 + $0x150] sm:$0xff]
    %v145 = vld [vmem:[#allocation5 + $0x158] sm:$0xff]
    %v146 = vld [vmem:[#allocation5 + $0x160] sm:$0xff]
    %v147 = vld [vmem:[#allocation5 + $0x168] sm:$0xff]
    %v148 = vld [vmem:[#allocation5 + $0x170] sm:$0xff]
    %v149 = vld [vmem:[#allocation5 + $0x178] sm:$0xff]
    %v150 = vld [vmem:[#allocation5 + $0x180] sm:$0xff]
    %v151 = vld [vmem:[#allocation5 + $0x188] sm:$0xff]
    %v152 = vld [vmem:[#allocation5 + $0x190] sm:$0xff]
    %v153 = vld [vmem:[#allocation5 + $0x198] sm:$0xff]
    %v154 = vld [vmem:[#allocation5 + $0x1a0] sm:$0xff]
    %v155 = vld [vmem:[#allocation5 + $0x1a8] sm:$0xff]
    %v156 = vld [vmem:[#allocation5 + $0x1b0] sm:$0xff]
    %v157 = vld [vmem:[#allocation5 + $0x1b8] sm:$0xff]
    %v158 = vld [vmem:[#allocation5 + $0x1c0] sm:$0xff]
    %v159 = vld [vmem:[#allocation5 + $0x1c8] sm:$0xff]
    %v160 = vld [vmem:[#allocation5 + $0x1d0] sm:$0xff]
    %v161 = vld [vmem:[#allocation5 + $0x1d8] sm:$0xff]
    %v162 = vld [vmem:[#allocation5 + $0x1e0] sm:$0xff]
    %v163 = vld [vmem:[#allocation5 + $0x1e8] sm:$0xff]
    %v164 = vld [vmem:[#allocation5 + $0x1f0] sm:$0xff]
    %v165 = vld [vmem:[#allocation5 + $0x1f8] sm:$0xff]
    %v166 = vld [vmem:[#allocation5 + $0x200] sm:$0xff]
    %v167 = vld [vmem:[#allocation5 + $0x208] sm:$0xff]
    %v168 = vld [vmem:[#allocation5 + $0x210] sm:$0xff]
    %v169 = vld [vmem:[#allocation5 + $0x218] sm:$0xff]
    %v170 = vld [vmem:[#allocation5 + $0x220] sm:$0xff]
    %v171 = vld [vmem:[#allocation5 + $0x228] sm:$0xff]
    %v172 = vld [vmem:[#allocation5 + $0x230] sm:$0xff]
    %v173 = vld [vmem:[#allocation5 + $0x238] sm:$0xff]
    %v174 = vld [vmem:[#allocation5 + $0x240] sm:$0xff]
    %v175 = vld [vmem:[#allocation5 + $0x248] sm:$0xff]
    %v176 = vld [vmem:[#allocation5 + $0x250] sm:$0xff]
    %v177 = vld [vmem:[#allocation5 + $0x258] sm:$0xff]
    %v178 = vld [vmem:[#allocation5 + $0x260] sm:$0xff]
    %v179 = vld [vmem:[#allocation5 + $0x268] sm:$0xff]
    %v180 = vld [vmem:[#allocation5 + $0x270] sm:$0xff]
    %v181 = vld [vmem:[#allocation5 + $0x278] sm:$0xff]
    %v182 = vld [vmem:[#allocation5 + $0x280] sm:$0xff]
    %v183 = vld [vmem:[#allocation5 + $0x288] sm:$0xff]
    %v184 = vld [vmem:[#allocation5 + $0x290] sm:$0xff]
    %v185 = vld [vmem:[#allocation5 + $0x298] sm:$0xff]
    %v186 = vld [vmem:[#allocation5 + $0x2a0] sm:$0xff]
    %v187 = vld [vmem:[#allocation5 + $0x2a8] sm:$0xff]
    %v188 = vld [vmem:[#allocation5 + $0x2b0] sm:$0xff]
    %v189 = vld [vmem:[#allocation5 + $0x2b8] sm:$0xff]
    %v190 = vld [vmem:[#allocation5 + $0x2c0] sm:$0xff]
    %v191 = vld [vmem:[#allocation5 + $0x2c8] sm:$0xff]
    %v192 = vld [vmem:[#allocation5 + $0x2d0] sm:$0xff]
    %v193 = vld [vmem:[#allocation5 + $0x2d8] sm:$0xff]
    %v194 = vld [vmem:[#allocation5 + $0x2e0] sm:$0xff]
    %v195 = vld [vmem:[#allocation5 + $0x2e8] sm:$0xff]
    %v196 = vld [vmem:[#allocation5 + $0x2f0] sm:$0xff]
    %v197 = vld [vmem:[#allocation5 + $0x2f8] sm:$0xff]
    %v198 = vld [vmem:[#allocation5 + $0x300] sm:$0xff]
    %v199 = vld [vmem:[#allocation5 + $0x308] sm:$0xff]
    %v200 = vld [vmem:[#allocation5 + $0x310] sm:$0xff]
    %v201 = vld [vmem:[#allocation5 + $0x318] sm:$0xff]
    %v202 = vld [vmem:[#allocation5 + $0x320] sm:$0xff]
    %v203 = vld [vmem:[#allocation5 + $0x328] sm:$0xff]
    %v204 = vld [vmem:[#allocation5 + $0x330] sm:$0xff]
    %v205 = vld [vmem:[#allocation5 + $0x338] sm:$0xff]
    %v206 = vld [vmem:[#allocation5 + $0x340] sm:$0xff]
    %v207 = vld [vmem:[#allocation5 + $0x348] sm:$0xff]
    %v208 = vld [vmem:[#allocation5 + $0x350] sm:$0xff]
    %v209 = vld [vmem:[#allocation5 + $0x358] sm:$0xff]
    %v210 = vld [vmem:[#allocation5 + $0x360] sm:$0xff]
    %v211 = vld [vmem:[#allocation5 + $0x368] sm:$0xff]
    %v212 = vld [vmem:[#allocation5 + $0x370] sm:$0xff]
    %v213 = vld [vmem:[#allocation5 + $0x378] sm:$0xff]
    %v214 = vld [vmem:[#allocation5 + $0x380] sm:$0xff]
    %v215 = vld [vmem:[#allocation5 + $0x388] sm:$0xff]
    %v216 = vld [vmem:[#allocation5 + $0x390] sm:$0xff]
    %v217 = vld [vmem:[#allocation5 + $0x398] sm:$0xff]
    %v218 = vld [vmem:[#allocation5 + $0x3a0] sm:$0xff]
    %v219 = vld [vmem:[#allocation5 + $0x3a8] sm:$0xff]
    %v220 = vld [vmem:[#allocation5 + $0x3b0] sm:$0xff]
    %v221 = vld [vmem:[#allocation5 + $0x3b8] sm:$0xff]
    %v222 = vld [vmem:[#allocation5 + $0x3c0] sm:$0xff]
    %v223 = vld [vmem:[#allocation5 + $0x3c8] sm:$0xff]
    %v224 = vld [vmem:[#allocation5 + $0x3d0] sm:$0xff]
    %v225 = vld [vmem:[#allocation5 + $0x3d8] sm:$0xff]
    %v226 = vld [vmem:[#allocation5 + $0x3e0] sm:$0xff]
    %v227 = vld [vmem:[#allocation5 + $0x3e8] sm:$0xff]
    %v228 = vld [vmem:[#allocation5 + $0x3f0] sm:$0xff]
    %v229 = vld [vmem:[#allocation5 + $0x3f8] sm:$0xff]
    %v230 = vld [vmem:[%s2] sm:$0xf]
    %v232 = vlaneseq
    %v233 = vshrl.u32 %v232, 7
    %v234 = vsub.s32 0, %v233
    %v235 = vrot.slane %v230, %v234
    %v236 = vlaneseq
    %v237 = vshrl.u32 %v236, 7
    %v238 = vsub.s32 1, %v237
    %v239 = vrot.slane %v230, %v238
    %v240 = vlaneseq
    %v241 = vshrl.u32 %v240, 7
    %v242 = vsub.s32 2, %v241
    %v243 = vrot.slane %v230, %v242
    %v244 = vlaneseq
    %v245 = vshrl.u32 %v244, 7
    %v246 = vsub.s32 3, %v245
    %v247 = vrot.slane %v230, %v246
    %v380 = vunpack.c.l.b16 %v102
    %v381 = vunpack.c.h.b16 %v102
    %v382 = vunpack.c.l.b16 %v103
    %v383 = vunpack.c.h.b16 %v103
    %v384 = vunpack.c.l.b16 %v104
    %v385 = vunpack.c.h.b16 %v104
    %v386 = vunpack.c.l.b16 %v105
    %v387 = vunpack.c.h.b16 %v105
    %v388 = vunpack.c.l.b16 %v106
    %v389 = vunpack.c.h.b16 %v106
    %v390 = vunpack.c.l.b16 %v107
    %v391 = vunpack.c.h.b16 %v107
    %v392 = vunpack.c.l.b16 %v108
    %v393 = vunpack.c.h.b16 %v108
    %v394 = vunpack.c.l.b16 %v109
    %v395 = vunpack.c.h.b16 %v109
    %v396 = vunpack.c.l.b16 %v110
    %v397 = vunpack.c.h.b16 %v110
    %v398 = vunpack.c.l.b16 %v111
    %v399 = vunpack.c.h.b16 %v111
    %v400 = vunpack.c.l.b16 %v112
    %v401 = vunpack.c.h.b16 %v112
    %v402 = vunpack.c.l.b16 %v113
    %v403 = vunpack.c.h.b16 %v113
    %v404 = vunpack.c.l.b16 %v114
    %v405 = vunpack.c.h.b16 %v114
    %v406 = vunpack.c.l.b16 %v115
    %v407 = vunpack.c.h.b16 %v115
    %v408 = vunpack.c.l.b16 %v116
    %v409 = vunpack.c.h.b16 %v116
    %v410 = vunpack.c.l.b16 %v117
    %v411 = vunpack.c.h.b16 %v117
    %v412 = vunpack.c.l.b16 %v118
    %v413 = vunpack.c.h.b16 %v118
    %v414 = vunpack.c.l.b16 %v119
    %v415 = vunpack.c.h.b16 %v119
    %v416 = vunpack.c.l.b16 %v120
    %v417 = vunpack.c.h.b16 %v120
    %v418 = vunpack.c.l.b16 %v121
    %v419 = vunpack.c.h.b16 %v121
    %v420 = vunpack.c.l.b16 %v122
    %v421 = vunpack.c.h.b16 %v122
    %v422 = vunpack.c.l.b16 %v123
    %v423 = vunpack.c.h.b16 %v123
    %v424 = vunpack.c.l.b16 %v124
    %v425 = vunpack.c.h.b16 %v124
    %v426 = vunpack.c.l.b16 %v125
    %v427 = vunpack.c.h.b16 %v125
    %v428 = vunpack.c.l.b16 %v126
    %v429 = vunpack.c.h.b16 %v126
    %v430 = vunpack.c.l.b16 %v127
    %v431 = vunpack.c.h.b16 %v127
    %v432 = vunpack.c.l.b16 %v128
    %v433 = vunpack.c.h.b16 %v128
    %v434 = vunpack.c.l.b16 %v129
    %v435 = vunpack.c.h.b16 %v129
    %v436 = vunpack.c.l.b16 %v130
    %v437 = vunpack.c.h.b16 %v130
    %v438 = vunpack.c.l.b16 %v131
    %v439 = vunpack.c.h.b16 %v131
    %v440 = vunpack.c.l.b16 %v132
    %v441 = vunpack.c.h.b16 %v132
    %v442 = vunpack.c.l.b16 %v133
    %v443 = vunpack.c.h.b16 %v133
    %v444 = vunpack.c.l.b16 %v134
    %v445 = vunpack.c.h.b16 %v134
    %v446 = vunpack.c.l.b16 %v135
    %v447 = vunpack.c.h.b16 %v135
    %v448 = vunpack.c.l.b16 %v136
    %v449 = vunpack.c.h.b16 %v136
    %v450 = vunpack.c.l.b16 %v137
    %v451 = vunpack.c.h.b16 %v137
    %v452 = vunpack.c.l.b16 %v138
    %v453 = vunpack.c.h.b16 %v138
    %v454 = vunpack.c.l.b16 %v139
    %v455 = vunpack.c.h.b16 %v139
    %v456 = vunpack.c.l.b16 %v140
    %v457 = vunpack.c.h.b16 %v140
    %v458 = vunpack.c.l.b16 %v141
    %v459 = vunpack.c.h.b16 %v141
    %v460 = vunpack.c.l.b16 %v142
    %v461 = vunpack.c.h.b16 %v142
    %v462 = vunpack.c.l.b16 %v143
    %v463 = vunpack.c.h.b16 %v143
    %v464 = vunpack.c.l.b16 %v144
    %v465 = vunpack.c.h.b16 %v144
    %v466 = vunpack.c.l.b16 %v145
    %v467 = vunpack.c.h.b16 %v145
    %v468 = vunpack.c.l.b16 %v146
    %v469 = vunpack.c.h.b16 %v146
    %v470 = vunpack.c.l.b16 %v147
    %v471 = vunpack.c.h.b16 %v147
    %v472 = vunpack.c.l.b16 %v148
    %v473 = vunpack.c.h.b16 %v148
    %v474 = vunpack.c.l.b16 %v149
    %v475 = vunpack.c.h.b16 %v149
    %v476 = vunpack.c.l.b16 %v150
    %v477 = vunpack.c.h.b16 %v150
    %v478 = vunpack.c.l.b16 %v151
    %v479 = vunpack.c.h.b16 %v151
    %v480 = vunpack.c.l.b16 %v152
    %v481 = vunpack.c.h.b16 %v152
    %v482 = vunpack.c.l.b16 %v153
    %v483 = vunpack.c.h.b16 %v153
    %v484 = vunpack.c.l.b16 %v154
    %v485 = vunpack.c.h.b16 %v154
    %v486 = vunpack.c.l.b16 %v155
    %v487 = vunpack.c.h.b16 %v155
    %v488 = vunpack.c.l.b16 %v156
    %v489 = vunpack.c.h.b16 %v156
    %v490 = vunpack.c.l.b16 %v157
    %v491 = vunpack.c.h.b16 %v157
    %v492 = vunpack.c.l.b16 %v158
    %v493 = vunpack.c.h.b16 %v158
    %v494 = vunpack.c.l.b16 %v159
    %v495 = vunpack.c.h.b16 %v159
    %v496 = vunpack.c.l.b16 %v160
    %v497 = vunpack.c.h.b16 %v160
    %v498 = vunpack.c.l.b16 %v161
    %v499 = vunpack.c.h.b16 %v161
    %v500 = vunpack.c.l.b16 %v162
    %v501 = vunpack.c.h.b16 %v162
    %v502 = vunpack.c.l.b16 %v163
    %v503 = vunpack.c.h.b16 %v163
    %v504 = vunpack.c.l.b16 %v164
    %v505 = vunpack.c.h.b16 %v164
    %v506 = vunpack.c.l.b16 %v165
    %v507 = vunpack.c.h.b16 %v165
    %v508 = vunpack.c.l.b16 %v166
    %v509 = vunpack.c.h.b16 %v166
    %v510 = vunpack.c.l.b16 %v167
    %v511 = vunpack.c.h.b16 %v167
    %v512 = vunpack.c.l.b16 %v168
    %v513 = vunpack.c.h.b16 %v168
    %v514 = vunpack.c.l.b16 %v169
    %v515 = vunpack.c.h.b16 %v169
    %v516 = vunpack.c.l.b16 %v170
    %v517 = vunpack.c.h.b16 %v170
    %v518 = vunpack.c.l.b16 %v171
    %v519 = vunpack.c.h.b16 %v171
    %v520 = vunpack.c.l.b16 %v172
    %v521 = vunpack.c.h.b16 %v172
    %v522 = vunpack.c.l.b16 %v173
    %v523 = vunpack.c.h.b16 %v173
    %v524 = vunpack.c.l.b16 %v174
    %v525 = vunpack.c.h.b16 %v174
    %v526 = vunpack.c.l.b16 %v175
    %v527 = vunpack.c.h.b16 %v175
    %v528 = vunpack.c.l.b16 %v176
    %v529 = vunpack.c.h.b16 %v176
    %v530 = vunpack.c.l.b16 %v177
    %v531 = vunpack.c.h.b16 %v177
    %v532 = vunpack.c.l.b16 %v178
    %v533 = vunpack.c.h.b16 %v178
    %v534 = vunpack.c.l.b16 %v179
    %v535 = vunpack.c.h.b16 %v179
    %v536 = vunpack.c.l.b16 %v180
    %v537 = vunpack.c.h.b16 %v180
    %v538 = vunpack.c.l.b16 %v181
    %v539 = vunpack.c.h.b16 %v181
    %v540 = vunpack.c.l.b16 %v182
    %v541 = vunpack.c.h.b16 %v182
    %v542 = vunpack.c.l.b16 %v183
    %v543 = vunpack.c.h.b16 %v183
    %v544 = vunpack.c.l.b16 %v184
    %v545 = vunpack.c.h.b16 %v184
    %v546 = vunpack.c.l.b16 %v185
    %v547 = vunpack.c.h.b16 %v185
    %v548 = vunpack.c.l.b16 %v186
    %v549 = vunpack.c.h.b16 %v186
    %v550 = vunpack.c.l.b16 %v187
    %v551 = vunpack.c.h.b16 %v187
    %v552 = vunpack.c.l.b16 %v188
    %v553 = vunpack.c.h.b16 %v188
    %v554 = vunpack.c.l.b16 %v189
    %v555 = vunpack.c.h.b16 %v189
    %v556 = vunpack.c.l.b16 %v190
    %v557 = vunpack.c.h.b16 %v190
    %v558 = vunpack.c.l.b16 %v191
    %v559 = vunpack.c.h.b16 %v191
    %v560 = vunpack.c.l.b16 %v192
    %v561 = vunpack.c.h.b16 %v192
    %v562 = vunpack.c.l.b16 %v193
    %v563 = vunpack.c.h.b16 %v193
    %v564 = vunpack.c.l.b16 %v194
    %v565 = vunpack.c.h.b16 %v194
    %v566 = vunpack.c.l.b16 %v195
    %v567 = vunpack.c.h.b16 %v195
    %v568 = vunpack.c.l.b16 %v196
    %v569 = vunpack.c.h.b16 %v196
    %v570 = vunpack.c.l.b16 %v197
    %v571 = vunpack.c.h.b16 %v197
    %v572 = vunpack.c.l.b16 %v198
    %v573 = vunpack.c.h.b16 %v198
    %v574 = vunpack.c.l.b16 %v199
    %v575 = vunpack.c.h.b16 %v199
    %v576 = vunpack.c.l.b16 %v200
    %v577 = vunpack.c.h.b16 %v200
    %v578 = vunpack.c.l.b16 %v201
    %v579 = vunpack.c.h.b16 %v201
    %v580 = vunpack.c.l.b16 %v202
    %v581 = vunpack.c.h.b16 %v202
    %v582 = vunpack.c.l.b16 %v203
    %v583 = vunpack.c.h.b16 %v203
    %v584 = vunpack.c.l.b16 %v204
    %v585 = vunpack.c.h.b16 %v204
    %v586 = vunpack.c.l.b16 %v205
    %v587 = vunpack.c.h.b16 %v205
    %v588 = vunpack.c.l.b16 %v206
    %v589 = vunpack.c.h.b16 %v206
    %v590 = vunpack.c.l.b16 %v207
    %v591 = vunpack.c.h.b16 %v207
    %v592 = vunpack.c.l.b16 %v208
    %v593 = vunpack.c.h.b16 %v208
    %v594 = vunpack.c.l.b16 %v209
    %v595 = vunpack.c.h.b16 %v209
    %v596 = vunpack.c.l.b16 %v210
    %v597 = vunpack.c.h.b16 %v210
    %v598 = vunpack.c.l.b16 %v211
    %v599 = vunpack.c.h.b16 %v211
    %v600 = vunpack.c.l.b16 %v212
    %v601 = vunpack.c.h.b16 %v212
    %v602 = vunpack.c.l.b16 %v213
    %v603 = vunpack.c.h.b16 %v213
    %v604 = vunpack.c.l.b16 %v214
    %v605 = vunpack.c.h.b16 %v214
    %v606 = vunpack.c.l.b16 %v215
    %v607 = vunpack.c.h.b16 %v215
    %v608 = vunpack.c.l.b16 %v216
    %v609 = vunpack.c.h.b16 %v216
    %v610 = vunpack.c.l.b16 %v217
    %v611 = vunpack.c.h.b16 %v217
    %v612 = vunpack.c.l.b16 %v218
    %v613 = vunpack.c.h.b16 %v218
    %v614 = vunpack.c.l.b16 %v219
    %v615 = vunpack.c.h.b16 %v219
    %v616 = vunpack.c.l.b16 %v220
    %v617 = vunpack.c.h.b16 %v220
    %v618 = vunpack.c.l.b16 %v221
    %v619 = vunpack.c.h.b16 %v221
    %v620 = vunpack.c.l.b16 %v222
    %v621 = vunpack.c.h.b16 %v222
    %v622 = vunpack.c.l.b16 %v223
    %v623 = vunpack.c.h.b16 %v223
    %v624 = vunpack.c.l.b16 %v224
    %v625 = vunpack.c.h.b16 %v224
    %v626 = vunpack.c.l.b16 %v225
    %v627 = vunpack.c.h.b16 %v225
    %v628 = vunpack.c.l.b16 %v226
    %v629 = vunpack.c.h.b16 %v226
    %v630 = vunpack.c.l.b16 %v227
    %v631 = vunpack.c.h.b16 %v227
    %v632 = vunpack.c.l.b16 %v228
    %v633 = vunpack.c.h.b16 %v228
    %v634 = vunpack.c.l.b16 %v229
    %v635 = vunpack.c.h.b16 %v229
    %v636 = vpack.c.b16 %v384, %v380
    %v637 = vpack.c.b16 %v385, %v381
    %v638 = vpack.c.b16 %v386, %v382
    %v639 = vpack.c.b16 %v387, %v383
    %v640 = vpack.c.b16 %v392, %v388
    %v641 = vpack.c.b16 %v393, %v389
    %v642 = vpack.c.b16 %v394, %v390
    %v643 = vpack.c.b16 %v395, %v391
    %v644 = vpack.c.b16 %v400, %v396
    %v645 = vpack.c.b16 %v401, %v397
    %v646 = vpack.c.b16 %v402, %v398
    %v647 = vpack.c.b16 %v403, %v399
    %v648 = vpack.c.b16 %v408, %v404
    %v649 = vpack.c.b16 %v409, %v405
    %v650 = vpack.c.b16 %v410, %v406
    %v651 = vpack.c.b16 %v411, %v407
    %v652 = vpack.c.b16 %v416, %v412
    %v653 = vpack.c.b16 %v417, %v413
    %v654 = vpack.c.b16 %v418, %v414
    %v655 = vpack.c.b16 %v419, %v415
    %v656 = vpack.c.b16 %v424, %v420
    %v657 = vpack.c.b16 %v425, %v421
    %v658 = vpack.c.b16 %v426, %v422
    %v659 = vpack.c.b16 %v427, %v423
    %v660 = vpack.c.b16 %v432, %v428
    %v661 = vpack.c.b16 %v433, %v429
    %v662 = vpack.c.b16 %v434, %v430
    %v663 = vpack.c.b16 %v435, %v431
    %v664 = vpack.c.b16 %v440, %v436
    %v665 = vpack.c.b16 %v441, %v437
    %v666 = vpack.c.b16 %v442, %v438
    %v667 = vpack.c.b16 %v443, %v439
    %v668 = vpack.c.b16 %v448, %v444
    %v669 = vpack.c.b16 %v449, %v445
    %v670 = vpack.c.b16 %v450, %v446
    %v671 = vpack.c.b16 %v451, %v447
    %v672 = vpack.c.b16 %v456, %v452
    %v673 = vpack.c.b16 %v457, %v453
    %v674 = vpack.c.b16 %v458, %v454
    %v675 = vpack.c.b16 %v459, %v455
    %v676 = vpack.c.b16 %v464, %v460
    %v677 = vpack.c.b16 %v465, %v461
    %v678 = vpack.c.b16 %v466, %v462
    %v679 = vpack.c.b16 %v467, %v463
    %v680 = vpack.c.b16 %v472, %v468
    %v681 = vpack.c.b16 %v473, %v469
    %v682 = vpack.c.b16 %v474, %v470
    %v683 = vpack.c.b16 %v475, %v471
    %v684 = vpack.c.b16 %v480, %v476
    %v685 = vpack.c.b16 %v481, %v477
    %v686 = vpack.c.b16 %v482, %v478
    %v687 = vpack.c.b16 %v483, %v479
    %v688 = vpack.c.b16 %v488, %v484
    %v689 = vpack.c.b16 %v489, %v485
    %v690 = vpack.c.b16 %v490, %v486
    %v691 = vpack.c.b16 %v491, %v487
    %v692 = vpack.c.b16 %v496, %v492
    %v693 = vpack.c.b16 %v497, %v493
    %v694 = vpack.c.b16 %v498, %v494
    %v695 = vpack.c.b16 %v499, %v495
    %v696 = vpack.c.b16 %v504, %v500
    %v697 = vpack.c.b16 %v505, %v501
    %v698 = vpack.c.b16 %v506, %v502
    %v699 = vpack.c.b16 %v507, %v503
    %v700 = vpack.c.b16 %v512, %v508
    %v701 = vpack.c.b16 %v513, %v509
    %v702 = vpack.c.b16 %v514, %v510
    %v703 = vpack.c.b16 %v515, %v511
    %v704 = vpack.c.b16 %v520, %v516
    %v705 = vpack.c.b16 %v521, %v517
    %v706 = vpack.c.b16 %v522, %v518
    %v707 = vpack.c.b16 %v523, %v519
    %v708 = vpack.c.b16 %v528, %v524
    %v709 = vpack.c.b16 %v529, %v525
    %v710 = vpack.c.b16 %v530, %v526
    %v711 = vpack.c.b16 %v531, %v527
    %v712 = vpack.c.b16 %v536, %v532
    %v713 = vpack.c.b16 %v537, %v533
    %v714 = vpack.c.b16 %v538, %v534
    %v715 = vpack.c.b16 %v539, %v535
    %v716 = vpack.c.b16 %v544, %v540
    %v717 = vpack.c.b16 %v545, %v541
    %v718 = vpack.c.b16 %v546, %v542
    %v719 = vpack.c.b16 %v547, %v543
    %v720 = vpack.c.b16 %v552, %v548
    %v721 = vpack.c.b16 %v553, %v549
    %v722 = vpack.c.b16 %v554, %v550
    %v723 = vpack.c.b16 %v555, %v551
    %v724 = vpack.c.b16 %v560, %v556
    %v725 = vpack.c.b16 %v561, %v557
    %v726 = vpack.c.b16 %v562, %v558
    %v727 = vpack.c.b16 %v563, %v559
    %v728 = vpack.c.b16 %v568, %v564
    %v729 = vpack.c.b16 %v569, %v565
    %v730 = vpack.c.b16 %v570, %v566
    %v731 = vpack.c.b16 %v571, %v567
    %v732 = vpack.c.b16 %v576, %v572
    %v733 = vpack.c.b16 %v577, %v573
    %v734 = vpack.c.b16 %v578, %v574
    %v735 = vpack.c.b16 %v579, %v575
    %v736 = vpack.c.b16 %v584, %v580
    %v737 = vpack.c.b16 %v585, %v581
    %v738 = vpack.c.b16 %v586, %v582
    %v739 = vpack.c.b16 %v587, %v583
    %v740 = vpack.c.b16 %v592, %v588
    %v741 = vpack.c.b16 %v593, %v589
    %v742 = vpack.c.b16 %v594, %v590
    %v743 = vpack.c.b16 %v595, %v591
    %v744 = vpack.c.b16 %v600, %v596
    %v745 = vpack.c.b16 %v601, %v597
    %v746 = vpack.c.b16 %v602, %v598
    %v747 = vpack.c.b16 %v603, %v599
    %v748 = vpack.c.b16 %v608, %v604
    %v749 = vpack.c.b16 %v609, %v605
    %v750 = vpack.c.b16 %v610, %v606
    %v751 = vpack.c.b16 %v611, %v607
    %v752 = vpack.c.b16 %v616, %v612
    %v753 = vpack.c.b16 %v617, %v613
    %v754 = vpack.c.b16 %v618, %v614
    %v755 = vpack.c.b16 %v619, %v615
    %v756 = vpack.c.b16 %v624, %v620
    %v757 = vpack.c.b16 %v625, %v621
    %v758 = vpack.c.b16 %v626, %v622
    %v759 = vpack.c.b16 %v627, %v623
    %v760 = vpack.c.b16 %v632, %v628
    %v761 = vpack.c.b16 %v633, %v629
    %v762 = vpack.c.b16 %v634, %v630
    %v763 = vpack.c.b16 %v635, %v631
    %892 = vmatprep.subr.bf16.mxu0 %v637
    %893 = vmatpush1.bf16.msra.mxu0 %v636
    %894 = vmatprep.subr.bf16.mxu0 %v641
    %895 = vmatpush1.bf16.msra.mxu0 %v640
    %896 = vmatprep.subr.bf16.mxu0 %v645
    %897 = vmatpush1.bf16.msra.mxu0 %v644
    %898 = vmatprep.subr.bf16.mxu0 %v649
    %899 = vmatpush1.bf16.msra.mxu0 %v648
    %900 = vmatprep.subr.bf16.mxu0 %v653
    %901 = vmatpush1.bf16.msra.mxu0 %v652
    %902 = vmatprep.subr.bf16.mxu0 %v657
    %903 = vmatpush1.bf16.msra.mxu0 %v656
    %904 = vmatprep.subr.bf16.mxu0 %v661
    %905 = vmatpush1.bf16.msra.mxu0 %v660
    %906 = vmatprep.subr.bf16.mxu0 %v665
    %907 = vmatpush1.bf16.msra.mxu0 %v664
    %908 = vmatprep.subr.bf16.mxu0 %v669
    %909 = vmatpush1.bf16.msra.mxu0 %v668
    %910 = vmatprep.subr.bf16.mxu0 %v673
    %911 = vmatpush1.bf16.msra.mxu0 %v672
    %912 = vmatprep.subr.bf16.mxu0 %v677
    %913 = vmatpush1.bf16.msra.mxu0 %v676
    %914 = vmatprep.subr.bf16.mxu0 %v681
    %915 = vmatpush1.bf16.msra.mxu0 %v680
    %916 = vmatprep.subr.bf16.mxu0 %v685
    %917 = vmatpush1.bf16.msra.mxu0 %v684
    %918 = vmatprep.subr.bf16.mxu0 %v689
    %919 = vmatpush1.bf16.msra.mxu0 %v688
    %920 = vmatprep.subr.bf16.mxu0 %v693
    %921 = vmatpush1.bf16.msra.mxu0 %v692
    %922 = vmatprep.subr.bf16.mxu0 %v697
    %923 = vmatpush1.bf16.msra.mxu0 %v696
    %924 = vmatprep.mubr.bf16.mxu0 %v99
    %925 = vmatmul.mubr.bf16.gmra.mrb[0].mxu0 %v98
    %v926 = vpop.f32.mrb[0].mxu0
    %v927 = vadd.f32 %v235, %v926
    %v928 = vpop.f32.mrb[0].mxu0
    %v929 = vadd.f32 %v239, %v928
    %v930 = vpop.f32.mrb[0].mxu0
    %v931 = vadd.f32 %v235, %v930
    %v932 = vpop.f32.mrb[0].mxu0
    %v933 = vadd.f32 %v239, %v932
    %934 = vdwg.mxu0
    %935 = vmatprep.subr.bf16.mxu0 %v701
    %936 = vmatpush1.bf16.msra.mxu0 %v700
    %937 = vmatprep.subr.bf16.mxu0 %v705
    %938 = vmatpush1.bf16.msra.mxu0 %v704
    %939 = vmatprep.subr.bf16.mxu0 %v709
    %940 = vmatpush1.bf16.msra.mxu0 %v708
    %941 = vmatprep.subr.bf16.mxu0 %v713
    %942 = vmatpush1.bf16.msra.mxu0 %v712
    %943 = vmatprep.subr.bf16.mxu0 %v717
    %944 = vmatpush1.bf16.msra.mxu0 %v716
    %945 = vmatprep.subr.bf16.mxu0 %v721
    %946 = vmatpush1.bf16.msra.mxu0 %v720
    %947 = vmatprep.subr.bf16.mxu0 %v725
    %948 = vmatpush1.bf16.msra.mxu0 %v724
    %949 = vmatprep.subr.bf16.mxu0 %v729
    %950 = vmatpush1.bf16.msra.mxu0 %v728
    %951 = vmatprep.subr.bf16.mxu0 %v733
    %952 = vmatpush1.bf16.msra.mxu0 %v732
    %953 = vmatprep.subr.bf16.mxu0 %v737
    %954 = vmatpush1.bf16.msra.mxu0 %v736
    %955 = vmatprep.subr.bf16.mxu0 %v741
    %956 = vmatpush1.bf16.msra.mxu0 %v740
    %957 = vmatprep.subr.bf16.mxu0 %v745
    %958 = vmatpush1.bf16.msra.mxu0 %v744
    %959 = vmatprep.subr.bf16.mxu0 %v749
    %960 = vmatpush1.bf16.msra.mxu0 %v748
    %961 = vmatprep.subr.bf16.mxu0 %v753
    %962 = vmatpush1.bf16.msra.mxu0 %v752
    %963 = vmatprep.subr.bf16.mxu0 %v757
    %964 = vmatpush1.bf16.msra.mxu0 %v756
    %965 = vmatprep.subr.bf16.mxu0 %v761
    %966 = vmatpush1.bf16.msra.mxu0 %v760
    %967 = vmatprep.mubr.bf16.mxu0 %v101
    %968 = vmatmul.mubr.bf16.gmra.mrb[0].mxu0 %v100
    %v969 = vpop.f32.mrb[0].mxu0
    %v970 = vadd.f32 %v927, %v969
    %v971 = vpop.f32.mrb[0].mxu0
    %v972 = vadd.f32 %v929, %v971
    %v973 = vpop.f32.mrb[0].mxu0
    %v974 = vadd.f32 %v931, %v973
    %v975 = vpop.f32.mrb[0].mxu0
    %v976 = vadd.f32 %v933, %v975
    %977 = vdwg.mxu0
    %978 = vmatprep.subr.bf16.mxu0 %v639
    %979 = vmatpush1.bf16.msra.mxu0 %v638
    %980 = vmatprep.subr.bf16.mxu0 %v643
    %981 = vmatpush1.bf16.msra.mxu0 %v642
    %982 = vmatprep.subr.bf16.mxu0 %v647
    %983 = vmatpush1.bf16.msra.mxu0 %v646
    %984 = vmatprep.subr.bf16.mxu0 %v651
    %985 = vmatpush1.bf16.msra.mxu0 %v650
    %986 = vmatprep.subr.bf16.mxu0 %v655
    %987 = vmatpush1.bf16.msra.mxu0 %v654
    %988 = vmatprep.subr.bf16.mxu0 %v659
    %989 = vmatpush1.bf16.msra.mxu0 %v658
    %990 = vmatprep.subr.bf16.mxu0 %v663
    %991 = vmatpush1.bf16.msra.mxu0 %v662
    %992 = vmatprep.subr.bf16.mxu0 %v667
    %993 = vmatpush1.bf16.msra.mxu0 %v666
    %994 = vmatprep.subr.bf16.mxu0 %v671
    %995 = vmatpush1.bf16.msra.mxu0 %v670
    %996 = vmatprep.subr.bf16.mxu0 %v675
    %997 = vmatpush1.bf16.msra.mxu0 %v674
    %998 = vmatprep.subr.bf16.mxu0 %v679
    %999 = vmatpush1.bf16.msra.mxu0 %v678
    %1000 = vmatprep.subr.bf16.mxu0 %v683
    %1001 = vmatpush1.bf16.msra.mxu0 %v682
    %1002 = vmatprep.subr.bf16.mxu0 %v687
    %1003 = vmatpush1.bf16.msra.mxu0 %v686
    %1004 = vmatprep.subr.bf16.mxu0 %v691
    %1005 = vmatpush1.bf16.msra.mxu0 %v690
    %1006 = vmatprep.subr.bf16.mxu0 %v695
    %1007 = vmatpush1.bf16.msra.mxu0 %v694
    %1008 = vmatprep.subr.bf16.mxu0 %v699
    %1009 = vmatpush1.bf16.msra.mxu0 %v698
    %1010 = vmatprep.mubr.bf16.mxu0 %v99
    %1011 = vmatmul.mubr.bf16.gmra.mrb[0].mxu0 %v98
    %v1012 = vpop.f32.mrb[0].mxu0
    %v1013 = vadd.f32 %v243, %v1012
    %v1014 = vpop.f32.mrb[0].mxu0
    %v1015 = vadd.f32 %v247, %v1014
    %v1016 = vpop.f32.mrb[0].mxu0
    %v1017 = vadd.f32 %v243, %v1016
    %v1018 = vpop.f32.mrb[0].mxu0
    %v1019 = vadd.f32 %v247, %v1018
    %1020 = vdwg.mxu0
    %1021 = vmatprep.subr.bf16.mxu0 %v703
    %1022 = vmatpush1.bf16.msra.mxu0 %v702
    %1023 = vmatprep.subr.bf16.mxu0 %v707
    %1024 = vmatpush1.bf16.msra.mxu0 %v706
    %1025 = vmatprep.subr.bf16.mxu0 %v711
    %1026 = vmatpush1.bf16.msra.mxu0 %v710
    %1027 = vmatprep.subr.bf16.mxu0 %v715
    %1028 = vmatpush1.bf16.msra.mxu0 %v714
    %1029 = vmatprep.subr.bf16.mxu0 %v719
    %1030 = vmatpush1.bf16.msra.mxu0 %v718
    %1031 = vmatprep.subr.bf16.mxu0 %v723
    %1032 = vmatpush1.bf16.msra.mxu0 %v722
    %1033 = vmatprep.subr.bf16.mxu0 %v727
    %1034 = vmatpush1.bf16.msra.mxu0 %v726
    %1035 = vmatprep.subr.bf16.mxu0 %v731
    %1036 = vmatpush1.bf16.msra.mxu0 %v730
    %1037 = vmatprep.subr.bf16.mxu0 %v735
    %1038 = vmatpush1.bf16.msra.mxu0 %v734
    %1039 = vmatprep.subr.bf16.mxu0 %v739
    %1040 = vmatpush1.bf16.msra.mxu0 %v738
    %1041 = vmatprep.subr.bf16.mxu0 %v743
    %1042 = vmatpush1.bf16.msra.mxu0 %v742
    %1043 = vmatprep.subr.bf16.mxu0 %v747
    %1044 = vmatpush1.bf16.msra.mxu0 %v746
    %1045 = vmatprep.subr.bf16.mxu0 %v751
    %1046 = vmatpush1.bf16.msra.mxu0 %v750
    %1047 = vmatprep.subr.bf16.mxu0 %v755
    %1048 = vmatpush1.bf16.msra.mxu0 %v754
    %1049 = vmatprep.subr.bf16.mxu0 %v759
    %1050 = vmatpush1.bf16.msra.mxu0 %v758
    %1051 = vmatprep.subr.bf16.mxu0 %v763
    %1052 = vmatpush1.bf16.msra.mxu0 %v762
    %1053 = vmatprep.mubr.bf16.mxu0 %v101
    %1054 = vmatmul.mubr.bf16.gmra.mrb[0].mxu0 %v100
    %v1055 = vpop.f32.mrb[0].mxu0
    %v1056 = vadd.f32 %v1013, %v1055
    %v1057 = vpop.f32.mrb[0].mxu0
    %v1058 = vadd.f32 %v1015, %v1057
    %v1059 = vpop.f32.mrb[0].mxu0
    %v1060 = vadd.f32 %v1017, %v1059
    %v1061 = vpop.f32.mrb[0].mxu0
    %v1062 = vadd.f32 %v1019, %v1061
    %1063 = vdwg.mxu0
    %v1064 = vpack.c.bf16 %v974, %v970
    %v1065 = vpack.c.bf16 %v976, %v972
    %v1066 = vpack.c.bf16 %v1060, %v1056
    %v1067 = vpack.c.bf16 %v1062, %v1058
    %v1068 = vmax.bf16 %v1064, 0
    %v1069 = vmax.bf16 %v1065, 0
    %v1070 = vmax.bf16 %v1066, 0
    %v1071 = vmax.bf16 %v1067, 0
    %v1072 = vld [vmem:[#allocation7] sm:$0xff]
    %v1073 = vld [vmem:[#allocation7 + $0x8] sm:$0xff]
    %v1074 = vld [vmem:[#allocation7 + $0x10] sm:$0xff]
    %v1075 = vld [vmem:[#allocation7 + $0x18] sm:$0xff]
    %v1076 = vld [vmem:[#allocation7 + $0x20] sm:$0xff]
    %v1077 = vld [vmem:[#allocation7 + $0x28] sm:$0xff]
    %v1078 = vld [vmem:[#allocation7 + $0x30] sm:$0xff]
    %v1079 = vld [vmem:[#allocation7 + $0x38] sm:$0xff]
    %v1080 = vld [vmem:[#allocation7 + $0x40] sm:$0xff]
    %v1081 = vld [vmem:[#allocation7 + $0x48] sm:$0xff]
    %v1082 = vld [vmem:[#allocation7 + $0x50] sm:$0xff]
    %v1083 = vld [vmem:[#allocation7 + $0x58] sm:$0xff]
    %v1084 = vld [vmem:[#allocation7 + $0x60] sm:$0xff]
    %v1085 = vld [vmem:[#allocation7 + $0x68] sm:$0xff]
    %v1086 = vld [vmem:[#allocation7 + $0x70] sm:$0xff]
    %v1087 = vld [vmem:[#allocation7 + $0x78] sm:$0xff]
    %v1088 = vld [vmem:[#allocation7 + $0x80] sm:$0xff]
    %v1089 = vld [vmem:[#allocation7 + $0x88] sm:$0xff]
    %v1090 = vld [vmem:[#allocation7 + $0x90] sm:$0xff]
    %v1091 = vld [vmem:[#allocation7 + $0x98] sm:$0xff]
    %v1092 = vld [vmem:[#allocation7 + $0xa0] sm:$0xff]
    %v1093 = vld [vmem:[#allocation7 + $0xa8] sm:$0xff]
    %v1094 = vld [vmem:[#allocation7 + $0xb0] sm:$0xff]
    %v1095 = vld [vmem:[#allocation7 + $0xb8] sm:$0xff]
    %v1096 = vld [vmem:[#allocation7 + $0xc0] sm:$0xff]
    %v1097 = vld [vmem:[#allocation7 + $0xc8] sm:$0xff]
    %v1098 = vld [vmem:[#allocation7 + $0xd0] sm:$0xff]
    %v1099 = vld [vmem:[#allocation7 + $0xd8] sm:$0xff]
    %v1100 = vld [vmem:[#allocation7 + $0xe0] sm:$0xff]
    %v1101 = vld [vmem:[#allocation7 + $0xe8] sm:$0xff]
    %v1102 = vld [vmem:[#allocation7 + $0xf0] sm:$0xff]
    %v1103 = vld [vmem:[#allocation7 + $0xf8] sm:$0xff]
    %v1104 = vld [vmem:[#allocation7 + $0x100] sm:$0xff]
    %v1105 = vld [vmem:[#allocation7 + $0x108] sm:$0xff]
    %v1106 = vld [vmem:[#allocation7 + $0x110] sm:$0xff]
    %v1107 = vld [vmem:[#allocation7 + $0x118] sm:$0xff]
    %v1108 = vld [vmem:[#allocation7 + $0x120] sm:$0xff]
    %v1109 = vld [vmem:[#allocation7 + $0x128] sm:$0xff]
    %v1110 = vld [vmem:[#allocation7 + $0x130] sm:$0xff]
    %v1111 = vld [vmem:[#allocation7 + $0x138] sm:$0xff]
    %v1112 = vld [vmem:[#allocation7 + $0x140] sm:$0xff]
    %v1113 = vld [vmem:[#allocation7 + $0x148] sm:$0xff]
    %v1114 = vld [vmem:[#allocation7 + $0x150] sm:$0xff]
    %v1115 = vld [vmem:[#allocation7 + $0x158] sm:$0xff]
    %v1116 = vld [vmem:[#allocation7 + $0x160] sm:$0xff]
    %v1117 = vld [vmem:[#allocation7 + $0x168] sm:$0xff]
    %v1118 = vld [vmem:[#allocation7 + $0x170] sm:$0xff]
    %v1119 = vld [vmem:[#allocation7 + $0x178] sm:$0xff]
    %v1120 = vld [vmem:[#allocation7 + $0x180] sm:$0xff]
    %v1121 = vld [vmem:[#allocation7 + $0x188] sm:$0xff]
    %v1122 = vld [vmem:[#allocation7 + $0x190] sm:$0xff]
    %v1123 = vld [vmem:[#allocation7 + $0x198] sm:$0xff]
    %v1124 = vld [vmem:[#allocation7 + $0x1a0] sm:$0xff]
    %v1125 = vld [vmem:[#allocation7 + $0x1a8] sm:$0xff]
    %v1126 = vld [vmem:[#allocation7 + $0x1b0] sm:$0xff]
    %v1127 = vld [vmem:[#allocation7 + $0x1b8] sm:$0xff]
    %v1128 = vld [vmem:[#allocation7 + $0x1c0] sm:$0xff]
    %v1129 = vld [vmem:[#allocation7 + $0x1c8] sm:$0xff]
    %v1130 = vld [vmem:[#allocation7 + $0x1d0] sm:$0xff]
    %v1131 = vld [vmem:[#allocation7 + $0x1d8] sm:$0xff]
    %v1132 = vld [vmem:[#allocation7 + $0x1e0] sm:$0xff]
    %v1133 = vld [vmem:[#allocation7 + $0x1e8] sm:$0xff]
    %v1134 = vld [vmem:[#allocation7 + $0x1f0] sm:$0xff]
    %v1135 = vld [vmem:[#allocation7 + $0x1f8] sm:$0xff]
    %v1136 = vld [vmem:[%s4] sm:$0x3]
    %v1138 = vlaneseq
    %v1139 = vshrl.u32 %v1138, 7
    %v1140 = vsub.s32 0, %v1139
    %v1141 = vrot.slane %v1136, %v1140
    %v1142 = vlaneseq
    %v1143 = vshrl.u32 %v1142, 7
    %v1144 = vsub.s32 1, %v1143
    %v1145 = vrot.slane %v1136, %v1144
    %v1212 = vunpack.c.l.b16 %v1072
    %v1213 = vunpack.c.h.b16 %v1072
    %v1214 = vunpack.c.l.b16 %v1073
    %v1215 = vunpack.c.h.b16 %v1073
    %v1216 = vunpack.c.l.b16 %v1074
    %v1217 = vunpack.c.h.b16 %v1074
    %v1218 = vunpack.c.l.b16 %v1075
    %v1219 = vunpack.c.h.b16 %v1075
    %v1220 = vunpack.c.l.b16 %v1076
    %v1221 = vunpack.c.h.b16 %v1076
    %v1222 = vunpack.c.l.b16 %v1077
    %v1223 = vunpack.c.h.b16 %v1077
    %v1224 = vunpack.c.l.b16 %v1078
    %v1225 = vunpack.c.h.b16 %v1078
    %v1226 = vunpack.c.l.b16 %v1079
    %v1227 = vunpack.c.h.b16 %v1079
    %v1228 = vunpack.c.l.b16 %v1080
    %v1229 = vunpack.c.h.b16 %v1080
    %v1230 = vunpack.c.l.b16 %v1081
    %v1231 = vunpack.c.h.b16 %v1081
    %v1232 = vunpack.c.l.b16 %v1082
    %v1233 = vunpack.c.h.b16 %v1082
    %v1234 = vunpack.c.l.b16 %v1083
    %v1235 = vunpack.c.h.b16 %v1083
    %v1236 = vunpack.c.l.b16 %v1084
    %v1237 = vunpack.c.h.b16 %v1084
    %v1238 = vunpack.c.l.b16 %v1085
    %v1239 = vunpack.c.h.b16 %v1085
    %v1240 = vunpack.c.l.b16 %v1086
    %v1241 = vunpack.c.h.b16 %v1086
    %v1242 = vunpack.c.l.b16 %v1087
    %v1243 = vunpack.c.h.b16 %v1087
    %v1244 = vunpack.c.l.b16 %v1088
    %v1245 = vunpack.c.h.b16 %v1088
    %v1246 = vunpack.c.l.b16 %v1089
    %v1247 = vunpack.c.h.b16 %v1089
    %v1248 = vunpack.c.l.b16 %v1090
    %v1249 = vunpack.c.h.b16 %v1090
    %v1250 = vunpack.c.l.b16 %v1091
    %v1251 = vunpack.c.h.b16 %v1091
    %v1252 = vunpack.c.l.b16 %v1092
    %v1253 = vunpack.c.h.b16 %v1092
    %v1254 = vunpack.c.l.b16 %v1093
    %v1255 = vunpack.c.h.b16 %v1093
    %v1256 = vunpack.c.l.b16 %v1094
    %v1257 = vunpack.c.h.b16 %v1094
    %v1258 = vunpack.c.l.b16 %v1095
    %v1259 = vunpack.c.h.b16 %v1095
    %v1260 = vunpack.c.l.b16 %v1096
    %v1261 = vunpack.c.h.b16 %v1096
    %v1262 = vunpack.c.l.b16 %v1097
    %v1263 = vunpack.c.h.b16 %v1097
    %v1264 = vunpack.c.l.b16 %v1098
    %v1265 = vunpack.c.h.b16 %v1098
    %v1266 = vunpack.c.l.b16 %v1099
    %v1267 = vunpack.c.h.b16 %v1099
    %v1268 = vunpack.c.l.b16 %v1100
    %v1269 = vunpack.c.h.b16 %v1100
    %v1270 = vunpack.c.l.b16 %v1101
    %v1271 = vunpack.c.h.b16 %v1101
    %v1272 = vunpack.c.l.b16 %v1102
    %v1273 = vunpack.c.h.b16 %v1102
    %v1274 = vunpack.c.l.b16 %v1103
    %v1275 = vunpack.c.h.b16 %v1103
    %v1276 = vunpack.c.l.b16 %v1104
    %v1277 = vunpack.c.h.b16 %v1104
    %v1278 = vunpack.c.l.b16 %v1105
    %v1279 = vunpack.c.h.b16 %v1105
    %v1280 = vunpack.c.l.b16 %v1106
    %v1281 = vunpack.c.h.b16 %v1106
    %v1282 = vunpack.c.l.b16 %v1107
    %v1283 = vunpack.c.h.b16 %v1107
    %v1284 = vunpack.c.l.b16 %v1108
    %v1285 = vunpack.c.h.b16 %v1108
    %v1286 = vunpack.c.l.b16 %v1109
    %v1287 = vunpack.c.h.b16 %v1109
    %v1288 = vunpack.c.l.b16 %v1110
    %v1289 = vunpack.c.h.b16 %v1110
    %v1290 = vunpack.c.l.b16 %v1111
    %v1291 = vunpack.c.h.b16 %v1111
    %v1292 = vunpack.c.l.b16 %v1112
    %v1293 = vunpack.c.h.b16 %v1112
    %v1294 = vunpack.c.l.b16 %v1113
    %v1295 = vunpack.c.h.b16 %v1113
    %v1296 = vunpack.c.l.b16 %v1114
    %v1297 = vunpack.c.h.b16 %v1114
    %v1298 = vunpack.c.l.b16 %v1115
    %v1299 = vunpack.c.h.b16 %v1115
    %v1300 = vunpack.c.l.b16 %v1116
    %v1301 = vunpack.c.h.b16 %v1116
    %v1302 = vunpack.c.l.b16 %v1117
    %v1303 = vunpack.c.h.b16 %v1117
    %v1304 = vunpack.c.l.b16 %v1118
    %v1305 = vunpack.c.h.b16 %v1118
    %v1306 = vunpack.c.l.b16 %v1119
    %v1307 = vunpack.c.h.b16 %v1119
    %v1308 = vunpack.c.l.b16 %v1120
    %v1309 = vunpack.c.h.b16 %v1120
    %v1310 = vunpack.c.l.b16 %v1121
    %v1311 = vunpack.c.h.b16 %v1121
    %v1312 = vunpack.c.l.b16 %v1122
    %v1313 = vunpack.c.h.b16 %v1122
    %v1314 = vunpack.c.l.b16 %v1123
    %v1315 = vunpack.c.h.b16 %v1123
    %v1316 = vunpack.c.l.b16 %v1124
    %v1317 = vunpack.c.h.b16 %v1124
    %v1318 = vunpack.c.l.b16 %v1125
    %v1319 = vunpack.c.h.b16 %v1125
    %v1320 = vunpack.c.l.b16 %v1126
    %v1321 = vunpack.c.h.b16 %v1126
    %v1322 = vunpack.c.l.b16 %v1127
    %v1323 = vunpack.c.h.b16 %v1127
    %v1324 = vunpack.c.l.b16 %v1128
    %v1325 = vunpack.c.h.b16 %v1128
    %v1326 = vunpack.c.l.b16 %v1129
    %v1327 = vunpack.c.h.b16 %v1129
    %v1328 = vunpack.c.l.b16 %v1130
    %v1329 = vunpack.c.h.b16 %v1130
    %v1330 = vunpack.c.l.b16 %v1131
    %v1331 = vunpack.c.h.b16 %v1131
    %v1332 = vunpack.c.l.b16 %v1132
    %v1333 = vunpack.c.h.b16 %v1132
    %v1334 = vunpack.c.l.b16 %v1133
    %v1335 = vunpack.c.h.b16 %v1133
    %v1336 = vunpack.c.l.b16 %v1134
    %v1337 = vunpack.c.h.b16 %v1134
    %v1338 = vunpack.c.l.b16 %v1135
    %v1339 = vunpack.c.h.b16 %v1135
    %v1340 = vpack.c.b16 %v1214, %v1212
    %v1341 = vpack.c.b16 %v1215, %v1213
    %v1342 = vpack.c.b16 %v1218, %v1216
    %v1343 = vpack.c.b16 %v1219, %v1217
    %v1344 = vpack.c.b16 %v1222, %v1220
    %v1345 = vpack.c.b16 %v1223, %v1221
    %v1346 = vpack.c.b16 %v1226, %v1224
    %v1347 = vpack.c.b16 %v1227, %v1225
    %v1348 = vpack.c.b16 %v1230, %v1228
    %v1349 = vpack.c.b16 %v1231, %v1229
    %v1350 = vpack.c.b16 %v1234, %v1232
    %v1351 = vpack.c.b16 %v1235, %v1233
    %v1352 = vpack.c.b16 %v1238, %v1236
    %v1353 = vpack.c.b16 %v1239, %v1237
    %v1354 = vpack.c.b16 %v1242, %v1240
    %v1355 = vpack.c.b16 %v1243, %v1241
    %v1356 = vpack.c.b16 %v1246, %v1244
    %v1357 = vpack.c.b16 %v1247, %v1245
    %v1358 = vpack.c.b16 %v1250, %v1248
    %v1359 = vpack.c.b16 %v1251, %v1249
    %v1360 = vpack.c.b16 %v1254, %v1252
    %v1361 = vpack.c.b16 %v1255, %v1253
    %v1362 = vpack.c.b16 %v1258, %v1256
    %v1363 = vpack.c.b16 %v1259, %v1257
    %v1364 = vpack.c.b16 %v1262, %v1260
    %v1365 = vpack.c.b16 %v1263, %v1261
    %v1366 = vpack.c.b16 %v1266, %v1264
    %v1367 = vpack.c.b16 %v1267, %v1265
    %v1368 = vpack.c.b16 %v1270, %v1268
    %v1369 = vpack.c.b16 %v1271, %v1269
    %v1370 = vpack.c.b16 %v1274, %v1272
    %v1371 = vpack.c.b16 %v1275, %v1273
    %v1372 = vpack.c.b16 %v1278, %v1276
    %v1373 = vpack.c.b16 %v1279, %v1277
    %v1374 = vpack.c.b16 %v1282, %v1280
    %v1375 = vpack.c.b16 %v1283, %v1281
    %v1376 = vpack.c.b16 %v1286, %v1284
    %v1377 = vpack.c.b16 %v1287, %v1285
    %v1378 = vpack.c.b16 %v1290, %v1288
    %v1379 = vpack.c.b16 %v1291, %v1289
    %v1380 = vpack.c.b16 %v1294, %v1292
    %v1381 = vpack.c.b16 %v1295, %v1293
    %v1382 = vpack.c.b16 %v1298, %v1296
    %v1383 = vpack.c.b16 %v1299, %v1297
    %v1384 = vpack.c.b16 %v1302, %v1300
    %v1385 = vpack.c.b16 %v1303, %v1301
    %v1386 = vpack.c.b16 %v1306, %v1304
    %v1387 = vpack.c.b16 %v1307, %v1305
    %v1388 = vpack.c.b16 %v1310, %v1308
    %v1389 = vpack.c.b16 %v1311, %v1309
    %v1390 = vpack.c.b16 %v1314, %v1312
    %v1391 = vpack.c.b16 %v1315, %v1313
    %v1392 = vpack.c.b16 %v1318, %v1316
    %v1393 = vpack.c.b16 %v1319, %v1317
    %v1394 = vpack.c.b16 %v1322, %v1320
    %v1395 = vpack.c.b16 %v1323, %v1321
    %v1396 = vpack.c.b16 %v1326, %v1324
    %v1397 = vpack.c.b16 %v1327, %v1325
    %v1398 = vpack.c.b16 %v1330, %v1328
    %v1399 = vpack.c.b16 %v1331, %v1329
    %v1400 = vpack.c.b16 %v1334, %v1332
    %v1401 = vpack.c.b16 %v1335, %v1333
    %v1402 = vpack.c.b16 %v1338, %v1336
    %v1403 = vpack.c.b16 %v1339, %v1337
    %1468 = vmatprep.subr.bf16.mxu0 %v1341
    %1469 = vmatpush1.bf16.msra.mxu0 %v1340
    %1470 = vmatprep.subr.bf16.mxu0 %v1343
    %1471 = vmatpush1.bf16.msra.mxu0 %v1342
    %1472 = vmatprep.subr.bf16.mxu0 %v1345
    %1473 = vmatpush1.bf16.msra.mxu0 %v1344
    %1474 = vmatprep.subr.bf16.mxu0 %v1347
    %1475 = vmatpush1.bf16.msra.mxu0 %v1346
    %1476 = vmatprep.subr.bf16.mxu0 %v1349
    %1477 = vmatpush1.bf16.msra.mxu0 %v1348
    %1478 = vmatprep.subr.bf16.mxu0 %v1351
    %1479 = vmatpush1.bf16.msra.mxu0 %v1350
    %1480 = vmatprep.subr.bf16.mxu0 %v1353
    %1481 = vmatpush1.bf16.msra.mxu0 %v1352
    %1482 = vmatprep.subr.bf16.mxu0 %v1355
    %1483 = vmatpush1.bf16.msra.mxu0 %v1354
    %1484 = vmatprep.subr.bf16.mxu0 %v1357
    %1485 = vmatpush1.bf16.msra.mxu0 %v1356
    %1486 = vmatprep.subr.bf16.mxu0 %v1359
    %1487 = vmatpush1.bf16.msra.mxu0 %v1358
    %1488 = vmatprep.subr.bf16.mxu0 %v1361
    %1489 = vmatpush1.bf16.msra.mxu0 %v1360
    %1490 = vmatprep.subr.bf16.mxu0 %v1363
    %1491 = vmatpush1.bf16.msra.mxu0 %v1362
    %1492 = vmatprep.subr.bf16.mxu0 %v1365
    %1493 = vmatpush1.bf16.msra.mxu0 %v1364
    %1494 = vmatprep.subr.bf16.mxu0 %v1367
    %1495 = vmatpush1.bf16.msra.mxu0 %v1366
    %1496 = vmatprep.subr.bf16.mxu0 %v1369
    %1497 = vmatpush1.bf16.msra.mxu0 %v1368
    %1498 = vmatprep.subr.bf16.mxu0 %v1371
    %1499 = vmatpush1.bf16.msra.mxu0 %v1370
    %1500 = vmatprep.mubr.bf16.mxu0 %v1069
    %1501 = vmatmul.mubr.bf16.gmra.mrb[0].mxu0 %v1068
    %v1502 = vpop.f32.mrb[0].mxu0
    %v1503 = vadd.f32 %v1141, %v1502
    %v1504 = vpop.f32.mrb[0].mxu0
    %v1505 = vadd.f32 %v1145, %v1504
    %v1506 = vpop.f32.mrb[0].mxu0
    %v1507 = vadd.f32 %v1141, %v1506
    %v1508 = vpop.f32.mrb[0].mxu0
    %v1509 = vadd.f32 %v1145, %v1508
    %1510 = vdwg.mxu0
    %1511 = vmatprep.subr.bf16.mxu0 %v1373
    %1512 = vmatpush1.bf16.msra.mxu0 %v1372
    %1513 = vmatprep.subr.bf16.mxu0 %v1375
    %1514 = vmatpush1.bf16.msra.mxu0 %v1374
    %1515 = vmatprep.subr.bf16.mxu0 %v1377
    %1516 = vmatpush1.bf16.msra.mxu0 %v1376
    %1517 = vmatprep.subr.bf16.mxu0 %v1379
    %1518 = vmatpush1.bf16.msra.mxu0 %v1378
    %1519 = vmatprep.subr.bf16.mxu0 %v1381
    %1520 = vmatpush1.bf16.msra.mxu0 %v1380
    %1521 = vmatprep.subr.bf16.mxu0 %v1383
    %1522 = vmatpush1.bf16.msra.mxu0 %v1382
    %1523 = vmatprep.subr.bf16.mxu0 %v1385
    %1524 = vmatpush1.bf16.msra.mxu0 %v1384
    %1525 = vmatprep.subr.bf16.mxu0 %v1387
    %1526 = vmatpush1.bf16.msra.mxu0 %v1386
    %1527 = vmatprep.subr.bf16.mxu0 %v1389
    %1528 = vmatpush1.bf16.msra.mxu0 %v1388
    %1529 = vmatprep.subr.bf16.mxu0 %v1391
    %1530 = vmatpush1.bf16.msra.mxu0 %v1390
    %1531 = vmatprep.subr.bf16.mxu0 %v1393
    %1532 = vmatpush1.bf16.msra.mxu0 %v1392
    %1533 = vmatprep.subr.bf16.mxu0 %v1395
    %1534 = vmatpush1.bf16.msra.mxu0 %v1394
    %1535 = vmatprep.subr.bf16.mxu0 %v1397
    %1536 = vmatpush1.bf16.msra.mxu0 %v1396
    %1537 = vmatprep.subr.bf16.mxu0 %v1399
    %1538 = vmatpush1.bf16.msra.mxu0 %v1398
    %1539 = vmatprep.subr.bf16.mxu0 %v1401
    %1540 = vmatpush1.bf16.msra.mxu0 %v1400
    %1541 = vmatprep.subr.bf16.mxu0 %v1403
    %1542 = vmatpush1.bf16.msra.mxu0 %v1402
    %1543 = vmatprep.mubr.bf16.mxu0 %v1071
    %1544 = vmatmul.mubr.bf16.gmra.mrb[0].mxu0 %v1070
    %v1545 = vpop.f32.mrb[0].mxu0
    %v1546 = vadd.f32 %v1503, %v1545
    %v1547 = vpop.f32.mrb[0].mxu0
    %v1548 = vadd.f32 %v1505, %v1547
    %v1549 = vpop.f32.mrb[0].mxu0
    %v1550 = vadd.f32 %v1507, %v1549
    %v1551 = vpop.f32.mrb[0].mxu0
    %v1552 = vadd.f32 %v1509, %v1551
    %1553 = vdwg.mxu0
    %v1554 = vpack.c.bf16 %v1550, %v1546
    %v1555 = vpack.c.bf16 %v1552, %v1548
    %v1556 = vmax.bf16 %v1554, 0
    %v1557 = vmax.bf16 %v1555, 0
    %v1558 = vld [vmem:[#allocation8] sm:$0xf]
    %v1559 = vld [vmem:[#allocation8 + $0x4] sm:$0xf]
    %v1560 = vld [vmem:[#allocation8 + $0x8] sm:$0xf]
    %v1561 = vld [vmem:[#allocation8 + $0xc] sm:$0xf]
    %v1562 = vld [vmem:[#allocation8 + $0x10] sm:$0xf]
    %v1563 = vld [vmem:[#allocation8 + $0x14] sm:$0xf]
    %v1564 = vld [vmem:[#allocation8 + $0x18] sm:$0xf]
    %v1565 = vld [vmem:[#allocation8 + $0x1c] sm:$0xf]
    %v1566 = vld [vmem:[#allocation8 + $0x20] sm:$0xf]
    %v1567 = vld [vmem:[#allocation8 + $0x24] sm:$0xf]
    %v1568 = vld [vmem:[#allocation8 + $0x28] sm:$0xf]
    %v1569 = vld [vmem:[#allocation8 + $0x2c] sm:$0xf]
    %v1570 = vld [vmem:[#allocation8 + $0x30] sm:$0xf]
    %v1571 = vld [vmem:[#allocation8 + $0x34] sm:$0xf]
    %v1572 = vld [vmem:[#allocation8 + $0x38] sm:$0xf]
    %v1573 = vld [vmem:[#allocation8 + $0x3c] sm:$0xf]
    %v1574 = vld [vmem:[#allocation8 + $0x40] sm:$0xf]
    %v1575 = vld [vmem:[#allocation8 + $0x44] sm:$0xf]
    %v1576 = vld [vmem:[#allocation8 + $0x48] sm:$0xf]
    %v1577 = vld [vmem:[#allocation8 + $0x4c] sm:$0xf]
    %v1578 = vld [vmem:[#allocation8 + $0x50] sm:$0xf]
    %v1579 = vld [vmem:[#allocation8 + $0x54] sm:$0xf]
    %v1580 = vld [vmem:[#allocation8 + $0x58] sm:$0xf]
    %v1581 = vld [vmem:[#allocation8 + $0x5c] sm:$0xf]
    %v1582 = vld [vmem:[#allocation8 + $0x60] sm:$0xf]
    %v1583 = vld [vmem:[#allocation8 + $0x64] sm:$0xf]
    %v1584 = vld [vmem:[#allocation8 + $0x68] sm:$0xf]
    %v1585 = vld [vmem:[#allocation8 + $0x6c] sm:$0xf]
    %v1586 = vld [vmem:[#allocation8 + $0x70] sm:$0xf]
    %v1587 = vld [vmem:[#allocation8 + $0x74] sm:$0xf]
    %v1588 = vld [vmem:[#allocation8 + $0x78] sm:$0xf]
    %v1589 = vld [vmem:[#allocation8 + $0x7c] sm:$0xf]
    %v1590 = vld [vmem:[%s6] sm:$0x1]
    %v1592 = vlaneseq
    %v1593 = vshrl.u32 %v1592, 7
    %v1594 = vsub.s32 0, %v1593
    %v1595 = vrot.slane %v1590, %v1594
    %v1629 = vunpack.c.l.b16 %v1558
    %v1630 = vunpack.c.l.b16 %v1559
    %v1631 = vunpack.c.l.b16 %v1560
    %v1632 = vunpack.c.l.b16 %v1561
    %v1633 = vunpack.c.l.b16 %v1562
    %v1634 = vunpack.c.l.b16 %v1563
    %v1635 = vunpack.c.l.b16 %v1564
    %v1636 = vunpack.c.l.b16 %v1565
    %v1637 = vunpack.c.l.b16 %v1566
    %v1638 = vunpack.c.l.b16 %v1567
    %v1639 = vunpack.c.l.b16 %v1568
    %v1640 = vunpack.c.l.b16 %v1569
    %v1641 = vunpack.c.l.b16 %v1570
    %v1642 = vunpack.c.l.b16 %v1571
    %v1643 = vunpack.c.l.b16 %v1572
    %v1644 = vunpack.c.l.b16 %v1573
    %v1645 = vunpack.c.l.b16 %v1574
    %v1646 = vunpack.c.l.b16 %v1575
    %v1647 = vunpack.c.l.b16 %v1576
    %v1648 = vunpack.c.l.b16 %v1577
    %v1649 = vunpack.c.l.b16 %v1578
    %v1650 = vunpack.c.l.b16 %v1579
    %v1651 = vunpack.c.l.b16 %v1580
    %v1652 = vunpack.c.l.b16 %v1581
    %v1653 = vunpack.c.l.b16 %v1582
    %v1654 = vunpack.c.l.b16 %v1583
    %v1655 = vunpack.c.l.b16 %v1584
    %v1656 = vunpack.c.l.b16 %v1585
    %v1657 = vunpack.c.l.b16 %v1586
    %v1658 = vunpack.c.l.b16 %v1587
    %v1659 = vunpack.c.l.b16 %v1588
    %v1660 = vunpack.c.l.b16 %v1589
    %v1661 = vpack.c.b16 %v1630, %v1629
    %v1662 = vpack.c.b16 %v1632, %v1631
    %v1663 = vpack.c.b16 %v1634, %v1633
    %v1664 = vpack.c.b16 %v1636, %v1635
    %v1665 = vpack.c.b16 %v1638, %v1637
    %v1666 = vpack.c.b16 %v1640, %v1639
    %v1667 = vpack.c.b16 %v1642, %v1641
    %v1668 = vpack.c.b16 %v1644, %v1643
    %v1669 = vpack.c.b16 %v1646, %v1645
    %v1670 = vpack.c.b16 %v1648, %v1647
    %v1671 = vpack.c.b16 %v1650, %v1649
    %v1672 = vpack.c.b16 %v1652, %v1651
    %v1673 = vpack.c.b16 %v1654, %v1653
    %v1674 = vpack.c.b16 %v1656, %v1655
    %v1675 = vpack.c.b16 %v1658, %v1657
    %v1676 = vpack.c.b16 %v1660, %v1659
    %1693 = vmatprep.subr.bf16.mxu0 0
    %1694 = vmatpush1.bf16.msra.mxu0 %v1661
    %1695 = vmatprep.subr.bf16.mxu0 0
    %1696 = vmatpush1.bf16.msra.mxu0 %v1662
    %1697 = vmatprep.subr.bf16.mxu0 0
    %1698 = vmatpush1.bf16.msra.mxu0 %v1663
    %1699 = vmatprep.subr.bf16.mxu0 0
    %1700 = vmatpush1.bf16.msra.mxu0 %v1664
    %1701 = vmatprep.subr.bf16.mxu0 0
    %1702 = vmatpush1.bf16.msra.mxu0 %v1665
    %1703 = vmatprep.subr.bf16.mxu0 0
    %1704 = vmatpush1.bf16.msra.mxu0 %v1666
    %1705 = vmatprep.subr.bf16.mxu0 0
    %1706 = vmatpush1.bf16.msra.mxu0 %v1667
    %1707 = vmatprep.subr.bf16.mxu0 0
    %1708 = vmatpush1.bf16.msra.mxu0 %v1668
    %1709 = vmatprep.subr.bf16.mxu0 0
    %1710 = vmatpush1.bf16.msra.mxu0 %v1669
    %1711 = vmatprep.subr.bf16.mxu0 0
    %1712 = vmatpush1.bf16.msra.mxu0 %v1670
    %1713 = vmatprep.subr.bf16.mxu0 0
    %1714 = vmatpush1.bf16.msra.mxu0 %v1671
    %1715 = vmatprep.subr.bf16.mxu0 0
    %1716 = vmatpush1.bf16.msra.mxu0 %v1672
    %1717 = vmatprep.subr.bf16.mxu0 0
    %1718 = vmatpush1.bf16.msra.mxu0 %v1673
    %1719 = vmatprep.subr.bf16.mxu0 0
    %1720 = vmatpush1.bf16.msra.mxu0 %v1674
    %1721 = vmatprep.subr.bf16.mxu0 0
    %1722 = vmatpush1.bf16.msra.mxu0 %v1675
    %1723 = vmatprep.subr.bf16.mxu0 0
    %1724 = vmatpush1.bf16.msra.mxu0 %v1676
    %1725 = vmatprep.mubr.bf16.mxu0 %v1557
    %1726 = vmatmul.mubr.bf16.gmra.mrb[0].mxu0 %v1556
    %v1727 = vpop.f32.mrb[0].mxu0
    %v1728 = vadd.f32 %v1595, %v1727
    %v1729 = vpop.f32.mrb[0].mxu0
    %v1730 = vpop.f32.mrb[0].mxu0
    %v1731 = vadd.f32 %v1595, %v1730
    %v1732 = vpop.f32.mrb[0].mxu0
    %1733 = vdwg.mxu0
    %v1734 = vpack.c.bf16 %v1731, %v1728
    %v1735 = vmax.bf16 %v1734, 0
    %v1736 = vunpack.c.l.bf16 %v1735
    %v1737 = vunpack.c.h.bf16 %v1735
    %v1738 = vld [vmem:[%s7] sm:$0x1]
    %v1740 = vlaneseq
    %v1741 = vshrl.u32 %v1740, 7
    %v1742 = vsub.s32 0, %v1741
    %v1743 = vrot.slane %v1738, %v1742
    %v1745 = vmul.f32 %v1736, %v1743
    %v1746 = vmul.f32 %v1737, %v1743
    %1747 = vadd.xlane.f32.xlu0 %v1745
    %v1748 = vpop.xlane.xlu0 %1747
    %1749 = vadd.xlane.f32.xlu0 %v1746
    %v1750 = vpop.xlane.xlu0 %1749
    %v1751 = vld [vmem:[#allocation2] sm:$0x1]
    %v1753 = vlaneseq
    %v1754 = vshrl.u32 %v1753, 7
    %v1755 = vsub.s32 0, %v1754
    %v1756 = vrot.slane %v1751, %v1755
    %v1758 = vadd.f32 %v1748, %v1756
    %v1759 = vadd.f32 %v1750, %v1756
    %v1760 = vxor.u32 %v1758, 2147483648
    %v1761 = vxor.u32 %v1759, 2147483648
    %v1762 = vmul.f32 %v1760, 1.442695
    %v1763 = vpow.pop %v1762
    %v1764 = vmul.f32 %v1761, 1.442695
    %v1765 = vpow.pop %v1764
    %v1766 = vadd.f32 %v1763, 1.0
    %v1767 = vadd.f32 %v1765, 1.0
    %v1768 = vrcp.pop %v1766
    %v1769 = vmul.f32 1.0, %v1768
    %v1770 = vrcp.pop %v1767
    %v1771 = vmul.f32 1.0, %v1770
    %vm1772 = vcmask 7168
    %1773 = vst.msk [vmem:[%s9] sm:$0xff] %vm1772, %v1769
    %1774 = vst.msk [vmem:[%s9 + $0x8] sm:$0xff] %vm1772, %v1771
    // Predicated region
    $region54: #{tpu_custom_call.1} parent=1 // pred_check
      _
    $region55: #{tpu_custom_call.1} parent=1 // pred_check_branch
      %1776 = sbr.rel (0) target = $region57
    $region56: #{tpu_custom_call.1} parent=1 // pred_region
      _
    $region57: #{tpu_custom_call.1} parent=1 // pred_fallthru
      _
    // Predicated region
    $region58: #{tpu_custom_call.1} parent=1 // pred_check
      _
    $region59: #{tpu_custom_call.1} parent=1 // pred_check_branch
      %1778 = sbr.rel (0) target = $region61
    $region60: #{tpu_custom_call.1} parent=1 // pred_region
      _
    $region61: #{tpu_custom_call.1} parent=1 // pred_fallthru
      _
    %1779 = vsyncpa [#allocation4], 1
    %1780 = vsyncpa [#allocation6], 1
    %1781 = vsyncpa [#allocation9], 1

// kernel: tpu_custom_call.1
$region0: #{tpu_custom_call.1}
  #allocation0 [shape = 'u32[]', space=smem, size = 0x4, offset = 0x4, fixed_abs, tag = 'smem constant byte address 0x4 - core index']
  #allocation1 [shape = 'u32[144,128]{1,0:T(1,128)}', space=vmem, size = 0x12000, scoped, tag = 'internal scratch']
  #allocation2 [shape = 'f32[1,1]{1,0:T(1,128)S(1)}', space=vmem, size = 0x200, scoped, tag = 'scoped memory for tpu_custom_call.1']
  %s0 = inlined_call_operand.hbm [shape: f32[16,512], index: 0, kind: input, shape index: {}]
  %s1 = inlined_call_operand.hbm [shape: bf16[512,512], index: 1, kind: input, shape index: {}]
  %s2 = inlined_call_operand.vmem [shape: f32[1,512], index: 2, kind: input, shape index: {}]
  %s3 = inlined_call_operand.hbm [shape: bf16[512,256], index: 3, kind: input, shape index: {}]
  %s4 = inlined_call_operand.vmem [shape: f32[1,256], index: 4, kind: input, shape index: {}]
  %s5 = inlined_call_operand.hbm [shape: bf16[256,128], index: 5, kind: input, shape index: {}]
  %s6 = inlined_call_operand.vmem [shape: f32[1,128], index: 6, kind: input, shape index: {}]
  %s7 = inlined_call_operand.vmem [shape: f32[1,128], index: 7, kind: input, shape index: {}]
  %s8 = inlined_call_operand.<no memory space> [shape: f32[1,1], index: 8, kind: input, shape index: {}]
  %s9 = inlined_call_operand.vmem [shape: f32[16,1], index: 9, kind: output, shape index: {}]
  %s10 = sld [smem:[#allocation0]]
  $region62: #{tpu_custom_call.1} parent=0
    _
  %s12 = ssub.s32 1, %s10
  %s13 = scalar_select 0, %s12, %s10
  %v14 = vstv %s8
  %15 = vst [vmem:[#allocation2] sm:$0x1] %v14
  $region1: #{tpu_custom_call.1} parent=0
    #allocation3 [shape = 'u8[32768]{0}', space=vmem, size = 0x8000, scoped, tag = 'input window, operand 0, single buffered']
    #allocation4 [shape = 's32[1]{0}', space=sflag, size = 0x4, scoped, tag = 'scoped memory for tpu_custom_call.1']
    #allocation5 [shape = 'u8[524288]{0}', space=vmem, size = 0x80000, scoped, tag = 'input window, operand 1, single buffered']
    #allocation6 [shape = 's32[1]{0}', space=sflag, size = 0x4, scoped, tag = 'scoped memory for tpu_custom_call.1']
    #allocation7 [shape = 'u8[262144]{0}', space=vmem, size = 0x40000, scoped, tag = 'input window, operand 3, single buffered']
    #allocation8 [shape = 'u8[65536]{0}', space=vmem, size = 0x10000, scoped, tag = 'input window, operand 5, single buffered']
    #allocation9 [shape = 's32[1]{0}', space=sflag, size = 0x4, scoped, tag = 'scoped memory for tpu_custom_call.1']
    %16 = vsyncpa [#allocation4], 0
    %17 = vsyncpa [#allocation6], 0
    %18 = vsyncpa [#allocation9], 0
    // Predicated region
    $region2: #{tpu_custom_call.1} parent=1 // pred_check
      _
    $region3: #{tpu_custom_call.1} parent=1 // pred_check_branch
      %20 = sbr.rel (0) target = $region5
    $region4: #{tpu_custom_call.1} parent=1 // pred_region
      %s22 = ssub.s32 1024, 1024
      %23 = vsyncadd [#allocation4], %s22
      %s24 = sshll.u32 [#allocation3], 4
      %s25 = int_to_ptr.vmem [resolvable:$true] %s24
      %30 = dma.hbm_to_vmem [thread:$0]  %s0, 1024, %s25, [#allocation4], 512, 512, 32
    $region5: #{tpu_custom_call.1} parent=1 // pred_fallthru
      _
    // Predicated region
    $region6: #{tpu_custom_call.1} parent=1 // pred_check
      _
    $region7: #{tpu_custom_call.1} parent=1 // pred_check_branch
      %32 = sbr.rel (0) target = $region9
    $region8: #{tpu_custom_call.1} parent=1 // pred_region
      %s34 = ssub.s32 16384, 16384
      %35 = vsyncadd [#allocation6], %s34
      %s36 = sshll.u32 [#allocation5], 4
      %s37 = int_to_ptr.vmem [resolvable:$true] %s36
      %42 = dma.hbm_to_vmem [thread:$0]  %s1, 16384, %s37, [#allocation6], 256, 256, 16
    $region9: #{tpu_custom_call.1} parent=1 // pred_fallthru
      _
    // Predicated region
    $region10: #{tpu_custom_call.1} parent=1 // pred_check
      _
    $region11: #{tpu_custom_call.1} parent=1 // pred_check_branch
      %44 = sbr.rel (0) target = $region13
    $region12: #{tpu_custom_call.1} parent=1 // pred_region
      _
    $region13: #{tpu_custom_call.1} parent=1 // pred_fallthru
      _
    // Predicated region
    $region14: #{tpu_custom_call.1} parent=1 // pred_check
      _
    $region15: #{tpu_custom_call.1} parent=1 // pred_check_branch
      %46 = sbr.rel (0) target = $region17
    $region16: #{tpu_custom_call.1} parent=1 // pred_region
      %s48 = ssub.s32 8192, 8192
      %49 = vsyncadd [#allocation6], %s48
      %s50 = sshll.u32 [#allocation7], 4
      %s51 = int_to_ptr.vmem [resolvable:$true] %s50
      %56 = dma.hbm_to_vmem [thread:$0]  %s3, 8192, %s51, [#allocation6], 128, 128, 8
    $region17: #{tpu_custom_call.1} parent=1 // pred_fallthru
      _
    // Predicated region
    $region18: #{tpu_custom_call.1} parent=1 // pred_check
      _
    $region19: #{tpu_custom_call.1} parent=1 // pred_check_branch
      %58 = sbr.rel (0) target = $region21
    $region20: #{tpu_custom_call.1} parent=1 // pred_region
      _
    $region21: #{tpu_custom_call.1} parent=1 // pred_fallthru
      _
    // Predicated region
    $region22: #{tpu_custom_call.1} parent=1 // pred_check
      _
    $region23: #{tpu_custom_call.1} parent=1 // pred_check_branch
      %60 = sbr.rel (0) target = $region25
    $region24: #{tpu_custom_call.1} parent=1 // pred_region
      %s62 = ssub.s32 2048, 2048
      %63 = vsyncadd [#allocation9], %s62
      %s64 = sshll.u32 [#allocation8], 4
      %s65 = int_to_ptr.vmem [resolvable:$true] %s64
      %70 = dma.hbm_to_vmem [thread:$0]  %s5, 2048, %s65, [#allocation9], 64, 64, 4
    $region25: #{tpu_custom_call.1} parent=1 // pred_fallthru
      _
    // Predicated region
    $region26: #{tpu_custom_call.1} parent=1 // pred_check
      _
    $region27: #{tpu_custom_call.1} parent=1 // pred_check_branch
      %72 = sbr.rel (0) target = $region29
    $region28: #{tpu_custom_call.1} parent=1 // pred_region
      _
    $region29: #{tpu_custom_call.1} parent=1 // pred_fallthru
      _
    // Predicated region
    $region30: #{tpu_custom_call.1} parent=1 // pred_check
      _
    $region31: #{tpu_custom_call.1} parent=1 // pred_check_branch
      %74 = sbr.rel (0) target = $region33
    $region32: #{tpu_custom_call.1} parent=1 // pred_region
      _
    $region33: #{tpu_custom_call.1} parent=1 // pred_fallthru
      _
    // Predicated region
    $region34: #{tpu_custom_call.1} parent=1 // pred_check
      _
    $region35: #{tpu_custom_call.1} parent=1 // pred_check_branch
      %76 = sbr.rel (0) target = $region37
    $region36: #{tpu_custom_call.1} parent=1 // pred_region
      _
    $region37: #{tpu_custom_call.1} parent=1 // pred_fallthru
      _
    // Predicated region
    $region38: #{tpu_custom_call.1} parent=1 // pred_check
      _
    $region39: #{tpu_custom_call.1} parent=1 // pred_check_branch
      %78 = sbr.rel (0) target = $region41
    $region40: #{tpu_custom_call.1} parent=1 // pred_region
      %79 = dma.done [#allocation4], 1024
    $region41: #{tpu_custom_call.1} parent=1 // pred_fallthru
      _
    // Predicated region
    $region42: #{tpu_custom_call.1} parent=1 // pred_check
      _
    $region43: #{tpu_custom_call.1} parent=1 // pred_check_branch
      %81 = sbr.rel (0) target = $region45
    $region44: #{tpu_custom_call.1} parent=1 // pred_region
      %82 = dma.done [#allocation6], 16384
    $region45: #{tpu_custom_call.1} parent=1 // pred_fallthru
      _
    // Predicated region
    $region46: #{tpu_custom_call.1} parent=1 // pred_check
      _
    $region47: #{tpu_custom_call.1} parent=1 // pred_check_branch
      %84 = sbr.rel (0) target = $region49
    $region48: #{tpu_custom_call.1} parent=1 // pred_region
      %85 = dma.done [#allocation6], 8192
    $region49: #{tpu_custom_call.1} parent=1 // pred_fallthru
      _
    // Predicated region
    $region50: #{tpu_custom_call.1} parent=1 // pred_check
      _
    $region51: #{tpu_custom_call.1} parent=1 // pred_check_branch
      %87 = sbr.rel (0) target = $region53
    $region52: #{tpu_custom_call.1} parent=1 // pred_region
      %88 = dma.done [#allocation9], 2048
    $region53: #{tpu_custom_call.1} parent=1 // pred_fallthru
      _
    %v90 = vld [vmem:[#allocation3] sm:$0xff]
    %v91 = vld [vmem:[#allocation3 + $0x8] sm:$0xff]
    %v92 = vld [vmem:[#allocation3 + $0x10] sm:$0xff]
    %v93 = vld [vmem:[#allocation3 + $0x18] sm:$0xff]
    %v94 = vld [vmem:[#allocation3 + $0x20] sm:$0xff]
    %v95 = vld [vmem:[#allocation3 + $0x28] sm:$0xff]
    %v96 = vld [vmem:[#allocation3 + $0x30] sm:$0xff]
    %v97 = vld [vmem:[#allocation3 + $0x38] sm:$0xff]
    %v98 = vpack.c.bf16 %v94, %v90
    %v99 = vpack.c.bf16 %v95, %v91
    %v100 = vpack.c.bf16 %v96, %v92
    %v101 = vpack.c.bf16 %v97, %v93
    %v102 = vld [vmem:[#allocation5] sm:$0xff]
    %v103 = vld [vmem:[#allocation5 + $0x8] sm:$0xff]
    %v104 = vld [vmem:[#allocation5 + $0x10] sm:$0xff]
    %v105 = vld [vmem:[#allocation5 + $0x18] sm:$0xff]
    %v106 = vld [vmem:[#allocation5 + $0x20] sm:$0xff]
    %v107 = vld [vmem:[#allocation5 + $0x28] sm:$0xff]
    %v108 = vld [vmem:[#allocation5 + $0x30] sm:$0xff]
    %v109 = vld [vmem:[#allocation5 + $0x38] sm:$0xff]
    %v110 = vld [vmem:[#allocation5 + $0x40] sm:$0xff]
    %v111 = vld [vmem:[#allocation5 + $0x48] sm:$0xff]
    %v112 = vld [vmem:[#allocation5 + $0x50] sm:$0xff]
    %v113 = vld [vmem:[#allocation5 + $0x58] sm:$0xff]
    %v114 = vld [vmem:[#allocation5 + $0x60] sm:$0xff]
    %v115 = vld [vmem:[#allocation5 + $0x68] sm:$0xff]
    %v116 = vld [vmem:[#allocation5 + $0x70] sm:$0xff]
    %v117 = vld [vmem:[#allocation5 + $0x78] sm:$0xff]
    %v118 = vld [vmem:[#allocation5 + $0x80] sm:$0xff]
    %v119 = vld [vmem:[#allocation5 + $0x88] sm:$0xff]
    %v120 = vld [vmem:[#allocation5 + $0x90] sm:$0xff]
    %v121 = vld [vmem:[#allocation5 + $0x98] sm:$0xff]
    %v122 = vld [vmem:[#allocation5 + $0xa0] sm:$0xff]
    %v123 = vld [vmem:[#allocation5 + $0xa8] sm:$0xff]
    %v124 = vld [vmem:[#allocation5 + $0xb0] sm:$0xff]
    %v125 = vld [vmem:[#allocation5 + $0xb8] sm:$0xff]
    %v126 = vld [vmem:[#allocation5 + $0xc0] sm:$0xff]
    %v127 = vld [vmem:[#allocation5 + $0xc8] sm:$0xff]
    %v128 = vld [vmem:[#allocation5 + $0xd0] sm:$0xff]
    %v129 = vld [vmem:[#allocation5 + $0xd8] sm:$0xff]
    %v130 = vld [vmem:[#allocation5 + $0xe0] sm:$0xff]
    %v131 = vld [vmem:[#allocation5 + $0xe8] sm:$0xff]
    %v132 = vld [vmem:[#allocation5 + $0xf0] sm:$0xff]
    %v133 = vld [vmem:[#allocation5 + $0xf8] sm:$0xff]
    %v134 = vld [vmem:[#allocation5 + $0x100] sm:$0xff]
    %v135 = vld [vmem:[#allocation5 + $0x108] sm:$0xff]
    %v136 = vld [vmem:[#allocation5 + $0x110] sm:$0xff]
    %v137 = vld [vmem:[#allocation5 + $0x118] sm:$0xff]
    %v138 = vld [vmem:[#allocation5 + $0x120] sm:$0xff]
    %v139 = vld [vmem:[#allocation5 + $0x128] sm:$0xff]
    %v140 = vld [vmem:[#allocation5 + $0x130] sm:$0xff]
    %v141 = vld [vmem:[#allocation5 + $0x138] sm:$0xff]
    %v142 = vld [vmem:[#allocation5 + $0x140] sm:$0xff]
    %v143 = vld [vmem:[#allocation5 + $0x148] sm:$0xff]
    %v144 = vld [vmem:[#allocation5 + $0x150] sm:$0xff]
    %v145 = vld [vmem:[#allocation5 + $0x158] sm:$0xff]
    %v146 = vld [vmem:[#allocation5 + $0x160] sm:$0xff]
    %v147 = vld [vmem:[#allocation5 + $0x168] sm:$0xff]
    %v148 = vld [vmem:[#allocation5 + $0x170] sm:$0xff]
    %v149 = vld [vmem:[#allocation5 + $0x178] sm:$0xff]
    %v150 = vld [vmem:[#allocation5 + $0x180] sm:$0xff]
    %v151 = vld [vmem:[#allocation5 + $0x188] sm:$0xff]
    %v152 = vld [vmem:[#allocation5 + $0x190] sm:$0xff]
    %v153 = vld [vmem:[#allocation5 + $0x198] sm:$0xff]
    %v154 = vld [vmem:[#allocation5 + $0x1a0] sm:$0xff]
    %v155 = vld [vmem:[#allocation5 + $0x1a8] sm:$0xff]
    %v156 = vld [vmem:[#allocation5 + $0x1b0] sm:$0xff]
    %v157 = vld [vmem:[#allocation5 + $0x1b8] sm:$0xff]
    %v158 = vld [vmem:[#allocation5 + $0x1c0] sm:$0xff]
    %v159 = vld [vmem:[#allocation5 + $0x1c8] sm:$0xff]
    %v160 = vld [vmem:[#allocation5 + $0x1d0] sm:$0xff]
    %v161 = vld [vmem:[#allocation5 + $0x1d8] sm:$0xff]
    %v162 = vld [vmem:[#allocation5 + $0x1e0] sm:$0xff]
    %v163 = vld [vmem:[#allocation5 + $0x1e8] sm:$0xff]
    %v164 = vld [vmem:[#allocation5 + $0x1f0] sm:$0xff]
    %v165 = vld [vmem:[#allocation5 + $0x1f8] sm:$0xff]
    %v166 = vld [vmem:[#allocation5 + $0x200] sm:$0xff]
    %v167 = vld [vmem:[#allocation5 + $0x208] sm:$0xff]
    %v168 = vld [vmem:[#allocation5 + $0x210] sm:$0xff]
    %v169 = vld [vmem:[#allocation5 + $0x218] sm:$0xff]
    %v170 = vld [vmem:[#allocation5 + $0x220] sm:$0xff]
    %v171 = vld [vmem:[#allocation5 + $0x228] sm:$0xff]
    %v172 = vld [vmem:[#allocation5 + $0x230] sm:$0xff]
    %v173 = vld [vmem:[#allocation5 + $0x238] sm:$0xff]
    %v174 = vld [vmem:[#allocation5 + $0x240] sm:$0xff]
    %v175 = vld [vmem:[#allocation5 + $0x248] sm:$0xff]
    %v176 = vld [vmem:[#allocation5 + $0x250] sm:$0xff]
    %v177 = vld [vmem:[#allocation5 + $0x258] sm:$0xff]
    %v178 = vld [vmem:[#allocation5 + $0x260] sm:$0xff]
    %v179 = vld [vmem:[#allocation5 + $0x268] sm:$0xff]
    %v180 = vld [vmem:[#allocation5 + $0x270] sm:$0xff]
    %v181 = vld [vmem:[#allocation5 + $0x278] sm:$0xff]
    %v182 = vld [vmem:[#allocation5 + $0x280] sm:$0xff]
    %v183 = vld [vmem:[#allocation5 + $0x288] sm:$0xff]
    %v184 = vld [vmem:[#allocation5 + $0x290] sm:$0xff]
    %v185 = vld [vmem:[#allocation5 + $0x298] sm:$0xff]
    %v186 = vld [vmem:[#allocation5 + $0x2a0] sm:$0xff]
    %v187 = vld [vmem:[#allocation5 + $0x2a8] sm:$0xff]
    %v188 = vld [vmem:[#allocation5 + $0x2b0] sm:$0xff]
    %v189 = vld [vmem:[#allocation5 + $0x2b8] sm:$0xff]
    %v190 = vld [vmem:[#allocation5 + $0x2c0] sm:$0xff]
    %v191 = vld [vmem:[#allocation5 + $0x2c8] sm:$0xff]
    %v192 = vld [vmem:[#allocation5 + $0x2d0] sm:$0xff]
    %v193 = vld [vmem:[#allocation5 + $0x2d8] sm:$0xff]
    %v194 = vld [vmem:[#allocation5 + $0x2e0] sm:$0xff]
    %v195 = vld [vmem:[#allocation5 + $0x2e8] sm:$0xff]
    %v196 = vld [vmem:[#allocation5 + $0x2f0] sm:$0xff]
    %v197 = vld [vmem:[#allocation5 + $0x2f8] sm:$0xff]
    %v198 = vld [vmem:[#allocation5 + $0x300] sm:$0xff]
    %v199 = vld [vmem:[#allocation5 + $0x308] sm:$0xff]
    %v200 = vld [vmem:[#allocation5 + $0x310] sm:$0xff]
    %v201 = vld [vmem:[#allocation5 + $0x318] sm:$0xff]
    %v202 = vld [vmem:[#allocation5 + $0x320] sm:$0xff]
    %v203 = vld [vmem:[#allocation5 + $0x328] sm:$0xff]
    %v204 = vld [vmem:[#allocation5 + $0x330] sm:$0xff]
    %v205 = vld [vmem:[#allocation5 + $0x338] sm:$0xff]
    %v206 = vld [vmem:[#allocation5 + $0x340] sm:$0xff]
    %v207 = vld [vmem:[#allocation5 + $0x348] sm:$0xff]
    %v208 = vld [vmem:[#allocation5 + $0x350] sm:$0xff]
    %v209 = vld [vmem:[#allocation5 + $0x358] sm:$0xff]
    %v210 = vld [vmem:[#allocation5 + $0x360] sm:$0xff]
    %v211 = vld [vmem:[#allocation5 + $0x368] sm:$0xff]
    %v212 = vld [vmem:[#allocation5 + $0x370] sm:$0xff]
    %v213 = vld [vmem:[#allocation5 + $0x378] sm:$0xff]
    %v214 = vld [vmem:[#allocation5 + $0x380] sm:$0xff]
    %v215 = vld [vmem:[#allocation5 + $0x388] sm:$0xff]
    %v216 = vld [vmem:[#allocation5 + $0x390] sm:$0xff]
    %v217 = vld [vmem:[#allocation5 + $0x398] sm:$0xff]
    %v218 = vld [vmem:[#allocation5 + $0x3a0] sm:$0xff]
    %v219 = vld [vmem:[#allocation5 + $0x3a8] sm:$0xff]
    %v220 = vld [vmem:[#allocation5 + $0x3b0] sm:$0xff]
    %v221 = vld [vmem:[#allocation5 + $0x3b8] sm:$0xff]
    %v222 = vld [vmem:[#allocation5 + $0x3c0] sm:$0xff]
    %v223 = vld [vmem:[#allocation5 + $0x3c8] sm:$0xff]
    %v224 = vld [vmem:[#allocation5 + $0x3d0] sm:$0xff]
    %v225 = vld [vmem:[#allocation5 + $0x3d8] sm:$0xff]
    %v226 = vld [vmem:[#allocation5 + $0x3e0] sm:$0xff]
    %v227 = vld [vmem:[#allocation5 + $0x3e8] sm:$0xff]
    %v228 = vld [vmem:[#allocation5 + $0x3f0] sm:$0xff]
    %v229 = vld [vmem:[#allocation5 + $0x3f8] sm:$0xff]
    %v230 = vld [vmem:[%s2] sm:$0xf]
    %v232 = vlaneseq
    %v233 = vshrl.u32 %v232, 7
    %v234 = vsub.s32 0, %v233
    %v235 = vrot.slane %v230, %v234
    %v236 = vlaneseq
    %v237 = vshrl.u32 %v236, 7
    %v238 = vsub.s32 1, %v237
    %v239 = vrot.slane %v230, %v238
    %v240 = vlaneseq
    %v241 = vshrl.u32 %v240, 7
    %v242 = vsub.s32 2, %v241
    %v243 = vrot.slane %v230, %v242
    %v244 = vlaneseq
    %v245 = vshrl.u32 %v244, 7
    %v246 = vsub.s32 3, %v245
    %v247 = vrot.slane %v230, %v246
    %v380 = vunpack.c.l.b16 %v102
    %v381 = vunpack.c.h.b16 %v102
    %v382 = vunpack.c.l.b16 %v103
    %v383 = vunpack.c.h.b16 %v103
    %v384 = vunpack.c.l.b16 %v104
    %v385 = vunpack.c.h.b16 %v104
    %v386 = vunpack.c.l.b16 %v105
    %v387 = vunpack.c.h.b16 %v105
    %v388 = vunpack.c.l.b16 %v106
    %v389 = vunpack.c.h.b16 %v106
    %v390 = vunpack.c.l.b16 %v107
    %v391 = vunpack.c.h.b16 %v107
    %v392 = vunpack.c.l.b16 %v108
    %v393 = vunpack.c.h.b16 %v108
    %v394 = vunpack.c.l.b16 %v109
    %v395 = vunpack.c.h.b16 %v109
    %v396 = vunpack.c.l.b16 %v110
    %v397 = vunpack.c.h.b16 %v110
    %v398 = vunpack.c.l.b16 %v111
    %v399 = vunpack.c.h.b16 %v111
    %v400 = vunpack.c.l.b16 %v112
    %v401 = vunpack.c.h.b16 %v112
    %v402 = vunpack.c.l.b16 %v113
    %v403 = vunpack.c.h.b16 %v113
    %v404 = vunpack.c.l.b16 %v114
    %v405 = vunpack.c.h.b16 %v114
    %v406 = vunpack.c.l.b16 %v115
    %v407 = vunpack.c.h.b16 %v115
    %v408 = vunpack.c.l.b16 %v116
    %v409 = vunpack.c.h.b16 %v116
    %v410 = vunpack.c.l.b16 %v117
    %v411 = vunpack.c.h.b16 %v117
    %v412 = vunpack.c.l.b16 %v118
    %v413 = vunpack.c.h.b16 %v118
    %v414 = vunpack.c.l.b16 %v119
    %v415 = vunpack.c.h.b16 %v119
    %v416 = vunpack.c.l.b16 %v120
    %v417 = vunpack.c.h.b16 %v120
    %v418 = vunpack.c.l.b16 %v121
    %v419 = vunpack.c.h.b16 %v121
    %v420 = vunpack.c.l.b16 %v122
    %v421 = vunpack.c.h.b16 %v122
    %v422 = vunpack.c.l.b16 %v123
    %v423 = vunpack.c.h.b16 %v123
    %v424 = vunpack.c.l.b16 %v124
    %v425 = vunpack.c.h.b16 %v124
    %v426 = vunpack.c.l.b16 %v125
    %v427 = vunpack.c.h.b16 %v125
    %v428 = vunpack.c.l.b16 %v126
    %v429 = vunpack.c.h.b16 %v126
    %v430 = vunpack.c.l.b16 %v127
    %v431 = vunpack.c.h.b16 %v127
    %v432 = vunpack.c.l.b16 %v128
    %v433 = vunpack.c.h.b16 %v128
    %v434 = vunpack.c.l.b16 %v129
    %v435 = vunpack.c.h.b16 %v129
    %v436 = vunpack.c.l.b16 %v130
    %v437 = vunpack.c.h.b16 %v130
    %v438 = vunpack.c.l.b16 %v131
    %v439 = vunpack.c.h.b16 %v131
    %v440 = vunpack.c.l.b16 %v132
    %v441 = vunpack.c.h.b16 %v132
    %v442 = vunpack.c.l.b16 %v133
    %v443 = vunpack.c.h.b16 %v133
    %v444 = vunpack.c.l.b16 %v134
    %v445 = vunpack.c.h.b16 %v134
    %v446 = vunpack.c.l.b16 %v135
    %v447 = vunpack.c.h.b16 %v135
    %v448 = vunpack.c.l.b16 %v136
    %v449 = vunpack.c.h.b16 %v136
    %v450 = vunpack.c.l.b16 %v137
    %v451 = vunpack.c.h.b16 %v137
    %v452 = vunpack.c.l.b16 %v138
    %v453 = vunpack.c.h.b16 %v138
    %v454 = vunpack.c.l.b16 %v139
    %v455 = vunpack.c.h.b16 %v139
    %v456 = vunpack.c.l.b16 %v140
    %v457 = vunpack.c.h.b16 %v140
    %v458 = vunpack.c.l.b16 %v141
    %v459 = vunpack.c.h.b16 %v141
    %v460 = vunpack.c.l.b16 %v142
    %v461 = vunpack.c.h.b16 %v142
    %v462 = vunpack.c.l.b16 %v143
    %v463 = vunpack.c.h.b16 %v143
    %v464 = vunpack.c.l.b16 %v144
    %v465 = vunpack.c.h.b16 %v144
    %v466 = vunpack.c.l.b16 %v145
    %v467 = vunpack.c.h.b16 %v145
    %v468 = vunpack.c.l.b16 %v146
    %v469 = vunpack.c.h.b16 %v146
    %v470 = vunpack.c.l.b16 %v147
    %v471 = vunpack.c.h.b16 %v147
    %v472 = vunpack.c.l.b16 %v148
    %v473 = vunpack.c.h.b16 %v148
    %v474 = vunpack.c.l.b16 %v149
    %v475 = vunpack.c.h.b16 %v149
    %v476 = vunpack.c.l.b16 %v150
    %v477 = vunpack.c.h.b16 %v150
    %v478 = vunpack.c.l.b16 %v151
    %v479 = vunpack.c.h.b16 %v151
    %v480 = vunpack.c.l.b16 %v152
    %v481 = vunpack.c.h.b16 %v152
    %v482 = vunpack.c.l.b16 %v153
    %v483 = vunpack.c.h.b16 %v153
    %v484 = vunpack.c.l.b16 %v154
    %v485 = vunpack.c.h.b16 %v154
    %v486 = vunpack.c.l.b16 %v155
    %v487 = vunpack.c.h.b16 %v155
    %v488 = vunpack.c.l.b16 %v156
    %v489 = vunpack.c.h.b16 %v156
    %v490 = vunpack.c.l.b16 %v157
    %v491 = vunpack.c.h.b16 %v157
    %v492 = vunpack.c.l.b16 %v158
    %v493 = vunpack.c.h.b16 %v158
    %v494 = vunpack.c.l.b16 %v159
    %v495 = vunpack.c.h.b16 %v159
    %v496 = vunpack.c.l.b16 %v160
    %v497 = vunpack.c.h.b16 %v160
    %v498 = vunpack.c.l.b16 %v161
    %v499 = vunpack.c.h.b16 %v161
    %v500 = vunpack.c.l.b16 %v162
    %v501 = vunpack.c.h.b16 %v162
    %v502 = vunpack.c.l.b16 %v163
    %v503 = vunpack.c.h.b16 %v163
    %v504 = vunpack.c.l.b16 %v164
    %v505 = vunpack.c.h.b16 %v164
    %v506 = vunpack.c.l.b16 %v165
    %v507 = vunpack.c.h.b16 %v165
    %v508 = vunpack.c.l.b16 %v166
    %v509 = vunpack.c.h.b16 %v166
    %v510 = vunpack.c.l.b16 %v167
    %v511 = vunpack.c.h.b16 %v167
    %v512 = vunpack.c.l.b16 %v168
    %v513 = vunpack.c.h.b16 %v168
    %v514 = vunpack.c.l.b16 %v169
    %v515 = vunpack.c.h.b16 %v169
    %v516 = vunpack.c.l.b16 %v170
    %v517 = vunpack.c.h.b16 %v170
    %v518 = vunpack.c.l.b16 %v171
    %v519 = vunpack.c.h.b16 %v171
    %v520 = vunpack.c.l.b16 %v172
    %v521 = vunpack.c.h.b16 %v172
    %v522 = vunpack.c.l.b16 %v173
    %v523 = vunpack.c.h.b16 %v173
    %v524 = vunpack.c.l.b16 %v174
    %v525 = vunpack.c.h.b16 %v174
    %v526 = vunpack.c.l.b16 %v175
    %v527 = vunpack.c.h.b16 %v175
    %v528 = vunpack.c.l.b16 %v176
    %v529 = vunpack.c.h.b16 %v176
    %v530 = vunpack.c.l.b16 %v177
    %v531 = vunpack.c.h.b16 %v177
    %v532 = vunpack.c.l.b16 %v178
    %v533 = vunpack.c.h.b16 %v178
    %v534 = vunpack.c.l.b16 %v179
    %v535 = vunpack.c.h.b16 %v179
    %v536 = vunpack.c.l.b16 %v180
    %v537 = vunpack.c.h.b16 %v180
    %v538 = vunpack.c.l.b16 %v181
    %v539 = vunpack.c.h.b16 %v181
    %v540 = vunpack.c.l.b16 %v182
    %v541 = vunpack.c.h.b16 %v182
    %v542 = vunpack.c.l.b16 %v183
    %v543 = vunpack.c.h.b16 %v183
    %v544 = vunpack.c.l.b16 %v184
    %v545 = vunpack.c.h.b16 %v184
    %v546 = vunpack.c.l.b16 %v185
    %v547 = vunpack.c.h.b16 %v185
    %v548 = vunpack.c.l.b16 %v186
    %v549 = vunpack.c.h.b16 %v186
    %v550 = vunpack.c.l.b16 %v187
    %v551 = vunpack.c.h.b16 %v187
    %v552 = vunpack.c.l.b16 %v188
    %v553 = vunpack.c.h.b16 %v188
    %v554 = vunpack.c.l.b16 %v189
    %v555 = vunpack.c.h.b16 %v189
    %v556 = vunpack.c.l.b16 %v190
    %v557 = vunpack.c.h.b16 %v190
    %v558 = vunpack.c.l.b16 %v191
    %v559 = vunpack.c.h.b16 %v191
    %v560 = vunpack.c.l.b16 %v192
    %v561 = vunpack.c.h.b16 %v192
    %v562 = vunpack.c.l.b16 %v193
    %v563 = vunpack.c.h.b16 %v193
    %v564 = vunpack.c.l.b16 %v194
    %v565 = vunpack.c.h.b16 %v194
    %v566 = vunpack.c.l.b16 %v195
    %v567 = vunpack.c.h.b16 %v195
    %v568 = vunpack.c.l.b16 %v196
    %v569 = vunpack.c.h.b16 %v196
    %v570 = vunpack.c.l.b16 %v197
    %v571 = vunpack.c.h.b16 %v197
    %v572 = vunpack.c.l.b16 %v198
    %v573 = vunpack.c.h.b16 %v198
    %v574 = vunpack.c.l.b16 %v199
    %v575 = vunpack.c.h.b16 %v199
    %v576 = vunpack.c.l.b16 %v200
    %v577 = vunpack.c.h.b16 %v200
    %v578 = vunpack.c.l.b16 %v201
    %v579 = vunpack.c.h.b16 %v201
    %v580 = vunpack.c.l.b16 %v202
    %v581 = vunpack.c.h.b16 %v202
    %v582 = vunpack.c.l.b16 %v203
    %v583 = vunpack.c.h.b16 %v203
    %v584 = vunpack.c.l.b16 %v204
    %v585 = vunpack.c.h.b16 %v204
    %v586 = vunpack.c.l.b16 %v205
    %v587 = vunpack.c.h.b16 %v205
    %v588 = vunpack.c.l.b16 %v206
    %v589 = vunpack.c.h.b16 %v206
    %v590 = vunpack.c.l.b16 %v207
    %v591 = vunpack.c.h.b16 %v207
    %v592 = vunpack.c.l.b16 %v208
    %v593 = vunpack.c.h.b16 %v208
    %v594 = vunpack.c.l.b16 %v209
    %v595 = vunpack.c.h.b16 %v209
    %v596 = vunpack.c.l.b16 %v210
    %v597 = vunpack.c.h.b16 %v210
    %v598 = vunpack.c.l.b16 %v211
    %v599 = vunpack.c.h.b16 %v211
    %v600 = vunpack.c.l.b16 %v212
    %v601 = vunpack.c.h.b16 %v212
    %v602 = vunpack.c.l.b16 %v213
    %v603 = vunpack.c.h.b16 %v213
    %v604 = vunpack.c.l.b16 %v214
    %v605 = vunpack.c.h.b16 %v214
    %v606 = vunpack.c.l.b16 %v215
    %v607 = vunpack.c.h.b16 %v215
    %v608 = vunpack.c.l.b16 %v216
    %v609 = vunpack.c.h.b16 %v216
    %v610 = vunpack.c.l.b16 %v217
    %v611 = vunpack.c.h.b16 %v217
    %v612 = vunpack.c.l.b16 %v218
    %v613 = vunpack.c.h.b16 %v218
    %v614 = vunpack.c.l.b16 %v219
    %v615 = vunpack.c.h.b16 %v219
    %v616 = vunpack.c.l.b16 %v220
    %v617 = vunpack.c.h.b16 %v220
    %v618 = vunpack.c.l.b16 %v221
    %v619 = vunpack.c.h.b16 %v221
    %v620 = vunpack.c.l.b16 %v222
    %v621 = vunpack.c.h.b16 %v222
    %v622 = vunpack.c.l.b16 %v223
    %v623 = vunpack.c.h.b16 %v223
    %v624 = vunpack.c.l.b16 %v224
    %v625 = vunpack.c.h.b16 %v224
    %v626 = vunpack.c.l.b16 %v225
    %v627 = vunpack.c.h.b16 %v225
    %v628 = vunpack.c.l.b16 %v226
    %v629 = vunpack.c.h.b16 %v226
    %v630 = vunpack.c.l.b16 %v227
    %v631 = vunpack.c.h.b16 %v227
    %v632 = vunpack.c.l.b16 %v228
    %v633 = vunpack.c.h.b16 %v228
    %v634 = vunpack.c.l.b16 %v229
    %v635 = vunpack.c.h.b16 %v229
    %v636 = vpack.c.b16 %v384, %v380
    %v637 = vpack.c.b16 %v385, %v381
    %v638 = vpack.c.b16 %v386, %v382
    %v639 = vpack.c.b16 %v387, %v383
    %v640 = vpack.c.b16 %v392, %v388
    %v641 = vpack.c.b16 %v393, %v389
    %v642 = vpack.c.b16 %v394, %v390
    %v643 = vpack.c.b16 %v395, %v391
    %v644 = vpack.c.b16 %v400, %v396
    %v645 = vpack.c.b16 %v401, %v397
    %v646 = vpack.c.b16 %v402, %v398
    %v647 = vpack.c.b16 %v403, %v399
    %v648 = vpack.c.b16 %v408, %v404
    %v649 = vpack.c.b16 %v409, %v405
    %v650 = vpack.c.b16 %v410, %v406
    %v651 = vpack.c.b16 %v411, %v407
    %v652 = vpack.c.b16 %v416, %v412
    %v653 = vpack.c.b16 %v417, %v413
    %v654 = vpack.c.b16 %v418, %v414
    %v655 = vpack.c.b16 %v419, %v415
    %v656 = vpack.c.b16 %v424, %v420
    %v657 = vpack.c.b16 %v425, %v421
    %v658 = vpack.c.b16 %v426, %v422
    %v659 = vpack.c.b16 %v427, %v423
    %v660 = vpack.c.b16 %v432, %v428
    %v661 = vpack.c.b16 %v433, %v429
    %v662 = vpack.c.b16 %v434, %v430
    %v663 = vpack.c.b16 %v435, %v431
    %v664 = vpack.c.b16 %v440, %v436
    %v665 = vpack.c.b16 %v441, %v437
    %v666 = vpack.c.b16 %v442, %v438
    %v667 = vpack.c.b16 %v443, %v439
    %v668 = vpack.c.b16 %v448, %v444
    %v669 = vpack.c.b16 %v449, %v445
    %v670 = vpack.c.b16 %v450, %v446
    %v671 = vpack.c.b16 %v451, %v447
    %v672 = vpack.c.b16 %v456, %v452
    %v673 = vpack.c.b16 %v457, %v453
    %v674 = vpack.c.b16 %v458, %v454
    %v675 = vpack.c.b16 %v459, %v455
    %v676 = vpack.c.b16 %v464, %v460
    %v677 = vpack.c.b16 %v465, %v461
    %v678 = vpack.c.b16 %v466, %v462
    %v679 = vpack.c.b16 %v467, %v463
    %v680 = vpack.c.b16 %v472, %v468
    %v681 = vpack.c.b16 %v473, %v469
    %v682 = vpack.c.b16 %v474, %v470
    %v683 = vpack.c.b16 %v475, %v471
    %v684 = vpack.c.b16 %v480, %v476
    %v685 = vpack.c.b16 %v481, %v477
    %v686 = vpack.c.b16 %v482, %v478
    %v687 = vpack.c.b16 %v483, %v479
    %v688 = vpack.c.b16 %v488, %v484
    %v689 = vpack.c.b16 %v489, %v485
    %v690 = vpack.c.b16 %v490, %v486
    %v691 = vpack.c.b16 %v491, %v487
    %v692 = vpack.c.b16 %v496, %v492
    %v693 = vpack.c.b16 %v497, %v493
    %v694 = vpack.c.b16 %v498, %v494
    %v695 = vpack.c.b16 %v499, %v495
    %v696 = vpack.c.b16 %v504, %v500
    %v697 = vpack.c.b16 %v505, %v501
    %v698 = vpack.c.b16 %v506, %v502
    %v699 = vpack.c.b16 %v507, %v503
    %v700 = vpack.c.b16 %v512, %v508
    %v701 = vpack.c.b16 %v513, %v509
    %v702 = vpack.c.b16 %v514, %v510
    %v703 = vpack.c.b16 %v515, %v511
    %v704 = vpack.c.b16 %v520, %v516
    %v705 = vpack.c.b16 %v521, %v517
    %v706 = vpack.c.b16 %v522, %v518
    %v707 = vpack.c.b16 %v523, %v519
    %v708 = vpack.c.b16 %v528, %v524
    %v709 = vpack.c.b16 %v529, %v525
    %v710 = vpack.c.b16 %v530, %v526
    %v711 = vpack.c.b16 %v531, %v527
    %v712 = vpack.c.b16 %v536, %v532
    %v713 = vpack.c.b16 %v537, %v533
    %v714 = vpack.c.b16 %v538, %v534
    %v715 = vpack.c.b16 %v539, %v535
    %v716 = vpack.c.b16 %v544, %v540
    %v717 = vpack.c.b16 %v545, %v541
    %v718 = vpack.c.b16 %v546, %v542
    %v719 = vpack.c.b16 %v547, %v543
    %v720 = vpack.c.b16 %v552, %v548
    %v721 = vpack.c.b16 %v553, %v549
    %v722 = vpack.c.b16 %v554, %v550
    %v723 = vpack.c.b16 %v555, %v551
    %v724 = vpack.c.b16 %v560, %v556
    %v725 = vpack.c.b16 %v561, %v557
    %v726 = vpack.c.b16 %v562, %v558
    %v727 = vpack.c.b16 %v563, %v559
    %v728 = vpack.c.b16 %v568, %v564
    %v729 = vpack.c.b16 %v569, %v565
    %v730 = vpack.c.b16 %v570, %v566
    %v731 = vpack.c.b16 %v571, %v567
    %v732 = vpack.c.b16 %v576, %v572
    %v733 = vpack.c.b16 %v577, %v573
    %v734 = vpack.c.b16 %v578, %v574
    %v735 = vpack.c.b16 %v579, %v575
    %v736 = vpack.c.b16 %v584, %v580
    %v737 = vpack.c.b16 %v585, %v581
    %v738 = vpack.c.b16 %v586, %v582
    %v739 = vpack.c.b16 %v587, %v583
    %v740 = vpack.c.b16 %v592, %v588
    %v741 = vpack.c.b16 %v593, %v589
    %v742 = vpack.c.b16 %v594, %v590
    %v743 = vpack.c.b16 %v595, %v591
    %v744 = vpack.c.b16 %v600, %v596
    %v745 = vpack.c.b16 %v601, %v597
    %v746 = vpack.c.b16 %v602, %v598
    %v747 = vpack.c.b16 %v603, %v599
    %v748 = vpack.c.b16 %v608, %v604
    %v749 = vpack.c.b16 %v609, %v605
    %v750 = vpack.c.b16 %v610, %v606
    %v751 = vpack.c.b16 %v611, %v607
    %v752 = vpack.c.b16 %v616, %v612
    %v753 = vpack.c.b16 %v617, %v613
    %v754 = vpack.c.b16 %v618, %v614
    %v755 = vpack.c.b16 %v619, %v615
    %v756 = vpack.c.b16 %v624, %v620
    %v757 = vpack.c.b16 %v625, %v621
    %v758 = vpack.c.b16 %v626, %v622
    %v759 = vpack.c.b16 %v627, %v623
    %v760 = vpack.c.b16 %v632, %v628
    %v761 = vpack.c.b16 %v633, %v629
    %v762 = vpack.c.b16 %v634, %v630
    %v763 = vpack.c.b16 %v635, %v631
    %892 = vmatprep.subr.bf16.mxu0 %v637
    %893 = vmatpush1.bf16.msra.mxu0 %v636
    %894 = vmatprep.subr.bf16.mxu0 %v641
    %895 = vmatpush1.bf16.msra.mxu0 %v640
    %896 = vmatprep.subr.bf16.mxu0 %v645
    %897 = vmatpush1.bf16.msra.mxu0 %v644
    %898 = vmatprep.subr.bf16.mxu0 %v649
    %899 = vmatpush1.bf16.msra.mxu0 %v648
    %900 = vmatprep.subr.bf16.mxu0 %v653
    %901 = vmatpush1.bf16.msra.mxu0 %v652
    %902 = vmatprep.subr.bf16.mxu0 %v657
    %903 = vmatpush1.bf16.msra.mxu0 %v656
    %904 = vmatprep.subr.bf16.mxu0 %v661
    %905 = vmatpush1.bf16.msra.mxu0 %v660
    %906 = vmatprep.subr.bf16.mxu0 %v665
    %907 = vmatpush1.bf16.msra.mxu0 %v664
    %908 = vmatprep.subr.bf16.mxu0 %v669
    %909 = vmatpush1.bf16.msra.mxu0 %v668
    %910 = vmatprep.subr.bf16.mxu0 %v673
    %911 = vmatpush1.bf16.msra.mxu0 %v672
    %912 = vmatprep.subr.bf16.mxu0 %v677
    %913 = vmatpush1.bf16.msra.mxu0 %v676
    %914 = vmatprep.subr.bf16.mxu0 %v681
    %915 = vmatpush1.bf16.msra.mxu0 %v680
    %916 = vmatprep.subr.bf16.mxu0 %v685
    %917 = vmatpush1.bf16.msra.mxu0 %v684
    %918 = vmatprep.subr.bf16.mxu0 %v689
    %919 = vmatpush1.bf16.msra.mxu0 %v688
    %920 = vmatprep.subr.bf16.mxu0 %v693
    %921 = vmatpush1.bf16.msra.mxu0 %v692
    %922 = vmatprep.subr.bf16.mxu0 %v697
    %923 = vmatpush1.bf16.msra.mxu0 %v696
    %924 = vmatprep.mubr.bf16.mxu0 %v99
    %925 = vmatmul.mubr.bf16.gmra.mrb[0].mxu0 %v98
    %v926 = vpop.f32.mrb[0].mxu0
    %v927 = vadd.f32 %v235, %v926
    %v928 = vpop.f32.mrb[0].mxu0
    %v929 = vadd.f32 %v239, %v928
    %v930 = vpop.f32.mrb[0].mxu0
    %v931 = vadd.f32 %v235, %v930
    %v932 = vpop.f32.mrb[0].mxu0
    %v933 = vadd.f32 %v239, %v932
    %934 = vdwg.mxu0
    %935 = vmatprep.subr.bf16.mxu0 %v701
    %936 = vmatpush1.bf16.msra.mxu0 %v700
    %937 = vmatprep.subr.bf16.mxu0 %v705
    %938 = vmatpush1.bf16.msra.mxu0 %v704
    %939 = vmatprep.subr.bf16.mxu0 %v709
    %940 = vmatpush1.bf16.msra.mxu0 %v708
    %941 = vmatprep.subr.bf16.mxu0 %v713
    %942 = vmatpush1.bf16.msra.mxu0 %v712
    %943 = vmatprep.subr.bf16.mxu0 %v717
    %944 = vmatpush1.bf16.msra.mxu0 %v716
    %945 = vmatprep.subr.bf16.mxu0 %v721
    %946 = vmatpush1.bf16.msra.mxu0 %v720
    %947 = vmatprep.subr.bf16.mxu0 %v725
    %948 = vmatpush1.bf16.msra.mxu0 %v724
    %949 = vmatprep.subr.bf16.mxu0 %v729
    %950 = vmatpush1.bf16.msra.mxu0 %v728
    %951 = vmatprep.subr.bf16.mxu0 %v733
    %952 = vmatpush1.bf16.msra.mxu0 %v732
    %953 = vmatprep.subr.bf16.mxu0 %v737
    %954 = vmatpush1.bf16.msra.mxu0 %v736
    %955 = vmatprep.subr.bf16.mxu0 %v741
    %956 = vmatpush1.bf16.msra.mxu0 %v740
    %957 = vmatprep.subr.bf16.mxu0 %v745
    %958 = vmatpush1.bf16.msra.mxu0 %v744
    %959 = vmatprep.subr.bf16.mxu0 %v749
    %960 = vmatpush1.bf16.msra.mxu0 %v748
    %961 = vmatprep.subr.bf16.mxu0 %v753
    %962 = vmatpush1.bf16.msra.mxu0 %v752
    %963 = vmatprep.subr.bf16.mxu0 %v757
    %964 = vmatpush1.bf16.msra.mxu0 %v756
    %965 = vmatprep.subr.bf16.mxu0 %v761
    %966 = vmatpush1.bf16.msra.mxu0 %v760
    %967 = vmatprep.mubr.bf16.mxu0 %v101
    %968 = vmatmul.mubr.bf16.gmra.mrb[0].mxu0 %v100
    %v969 = vpop.f32.mrb[0].mxu0
    %v970 = vadd.f32 %v927, %v969
    %v971 = vpop.f32.mrb[0].mxu0
    %v972 = vadd.f32 %v929, %v971
    %v973 = vpop.f32.mrb[0].mxu0
    %v974 = vadd.f32 %v931, %v973
    %v975 = vpop.f32.mrb[0].mxu0
    %v976 = vadd.f32 %v933, %v975
    %977 = vdwg.mxu0
    %978 = vmatprep.subr.bf16.mxu0 %v639
    %979 = vmatpush1.bf16.msra.mxu0 %v638
    %980 = vmatprep.subr.bf16.mxu0 %v643
    %981 = vmatpush1.bf16.msra.mxu0 %v642
    %982 = vmatprep.subr.bf16.mxu0 %v647
    %983 = vmatpush1.bf16.msra.mxu0 %v646
    %984 = vmatprep.subr.bf16.mxu0 %v651
    %985 = vmatpush1.bf16.msra.mxu0 %v650
    %986 = vmatprep.subr.bf16.mxu0 %v655
    %987 = vmatpush1.bf16.msra.mxu0 %v654
    %988 = vmatprep.subr.bf16.mxu0 %v659
    %989 = vmatpush1.bf16.msra.mxu0 %v658
    %990 = vmatprep.subr.bf16.mxu0 %v663
    %991 = vmatpush1.bf16.msra.mxu0 %v662
    %992 = vmatprep.subr.bf16.mxu0 %v667
    %993 = vmatpush1.bf16.msra.mxu0 %v666
    %994 = vmatprep.subr.bf16.mxu0 %v671
    %995 = vmatpush1.bf16.msra.mxu0 %v670
    %996 = vmatprep.subr.bf16.mxu0 %v675
    %997 = vmatpush1.bf16.msra.mxu0 %v674
    %998 = vmatprep.subr.bf16.mxu0 %v679
    %999 = vmatpush1.bf16.msra.mxu0 %v678
    %1000 = vmatprep.subr.bf16.mxu0 %v683
    %1001 = vmatpush1.bf16.msra.mxu0 %v682
    %1002 = vmatprep.subr.bf16.mxu0 %v687
    %1003 = vmatpush1.bf16.msra.mxu0 %v686
    %1004 = vmatprep.subr.bf16.mxu0 %v691
    %1005 = vmatpush1.bf16.msra.mxu0 %v690
    %1006 = vmatprep.subr.bf16.mxu0 %v695
    %1007 = vmatpush1.bf16.msra.mxu0 %v694
    %1008 = vmatprep.subr.bf16.mxu0 %v699
    %1009 = vmatpush1.bf16.msra.mxu0 %v698
    %1010 = vmatprep.mubr.bf16.mxu0 %v99
    %1011 = vmatmul.mubr.bf16.gmra.mrb[0].mxu0 %v98
    %v1012 = vpop.f32.mrb[0].mxu0
    %v1013 = vadd.f32 %v243, %v1012
    %v1014 = vpop.f32.mrb[0].mxu0
    %v1015 = vadd.f32 %v247, %v1014
    %v1016 = vpop.f32.mrb[0].mxu0
    %v1017 = vadd.f32 %v243, %v1016
    %v1018 = vpop.f32.mrb[0].mxu0
    %v1019 = vadd.f32 %v247, %v1018
    %1020 = vdwg.mxu0
    %1021 = vmatprep.subr.bf16.mxu0 %v703
    %1022 = vmatpush1.bf16.msra.mxu0 %v702
    %1023 = vmatprep.subr.bf16.mxu0 %v707
    %1024 = vmatpush1.bf16.msra.mxu0 %v706
    %1025 = vmatprep.subr.bf16.mxu0 %v711
    %1026 = vmatpush1.bf16.msra.mxu0 %v710
    %1027 = vmatprep.subr.bf16.mxu0 %v715
    %1028 = vmatpush1.bf16.msra.mxu0 %v714
    %1029 = vmatprep.subr.bf16.mxu0 %v719
    %1030 = vmatpush1.bf16.msra.mxu0 %v718
    %1031 = vmatprep.subr.bf16.mxu0 %v723
    %1032 = vmatpush1.bf16.msra.mxu0 %v722
    %1033 = vmatprep.subr.bf16.mxu0 %v727
    %1034 = vmatpush1.bf16.msra.mxu0 %v726
    %1035 = vmatprep.subr.bf16.mxu0 %v731
    %1036 = vmatpush1.bf16.msra.mxu0 %v730
    %1037 = vmatprep.subr.bf16.mxu0 %v735
    %1038 = vmatpush1.bf16.msra.mxu0 %v734
    %1039 = vmatprep.subr.bf16.mxu0 %v739
    %1040 = vmatpush1.bf16.msra.mxu0 %v738
    %1041 = vmatprep.subr.bf16.mxu0 %v743
    %1042 = vmatpush1.bf16.msra.mxu0 %v742
    %1043 = vmatprep.subr.bf16.mxu0 %v747
    %1044 = vmatpush1.bf16.msra.mxu0 %v746
    %1045 = vmatprep.subr.bf16.mxu0 %v751
    %1046 = vmatpush1.bf16.msra.mxu0 %v750
    %1047 = vmatprep.subr.bf16.mxu0 %v755
    %1048 = vmatpush1.bf16.msra.mxu0 %v754
    %1049 = vmatprep.subr.bf16.mxu0 %v759
    %1050 = vmatpush1.bf16.msra.mxu0 %v758
    %1051 = vmatprep.subr.bf16.mxu0 %v763
    %1052 = vmatpush1.bf16.msra.mxu0 %v762
    %1053 = vmatprep.mubr.bf16.mxu0 %v101
    %1054 = vmatmul.mubr.bf16.gmra.mrb[0].mxu0 %v100
    %v1055 = vpop.f32.mrb[0].mxu0
    %v1056 = vadd.f32 %v1013, %v1055
    %v1057 = vpop.f32.mrb[0].mxu0
    %v1058 = vadd.f32 %v1015, %v1057
    %v1059 = vpop.f32.mrb[0].mxu0
    %v1060 = vadd.f32 %v1017, %v1059
    %v1061 = vpop.f32.mrb[0].mxu0
    %v1062 = vadd.f32 %v1019, %v1061
    %1063 = vdwg.mxu0
    %v1064 = vpack.c.bf16 %v974, %v970
    %v1065 = vpack.c.bf16 %v976, %v972
    %v1066 = vpack.c.bf16 %v1060, %v1056
    %v1067 = vpack.c.bf16 %v1062, %v1058
    %v1068 = vmax.bf16 %v1064, 0
    %v1069 = vmax.bf16 %v1065, 0
    %v1070 = vmax.bf16 %v1066, 0
    %v1071 = vmax.bf16 %v1067, 0
    %v1072 = vld [vmem:[#allocation7] sm:$0xff]
    %v1073 = vld [vmem:[#allocation7 + $0x8] sm:$0xff]
    %v1074 = vld [vmem:[#allocation7 + $0x10] sm:$0xff]
    %v1075 = vld [vmem:[#allocation7 + $0x18] sm:$0xff]
    %v1076 = vld [vmem:[#allocation7 + $0x20] sm:$0xff]
    %v1077 = vld [vmem:[#allocation7 + $0x28] sm:$0xff]
    %v1078 = vld [vmem:[#allocation7 + $0x30] sm:$0xff]
    %v1079 = vld [vmem:[#allocation7 + $0x38] sm:$0xff]
    %v1080 = vld [vmem:[#allocation7 + $0x40] sm:$0xff]
    %v1081 = vld [vmem:[#allocation7 + $0x48] sm:$0xff]
    %v1082 = vld [vmem:[#allocation7 + $0x50] sm:$0xff]
    %v1083 = vld [vmem:[#allocation7 + $0x58] sm:$0xff]
    %v1084 = vld [vmem:[#allocation7 + $0x60] sm:$0xff]
    %v1085 = vld [vmem:[#allocation7 + $0x68] sm:$0xff]
    %v1086 = vld [vmem:[#allocation7 + $0x70] sm:$0xff]
    %v1087 = vld [vmem:[#allocation7 + $0x78] sm:$0xff]
    %v1088 = vld [vmem:[#allocation7 + $0x80] sm:$0xff]
    %v1089 = vld [vmem:[#allocation7 + $0x88] sm:$0xff]
    %v1090 = vld [vmem:[#allocation7 + $0x90] sm:$0xff]
    %v1091 = vld [vmem:[#allocation7 + $0x98] sm:$0xff]
    %v1092 = vld [vmem:[#allocation7 + $0xa0] sm:$0xff]
    %v1093 = vld [vmem:[#allocation7 + $0xa8] sm:$0xff]
    %v1094 = vld [vmem:[#allocation7 + $0xb0] sm:$0xff]
    %v1095 = vld [vmem:[#allocation7 + $0xb8] sm:$0xff]
    %v1096 = vld [vmem:[#allocation7 + $0xc0] sm:$0xff]
    %v1097 = vld [vmem:[#allocation7 + $0xc8] sm:$0xff]
    %v1098 = vld [vmem:[#allocation7 + $0xd0] sm:$0xff]
    %v1099 = vld [vmem:[#allocation7 + $0xd8] sm:$0xff]
    %v1100 = vld [vmem:[#allocation7 + $0xe0] sm:$0xff]
    %v1101 = vld [vmem:[#allocation7 + $0xe8] sm:$0xff]
    %v1102 = vld [vmem:[#allocation7 + $0xf0] sm:$0xff]
    %v1103 = vld [vmem:[#allocation7 + $0xf8] sm:$0xff]
    %v1104 = vld [vmem:[#allocation7 + $0x100] sm:$0xff]
    %v1105 = vld [vmem:[#allocation7 + $0x108] sm:$0xff]
    %v1106 = vld [vmem:[#allocation7 + $0x110] sm:$0xff]
    %v1107 = vld [vmem:[#allocation7 + $0x118] sm:$0xff]
    %v1108 = vld [vmem:[#allocation7 + $0x120] sm:$0xff]
    %v1109 = vld [vmem:[#allocation7 + $0x128] sm:$0xff]
    %v1110 = vld [vmem:[#allocation7 + $0x130] sm:$0xff]
    %v1111 = vld [vmem:[#allocation7 + $0x138] sm:$0xff]
    %v1112 = vld [vmem:[#allocation7 + $0x140] sm:$0xff]
    %v1113 = vld [vmem:[#allocation7 + $0x148] sm:$0xff]
    %v1114 = vld [vmem:[#allocation7 + $0x150] sm:$0xff]
    %v1115 = vld [vmem:[#allocation7 + $0x158] sm:$0xff]
    %v1116 = vld [vmem:[#allocation7 + $0x160] sm:$0xff]
    %v1117 = vld [vmem:[#allocation7 + $0x168] sm:$0xff]
    %v1118 = vld [vmem:[#allocation7 + $0x170] sm:$0xff]
    %v1119 = vld [vmem:[#allocation7 + $0x178] sm:$0xff]
    %v1120 = vld [vmem:[#allocation7 + $0x180] sm:$0xff]
    %v1121 = vld [vmem:[#allocation7 + $0x188] sm:$0xff]
    %v1122 = vld [vmem:[#allocation7 + $0x190] sm:$0xff]
    %v1123 = vld [vmem:[#allocation7 + $0x198] sm:$0xff]
    %v1124 = vld [vmem:[#allocation7 + $0x1a0] sm:$0xff]
    %v1125 = vld [vmem:[#allocation7 + $0x1a8] sm:$0xff]
    %v1126 = vld [vmem:[#allocation7 + $0x1b0] sm:$0xff]
    %v1127 = vld [vmem:[#allocation7 + $0x1b8] sm:$0xff]
    %v1128 = vld [vmem:[#allocation7 + $0x1c0] sm:$0xff]
    %v1129 = vld [vmem:[#allocation7 + $0x1c8] sm:$0xff]
    %v1130 = vld [vmem:[#allocation7 + $0x1d0] sm:$0xff]
    %v1131 = vld [vmem:[#allocation7 + $0x1d8] sm:$0xff]
    %v1132 = vld [vmem:[#allocation7 + $0x1e0] sm:$0xff]
    %v1133 = vld [vmem:[#allocation7 + $0x1e8] sm:$0xff]
    %v1134 = vld [vmem:[#allocation7 + $0x1f0] sm:$0xff]
    %v1135 = vld [vmem:[#allocation7 + $0x1f8] sm:$0xff]
    %v1136 = vld [vmem:[%s4] sm:$0x3]
    %v1138 = vlaneseq
    %v1139 = vshrl.u32 %v1138, 7
    %v1140 = vsub.s32 0, %v1139
    %v1141 = vrot.slane %v1136, %v1140
    %v1142 = vlaneseq
    %v1143 = vshrl.u32 %v1142, 7
    %v1144 = vsub.s32 1, %v1143
    %v1145 = vrot.slane %v1136, %v1144
    %v1212 = vunpack.c.l.b16 %v1072
    %v1213 = vunpack.c.h.b16 %v1072
    %v1214 = vunpack.c.l.b16 %v1073
    %v1215 = vunpack.c.h.b16 %v1073
    %v1216 = vunpack.c.l.b16 %v1074
    %v1217 = vunpack.c.h.b16 %v1074
    %v1218 = vunpack.c.l.b16 %v1075
    %v1219 = vunpack.c.h.b16 %v1075
    %v1220 = vunpack.c.l.b16 %v1076
    %v1221 = vunpack.c.h.b16 %v1076
    %v1222 = vunpack.c.l.b16 %v1077
    %v1223 = vunpack.c.h.b16 %v1077
    %v1224 = vunpack.c.l.b16 %v1078
    %v1225 = vunpack.c.h.b16 %v1078
    %v1226 = vunpack.c.l.b16 %v1079
    %v1227 = vunpack.c.h.b16 %v1079
    %v1228 = vunpack.c.l.b16 %v1080
    %v1229 = vunpack.c.h.b16 %v1080
    %v1230 = vunpack.c.l.b16 %v1081
    %v1231 = vunpack.c.h.b16 %v1081
    %v1232 = vunpack.c.l.b16 %v1082
    %v1233 = vunpack.c.h.b16 %v1082
    %v1234 = vunpack.c.l.b16 %v1083
    %v1235 = vunpack.c.h.b16 %v1083
    %v1236 = vunpack.c.l.b16 %v1084
    %v1237 = vunpack.c.h.b16 %v1084
    %v1238 = vunpack.c.l.b16 %v1085
    %v1239 = vunpack.c.h.b16 %v1085
    %v1240 = vunpack.c.l.b16 %v1086
    %v1241 = vunpack.c.h.b16 %v1086
    %v1242 = vunpack.c.l.b16 %v1087
    %v1243 = vunpack.c.h.b16 %v1087
    %v1244 = vunpack.c.l.b16 %v1088
    %v1245 = vunpack.c.h.b16 %v1088
    %v1246 = vunpack.c.l.b16 %v1089
    %v1247 = vunpack.c.h.b16 %v1089
    %v1248 = vunpack.c.l.b16 %v1090
    %v1249 = vunpack.c.h.b16 %v1090
    %v1250 = vunpack.c.l.b16 %v1091
    %v1251 = vunpack.c.h.b16 %v1091
    %v1252 = vunpack.c.l.b16 %v1092
    %v1253 = vunpack.c.h.b16 %v1092
    %v1254 = vunpack.c.l.b16 %v1093
    %v1255 = vunpack.c.h.b16 %v1093
    %v1256 = vunpack.c.l.b16 %v1094
    %v1257 = vunpack.c.h.b16 %v1094
    %v1258 = vunpack.c.l.b16 %v1095
    %v1259 = vunpack.c.h.b16 %v1095
    %v1260 = vunpack.c.l.b16 %v1096
    %v1261 = vunpack.c.h.b16 %v1096
    %v1262 = vunpack.c.l.b16 %v1097
    %v1263 = vunpack.c.h.b16 %v1097
    %v1264 = vunpack.c.l.b16 %v1098
    %v1265 = vunpack.c.h.b16 %v1098
    %v1266 = vunpack.c.l.b16 %v1099
    %v1267 = vunpack.c.h.b16 %v1099
    %v1268 = vunpack.c.l.b16 %v1100
    %v1269 = vunpack.c.h.b16 %v1100
    %v1270 = vunpack.c.l.b16 %v1101
    %v1271 = vunpack.c.h.b16 %v1101
    %v1272 = vunpack.c.l.b16 %v1102
    %v1273 = vunpack.c.h.b16 %v1102
    %v1274 = vunpack.c.l.b16 %v1103
    %v1275 = vunpack.c.h.b16 %v1103
    %v1276 = vunpack.c.l.b16 %v1104
    %v1277 = vunpack.c.h.b16 %v1104
    %v1278 = vunpack.c.l.b16 %v1105
    %v1279 = vunpack.c.h.b16 %v1105
    %v1280 = vunpack.c.l.b16 %v1106
    %v1281 = vunpack.c.h.b16 %v1106
    %v1282 = vunpack.c.l.b16 %v1107
    %v1283 = vunpack.c.h.b16 %v1107
    %v1284 = vunpack.c.l.b16 %v1108
    %v1285 = vunpack.c.h.b16 %v1108
    %v1286 = vunpack.c.l.b16 %v1109
    %v1287 = vunpack.c.h.b16 %v1109
    %v1288 = vunpack.c.l.b16 %v1110
    %v1289 = vunpack.c.h.b16 %v1110
    %v1290 = vunpack.c.l.b16 %v1111
    %v1291 = vunpack.c.h.b16 %v1111
    %v1292 = vunpack.c.l.b16 %v1112
    %v1293 = vunpack.c.h.b16 %v1112
    %v1294 = vunpack.c.l.b16 %v1113
    %v1295 = vunpack.c.h.b16 %v1113
    %v1296 = vunpack.c.l.b16 %v1114
    %v1297 = vunpack.c.h.b16 %v1114
    %v1298 = vunpack.c.l.b16 %v1115
    %v1299 = vunpack.c.h.b16 %v1115
    %v1300 = vunpack.c.l.b16 %v1116
    %v1301 = vunpack.c.h.b16 %v1116
    %v1302 = vunpack.c.l.b16 %v1117
    %v1303 = vunpack.c.h.b16 %v1117
    %v1304 = vunpack.c.l.b16 %v1118
    %v1305 = vunpack.c.h.b16 %v1118
    %v1306 = vunpack.c.l.b16 %v1119
    %v1307 = vunpack.c.h.b16 %v1119
    %v1308 = vunpack.c.l.b16 %v1120
    %v1309 = vunpack.c.h.b16 %v1120
    %v1310 = vunpack.c.l.b16 %v1121
    %v1311 = vunpack.c.h.b16 %v1121
    %v1312 = vunpack.c.l.b16 %v1122
    %v1313 = vunpack.c.h.b16 %v1122
    %v1314 = vunpack.c.l.b16 %v1123
    %v1315 = vunpack.c.h.b16 %v1123
    %v1316 = vunpack.c.l.b16 %v1124
    %v1317 = vunpack.c.h.b16 %v1124
    %v1318 = vunpack.c.l.b16 %v1125
    %v1319 = vunpack.c.h.b16 %v1125
    %v1320 = vunpack.c.l.b16 %v1126
    %v1321 = vunpack.c.h.b16 %v1126
    %v1322 = vunpack.c.l.b16 %v1127
    %v1323 = vunpack.c.h.b16 %v1127
    %v1324 = vunpack.c.l.b16 %v1128
    %v1325 = vunpack.c.h.b16 %v1128
    %v1326 = vunpack.c.l.b16 %v1129
    %v1327 = vunpack.c.h.b16 %v1129
    %v1328 = vunpack.c.l.b16 %v1130
    %v1329 = vunpack.c.h.b16 %v1130
    %v1330 = vunpack.c.l.b16 %v1131
    %v1331 = vunpack.c.h.b16 %v1131
    %v1332 = vunpack.c.l.b16 %v1132
    %v1333 = vunpack.c.h.b16 %v1132
    %v1334 = vunpack.c.l.b16 %v1133
    %v1335 = vunpack.c.h.b16 %v1133
    %v1336 = vunpack.c.l.b16 %v1134
    %v1337 = vunpack.c.h.b16 %v1134
    %v1338 = vunpack.c.l.b16 %v1135
    %v1339 = vunpack.c.h.b16 %v1135
    %v1340 = vpack.c.b16 %v1214, %v1212
    %v1341 = vpack.c.b16 %v1215, %v1213
    %v1342 = vpack.c.b16 %v1218, %v1216
    %v1343 = vpack.c.b16 %v1219, %v1217
    %v1344 = vpack.c.b16 %v1222, %v1220
    %v1345 = vpack.c.b16 %v1223, %v1221
    %v1346 = vpack.c.b16 %v1226, %v1224
    %v1347 = vpack.c.b16 %v1227, %v1225
    %v1348 = vpack.c.b16 %v1230, %v1228
    %v1349 = vpack.c.b16 %v1231, %v1229
    %v1350 = vpack.c.b16 %v1234, %v1232
    %v1351 = vpack.c.b16 %v1235, %v1233
    %v1352 = vpack.c.b16 %v1238, %v1236
    %v1353 = vpack.c.b16 %v1239, %v1237
    %v1354 = vpack.c.b16 %v1242, %v1240
    %v1355 = vpack.c.b16 %v1243, %v1241
    %v1356 = vpack.c.b16 %v1246, %v1244
    %v1357 = vpack.c.b16 %v1247, %v1245
    %v1358 = vpack.c.b16 %v1250, %v1248
    %v1359 = vpack.c.b16 %v1251, %v1249
    %v1360 = vpack.c.b16 %v1254, %v1252
    %v1361 = vpack.c.b16 %v1255, %v1253
    %v1362 = vpack.c.b16 %v1258, %v1256
    %v1363 = vpack.c.b16 %v1259, %v1257
    %v1364 = vpack.c.b16 %v1262, %v1260
    %v1365 = vpack.c.b16 %v1263, %v1261
    %v1366 = vpack.c.b16 %v1266, %v1264
    %v1367 = vpack.c.b16 %v1267, %v1265
    %v1368 = vpack.c.b16 %v1270, %v1268
    %v1369 = vpack.c.b16 %v1271, %v1269
    %v1370 = vpack.c.b16 %v1274, %v1272
    %v1371 = vpack.c.b16 %v1275, %v1273
    %v1372 = vpack.c.b16 %v1278, %v1276
    %v1373 = vpack.c.b16 %v1279, %v1277
    %v1374 = vpack.c.b16 %v1282, %v1280
    %v1375 = vpack.c.b16 %v1283, %v1281
    %v1376 = vpack.c.b16 %v1286, %v1284
    %v1377 = vpack.c.b16 %v1287, %v1285
    %v1378 = vpack.c.b16 %v1290, %v1288
    %v1379 = vpack.c.b16 %v1291, %v1289
    %v1380 = vpack.c.b16 %v1294, %v1292
    %v1381 = vpack.c.b16 %v1295, %v1293
    %v1382 = vpack.c.b16 %v1298, %v1296
    %v1383 = vpack.c.b16 %v1299, %v1297
    %v1384 = vpack.c.b16 %v1302, %v1300
    %v1385 = vpack.c.b16 %v1303, %v1301
    %v1386 = vpack.c.b16 %v1306, %v1304
    %v1387 = vpack.c.b16 %v1307, %v1305
    %v1388 = vpack.c.b16 %v1310, %v1308
    %v1389 = vpack.c.b16 %v1311, %v1309
    %v1390 = vpack.c.b16 %v1314, %v1312
    %v1391 = vpack.c.b16 %v1315, %v1313
    %v1392 = vpack.c.b16 %v1318, %v1316
    %v1393 = vpack.c.b16 %v1319, %v1317
    %v1394 = vpack.c.b16 %v1322, %v1320
    %v1395 = vpack.c.b16 %v1323, %v1321
    %v1396 = vpack.c.b16 %v1326, %v1324
    %v1397 = vpack.c.b16 %v1327, %v1325
    %v1398 = vpack.c.b16 %v1330, %v1328
    %v1399 = vpack.c.b16 %v1331, %v1329
    %v1400 = vpack.c.b16 %v1334, %v1332
    %v1401 = vpack.c.b16 %v1335, %v1333
    %v1402 = vpack.c.b16 %v1338, %v1336
    %v1403 = vpack.c.b16 %v1339, %v1337
    %1468 = vmatprep.subr.bf16.mxu0 %v1341
    %1469 = vmatpush1.bf16.msra.mxu0 %v1340
    %1470 = vmatprep.subr.bf16.mxu0 %v1343
    %1471 = vmatpush1.bf16.msra.mxu0 %v1342
    %1472 = vmatprep.subr.bf16.mxu0 %v1345
    %1473 = vmatpush1.bf16.msra.mxu0 %v1344
    %1474 = vmatprep.subr.bf16.mxu0 %v1347
    %1475 = vmatpush1.bf16.msra.mxu0 %v1346
    %1476 = vmatprep.subr.bf16.mxu0 %v1349
    %1477 = vmatpush1.bf16.msra.mxu0 %v1348
    %1478 = vmatprep.subr.bf16.mxu0 %v1351
    %1479 = vmatpush1.bf16.msra.mxu0 %v1350
    %1480 = vmatprep.subr.bf16.mxu0 %v1353
    %1481 = vmatpush1.bf16.msra.mxu0 %v1352
    %1482 = vmatprep.subr.bf16.mxu0 %v1355
    %1483 = vmatpush1.bf16.msra.mxu0 %v1354
    %1484 = vmatprep.subr.bf16.mxu0 %v1357
    %1485 = vmatpush1.bf16.msra.mxu0 %v1356
    %1486 = vmatprep.subr.bf16.mxu0 %v1359
    %1487 = vmatpush1.bf16.msra.mxu0 %v1358
    %1488 = vmatprep.subr.bf16.mxu0 %v1361
    %1489 = vmatpush1.bf16.msra.mxu0 %v1360
    %1490 = vmatprep.subr.bf16.mxu0 %v1363
    %1491 = vmatpush1.bf16.msra.mxu0 %v1362
    %1492 = vmatprep.subr.bf16.mxu0 %v1365
    %1493 = vmatpush1.bf16.msra.mxu0 %v1364
    %1494 = vmatprep.subr.bf16.mxu0 %v1367
    %1495 = vmatpush1.bf16.msra.mxu0 %v1366
    %1496 = vmatprep.subr.bf16.mxu0 %v1369
    %1497 = vmatpush1.bf16.msra.mxu0 %v1368
    %1498 = vmatprep.subr.bf16.mxu0 %v1371
    %1499 = vmatpush1.bf16.msra.mxu0 %v1370
    %1500 = vmatprep.mubr.bf16.mxu0 %v1069
    %1501 = vmatmul.mubr.bf16.gmra.mrb[0].mxu0 %v1068
    %v1502 = vpop.f32.mrb[0].mxu0
    %v1503 = vadd.f32 %v1141, %v1502
    %v1504 = vpop.f32.mrb[0].mxu0
    %v1505 = vadd.f32 %v1145, %v1504
    %v1506 = vpop.f32.mrb[0].mxu0
    %v1507 = vadd.f32 %v1141, %v1506
    %v1508 = vpop.f32.mrb[0].mxu0
    %v1509 = vadd.f32 %v1145, %v1508
    %1510 = vdwg.mxu0
    %1511 = vmatprep.subr.bf16.mxu0 %v1373
    %1512 = vmatpush1.bf16.msra.mxu0 %v1372
    %1513 = vmatprep.subr.bf16.mxu0 %v1375
    %1514 = vmatpush1.bf16.msra.mxu0 %v1374
    %1515 = vmatprep.subr.bf16.mxu0 %v1377
    %1516 = vmatpush1.bf16.msra.mxu0 %v1376
    %1517 = vmatprep.subr.bf16.mxu0 %v1379
    %1518 = vmatpush1.bf16.msra.mxu0 %v1378
    %1519 = vmatprep.subr.bf16.mxu0 %v1381
    %1520 = vmatpush1.bf16.msra.mxu0 %v1380
    %1521 = vmatprep.subr.bf16.mxu0 %v1383
    %1522 = vmatpush1.bf16.msra.mxu0 %v1382
    %1523 = vmatprep.subr.bf16.mxu0 %v1385
    %1524 = vmatpush1.bf16.msra.mxu0 %v1384
    %1525 = vmatprep.subr.bf16.mxu0 %v1387
    %1526 = vmatpush1.bf16.msra.mxu0 %v1386
    %1527 = vmatprep.subr.bf16.mxu0 %v1389
    %1528 = vmatpush1.bf16.msra.mxu0 %v1388
    %1529 = vmatprep.subr.bf16.mxu0 %v1391
    %1530 = vmatpush1.bf16.msra.mxu0 %v1390
    %1531 = vmatprep.subr.bf16.mxu0 %v1393
    %1532 = vmatpush1.bf16.msra.mxu0 %v1392
    %1533 = vmatprep.subr.bf16.mxu0 %v1395
    %1534 = vmatpush1.bf16.msra.mxu0 %v1394
    %1535 = vmatprep.subr.bf16.mxu0 %v1397
    %1536 = vmatpush1.bf16.msra.mxu0 %v1396
    %1537 = vmatprep.subr.bf16.mxu0 %v1399
    %1538 = vmatpush1.bf16.msra.mxu0 %v1398
    %1539 = vmatprep.subr.bf16.mxu0 %v1401
    %1540 = vmatpush1.bf16.msra.mxu0 %v1400
    %1541 = vmatprep.subr.bf16.mxu0 %v1403
    %1542 = vmatpush1.bf16.msra.mxu0 %v1402
    %1543 = vmatprep.mubr.bf16.mxu0 %v1071
    %1544 = vmatmul.mubr.bf16.gmra.mrb[0].mxu0 %v1070
    %v1545 = vpop.f32.mrb[0].mxu0
    %v1546 = vadd.f32 %v1503, %v1545
    %v1547 = vpop.f32.mrb[0].mxu0
    %v1548 = vadd.f32 %v1505, %v1547
    %v1549 = vpop.f32.mrb[0].mxu0
    %v1550 = vadd.f32 %v1507, %v1549
    %v1551 = vpop.f32.mrb[0].mxu0
    %v1552 = vadd.f32 %v1509, %v1551
    %1553 = vdwg.mxu0
    %v1554 = vpack.c.bf16 %v1550, %v1546
    %v1555 = vpack.c.bf16 %v1552, %v1548
    %v1556 = vmax.bf16 %v1554, 0
    %v1557 = vmax.bf16 %v1555, 0
    %v1558 = vld [vmem:[#allocation8] sm:$0xf]
    %v1559 = vld [vmem:[#allocation8 + $0x4] sm:$0xf]
    %v1560 = vld [vmem:[#allocation8 + $0x8] sm:$0xf]
    %v1561 = vld [vmem:[#allocation8 + $0xc] sm:$0xf]
    %v1562 = vld [vmem:[#allocation8 + $0x10] sm:$0xf]
    %v1563 = vld [vmem:[#allocation8 + $0x14] sm:$0xf]
    %v1564 = vld [vmem:[#allocation8 + $0x18] sm:$0xf]
    %v1565 = vld [vmem:[#allocation8 + $0x1c] sm:$0xf]
    %v1566 = vld [vmem:[#allocation8 + $0x20] sm:$0xf]
    %v1567 = vld [vmem:[#allocation8 + $0x24] sm:$0xf]
    %v1568 = vld [vmem:[#allocation8 + $0x28] sm:$0xf]
    %v1569 = vld [vmem:[#allocation8 + $0x2c] sm:$0xf]
    %v1570 = vld [vmem:[#allocation8 + $0x30] sm:$0xf]
    %v1571 = vld [vmem:[#allocation8 + $0x34] sm:$0xf]
    %v1572 = vld [vmem:[#allocation8 + $0x38] sm:$0xf]
    %v1573 = vld [vmem:[#allocation8 + $0x3c] sm:$0xf]
    %v1574 = vld [vmem:[#allocation8 + $0x40] sm:$0xf]
    %v1575 = vld [vmem:[#allocation8 + $0x44] sm:$0xf]
    %v1576 = vld [vmem:[#allocation8 + $0x48] sm:$0xf]
    %v1577 = vld [vmem:[#allocation8 + $0x4c] sm:$0xf]
    %v1578 = vld [vmem:[#allocation8 + $0x50] sm:$0xf]
    %v1579 = vld [vmem:[#allocation8 + $0x54] sm:$0xf]
    %v1580 = vld [vmem:[#allocation8 + $0x58] sm:$0xf]
    %v1581 = vld [vmem:[#allocation8 + $0x5c] sm:$0xf]
    %v1582 = vld [vmem:[#allocation8 + $0x60] sm:$0xf]
    %v1583 = vld [vmem:[#allocation8 + $0x64] sm:$0xf]
    %v1584 = vld [vmem:[#allocation8 + $0x68] sm:$0xf]
    %v1585 = vld [vmem:[#allocation8 + $0x6c] sm:$0xf]
    %v1586 = vld [vmem:[#allocation8 + $0x70] sm:$0xf]
    %v1587 = vld [vmem:[#allocation8 + $0x74] sm:$0xf]
    %v1588 = vld [vmem:[#allocation8 + $0x78] sm:$0xf]
    %v1589 = vld [vmem:[#allocation8 + $0x7c] sm:$0xf]
    %v1590 = vld [vmem:[%s6] sm:$0x1]
    %v1592 = vlaneseq
    %v1593 = vshrl.u32 %v1592, 7
    %v1594 = vsub.s32 0, %v1593
    %v1595 = vrot.slane %v1590, %v1594
    %v1629 = vunpack.c.l.b16 %v1558
    %v1630 = vunpack.c.l.b16 %v1559
    %v1631 = vunpack.c.l.b16 %v1560
    %v1632 = vunpack.c.l.b16 %v1561
    %v1633 = vunpack.c.l.b16 %v1562
    %v1634 = vunpack.c.l.b16 %v1563
    %v1635 = vunpack.c.l.b16 %v1564
    %v1636 = vunpack.c.l.b16 %v1565
    %v1637 = vunpack.c.l.b16 %v1566
    %v1638 = vunpack.c.l.b16 %v1567
    %v1639 = vunpack.c.l.b16 %v1568
    %v1640 = vunpack.c.l.b16 %v1569
    %v1641 = vunpack.c.l.b16 %v1570
    %v1642 = vunpack.c.l.b16 %v1571
    %v1643 = vunpack.c.l.b16 %v1572
    %v1644 = vunpack.c.l.b16 %v1573
    %v1645 = vunpack.c.l.b16 %v1574
    %v1646 = vunpack.c.l.b16 %v1575
    %v1647 = vunpack.c.l.b16 %v1576
    %v1648 = vunpack.c.l.b16 %v1577
    %v1649 = vunpack.c.l.b16 %v1578
    %v1650 = vunpack.c.l.b16 %v1579
    %v1651 = vunpack.c.l.b16 %v1580
    %v1652 = vunpack.c.l.b16 %v1581
    %v1653 = vunpack.c.l.b16 %v1582
    %v1654 = vunpack.c.l.b16 %v1583
    %v1655 = vunpack.c.l.b16 %v1584
    %v1656 = vunpack.c.l.b16 %v1585
    %v1657 = vunpack.c.l.b16 %v1586
    %v1658 = vunpack.c.l.b16 %v1587
    %v1659 = vunpack.c.l.b16 %v1588
    %v1660 = vunpack.c.l.b16 %v1589
    %v1661 = vpack.c.b16 %v1630, %v1629
    %v1662 = vpack.c.b16 %v1632, %v1631
    %v1663 = vpack.c.b16 %v1634, %v1633
    %v1664 = vpack.c.b16 %v1636, %v1635
    %v1665 = vpack.c.b16 %v1638, %v1637
    %v1666 = vpack.c.b16 %v1640, %v1639
    %v1667 = vpack.c.b16 %v1642, %v1641
    %v1668 = vpack.c.b16 %v1644, %v1643
    %v1669 = vpack.c.b16 %v1646, %v1645
    %v1670 = vpack.c.b16 %v1648, %v1647
    %v1671 = vpack.c.b16 %v1650, %v1649
    %v1672 = vpack.c.b16 %v1652, %v1651
    %v1673 = vpack.c.b16 %v1654, %v1653
    %v1674 = vpack.c.b16 %v1656, %v1655
    %v1675 = vpack.c.b16 %v1658, %v1657
    %v1676 = vpack.c.b16 %v1660, %v1659
    %1693 = vmatprep.subr.bf16.mxu0 0
    %1694 = vmatpush1.bf16.msra.mxu0 %v1661
    %1695 = vmatprep.subr.bf16.mxu0 0
    %1696 = vmatpush1.bf16.msra.mxu0 %v1662
    %1697 = vmatprep.subr.bf16.mxu0 0
    %1698 = vmatpush1.bf16.msra.mxu0 %v1663
    %1699 = vmatprep.subr.bf16.mxu0 0
    %1700 = vmatpush1.bf16.msra.mxu0 %v1664
    %1701 = vmatprep.subr.bf16.mxu0 0
    %1702 = vmatpush1.bf16.msra.mxu0 %v1665
    %1703 = vmatprep.subr.bf16.mxu0 0
    %1704 = vmatpush1.bf16.msra.mxu0 %v1666
    %1705 = vmatprep.subr.bf16.mxu0 0
    %1706 = vmatpush1.bf16.msra.mxu0 %v1667
    %1707 = vmatprep.subr.bf16.mxu0 0
    %1708 = vmatpush1.bf16.msra.mxu0 %v1668
    %1709 = vmatprep.subr.bf16.mxu0 0
    %1710 = vmatpush1.bf16.msra.mxu0 %v1669
    %1711 = vmatprep.subr.bf16.mxu0 0
    %1712 = vmatpush1.bf16.msra.mxu0 %v1670
    %1713 = vmatprep.subr.bf16.mxu0 0
    %1714 = vmatpush1.bf16.msra.mxu0 %v1671
    %1715 = vmatprep.subr.bf16.mxu0 0
    %1716 = vmatpush1.bf16.msra.mxu0 %v1672
    %1717 = vmatprep.subr.bf16.mxu0 0
    %1718 = vmatpush1.bf16.msra.mxu0 %v1673
    %1719 = vmatprep.subr.bf16.mxu0 0
    %1720 = vmatpush1.bf16.msra.mxu0 %v1674
    %1721 = vmatprep.subr.bf16.mxu0 0
    %1722 = vmatpush1.bf16.msra.mxu0 %v1675
    %1723 = vmatprep.subr.bf16.mxu0 0
    %1724 = vmatpush1.bf16.msra.mxu0 %v1676
    %1725 = vmatprep.mubr.bf16.mxu0 %v1557
    %1726 = vmatmul.mubr.bf16.gmra.mrb[0].mxu0 %v1556
    %v1727 = vpop.f32.mrb[0].mxu0
    %v1728 = vadd.f32 %v1595, %v1727
    %v1729 = vpop.f32.mrb[0].mxu0
    %v1730 = vpop.f32.mrb[0].mxu0
    %v1731 = vadd.f32 %v1595, %v1730
    %v1732 = vpop.f32.mrb[0].mxu0
    %1733 = vdwg.mxu0
    %v1734 = vpack.c.bf16 %v1731, %v1728
    %v1735 = vmax.bf16 %v1734, 0
    %v1736 = vunpack.c.l.bf16 %v1735
    %v1737 = vunpack.c.h.bf16 %v1735
    %v1738 = vld [vmem:[%s7] sm:$0x1]
    %v1740 = vlaneseq
    %v1741 = vshrl.u32 %v1740, 7
    %v1742 = vsub.s32 0, %v1741
    %v1743 = vrot.slane %v1738, %v1742
    %v1745 = vmul.f32 %v1736, %v1743
    %v1746 = vmul.f32 %v1737, %v1743
    %1747 = vadd.xlane.f32.xlu0 %v1745
    %v1748 = vpop.xlane.xlu0 %1747
    %1749 = vadd.xlane.f32.xlu0 %v1746
    %v1750 = vpop.xlane.xlu0 %1749
    %v1751 = vld [vmem:[#allocation2] sm:$0x1]
    %v1753 = vlaneseq
    %v1754 = vshrl.u32 %v1753, 7
    %v1755 = vsub.s32 0, %v1754
    %v1756 = vrot.slane %v1751, %v1755
    %v1758 = vadd.f32 %v1748, %v1756
    %v1759 = vadd.f32 %v1750, %v1756
    %v1760 = vxor.u32 %v1758, 2147483648
    %v1761 = vxor.u32 %v1759, 2147483648
    %v1762 = vmul.f32 %v1760, 1.442695
    %v1763 = vpow.pop %v1762
    %v1764 = vmul.f32 %v1761, 1.442695
    %v1765 = vpow.pop %v1764
    %v1766 = vadd.f32 %v1763, 1.0
    %v1767 = vadd.f32 %v1765, 1.0
    %v1768 = vrcp.pop %v1766
    %v1769 = vmul.f32 1.0, %v1768
    %v1770 = vrcp.pop %v1767
    %v1771 = vmul.f32 1.0, %v1770
    %vm1772 = vcmask 7168
    %1773 = vst.msk [vmem:[%s9] sm:$0xff] %vm1772, %v1769
    %1774 = vst.msk [vmem:[%s9 + $0x8] sm:$0xff] %vm1772, %v1771
    // Predicated region
    $region54: #{tpu_custom_call.1} parent=1 // pred_check
      _
    $region55: #{tpu_custom_call.1} parent=1 // pred_check_branch
      %1776 = sbr.rel (0) target = $region57
    $region56: #{tpu_custom_call.1} parent=1 // pred_region
      _
    $region57: #{tpu_custom_call.1} parent=1 // pred_fallthru
      _
    // Predicated region
    $region58: #{tpu_custom_call.1} parent=1 // pred_check
      _
    $region59: #{tpu_custom_call.1} parent=1 // pred_check_branch
      %1778 = sbr.rel (0) target = $region61
    $region60: #{tpu_custom_call.1} parent=1 // pred_region
      _
    $region61: #{tpu_custom_call.1} parent=1 // pred_fallthru
      _
    %1779 = vsyncpa [#allocation4], 1
    %1780 = vsyncpa [#allocation6], 1
    %1781 = vsyncpa [#allocation9], 1

</llo_original>
